<compile_context>
chip_gen: v5e
topology: v5e:2x2
jax: 0.10.0
libtpu: 0.0.40
codegen_flags: <defaults>
</compile_context>

<pallas_src>
import jax
import jax.numpy as jnp
from jax.experimental import pallas as pl
from jax.experimental.pallas import tpu as pltpu


# ----------------------- model config (shapes from __init__) -----------------
KERNEL_SIZE = 2          # config.kernel_size (conv kernel AND pool kernel/stride)
N_CHANNELS = 4           # config.n_channels
FILTERS = (8, 16, 32)    # config.filters
LINEAR_DIM = 32          # config.lenear_dim
N_CATEGORY = 4           # config.n_category

NB = 8                   # batch tile (sublane-aligned)


def _conv_pool_stage(x, w, b):
    """Fused Conv2d(k=2, s=1, VALID) + MaxPool2d(k=2, s=2) on values.

    x: (H, W, Nb, Ci) f32    (lane = C, sublane = N, H/W leading dims)
    w: (2, 2, Ci, Co) f32    (HWIO)
    b: (1, Co) f32
    returns (Hp, Wp, Nb, Co) with Hp = (H-1)//2, Wp = (W-1)//2.
    """
    H, W, Nb, Ci = x.shape
    Co = w.shape[-1]
    Ho, Wo = H - 1, W - 1
    Hp, Wp = Ho // 2, Wo // 2
    M = Ho * Wo * Nb

    # One MXU contraction per conv tap; Nb=8 keeps the reshape tile-aligned.
    acc = jnp.zeros((M, Co), jnp.float32)
    for di in range(KERNEL_SIZE):
        for dj in range(KERNEL_SIZE):
            patch = x[di:di + Ho, dj:dj + Wo]            # leading-dim slice (free)
            acc = acc + jnp.dot(patch.reshape(M, Ci), w[di, dj],
                                preferred_element_type=jnp.float32)

    # 2x2 stride-2 max pool: leading-dim reshapes + elementwise max.
    y = acc.reshape(Ho, Wo, Nb, Co)
    y = y[:2 * Hp].reshape(Hp, 2, Wo, Nb, Co).max(axis=1)
    y = y[:, :2 * Wp].reshape(Hp, Wp, 2, Nb, Co).max(axis=2)
    return y + b      # bias is constant per channel -> add after the max


def _model_cnn_kernel(x_ref, w1_ref, b1_ref, w2_ref, b2_ref, w3_ref, b3_ref,
                      scale_ref, offset_ref, o_ref):
    # ---- cnn block: 3 x (conv k=2 + maxpool k=2 s=2) ----
    h = _conv_pool_stage(x_ref[...], w1_ref[...], b1_ref[...])
    h = _conv_pool_stage(h, w2_ref[...], b2_ref[...])
    h = _conv_pool_stage(h, w3_ref[...], b3_ref[...])    # (1, 1, Nb, F3)
    feat = h[0, 0]                                       # (Nb, F3)

    # ---- folded linear block (Linear(1,L) o Linear(L,K) == affine in feat) ----
    # z[n, k*F3 + f] = feat[n, f] * scale[k] + offset[k]   (lane-dense slab)
    k_cat = scale_ref.shape[-1] // feat.shape[-1]
    feat_t = jnp.concatenate([feat] * k_cat, axis=-1)    # (Nb, K*F3)
    z = feat_t * scale_ref[...] + offset_ref[...]
    o_ref[...] = pl.reciprocal(1.0 + jnp.exp(-z), approx=False)   # sigmoid


def _full_spec(shape):
    # whole-array block; full blocks satisfy TPU tiling rules.
    return pl.BlockSpec(shape, lambda b: (0,) * len(shape))


@jax.jit
def model_cnn_forward(img, params):
    """img: (N, C, H, W) float32 (PyTorch NCHW).  Returns (N, F3, 1, K)."""
    N, Cin, H, W = img.shape
    F1, F2, F3 = FILTERS
    L, K = LINEAR_DIM, N_CATEGORY

    # spatial sizes after each conv(k=2) + pool(k=2, s=2) stage
    def stage(hw):
        return ((hw[0] - 1) // 2, (hw[1] - 1) // 2)
    s3 = stage(stage(stage((H, W))))
    assert s3 == (1, 1), "spatial dims must reduce to 1x1 for Linear(1, ...)"

    # ---- glue: layout transposes, batch padding, parameter reshapes ----
    Npad = ((N + NB - 1) // NB) * NB
    x = jnp.transpose(img, (2, 3, 0, 1)).astype(jnp.float32)     # (H, W, N, C)
    if Npad != N:
        x = jnp.pad(x, ((0, 0), (0, 0), (0, Npad - N), (0, 0)))

    w1 = jnp.transpose(params["conv1_w"], (2, 3, 1, 0)).astype(jnp.float32)
    w2 = jnp.transpose(params["conv2_w"], (2, 3, 1, 0)).astype(jnp.float32)
    w3 = jnp.transpose(params["conv3_w"], (2, 3, 1, 0)).astype(jnp.float32)
    b1 = params["conv1_b"].reshape(1, F1).astype(jnp.float32)
    b2 = params["conv2_b"].reshape(1, F2).astype(jnp.float32)
    b3 = params["conv3_b"].reshape(1, F3).astype(jnp.float32)

    # Fold Linear(1,L) -> Linear(L,K) into scale/offset (exact affine compose).
    w_l1 = params["lin1_w"].reshape(L).astype(jnp.float32)       # (L,)
    b_l1 = params["lin1_b"].astype(jnp.float32)                  # (L,)
    w_l2 = params["lin2_w"].astype(jnp.float32)                  # (K, L)
    b_l2 = params["lin2_b"].astype(jnp.float32)                  # (K,)
    scale = w_l2 @ w_l1                                          # (K,)
    offset = w_l2 @ b_l1 + b_l2                                  # (K,)
    scale_vec = jnp.repeat(scale, F3).reshape(1, K * F3)         # [k*F3+f] -> scale[k]
    offset_vec = jnp.repeat(offset, F3).reshape(1, K * F3)

    args = (x, w1, b1, w2, b2, w3, b3, scale_vec, offset_vec)
    in_specs = [pl.BlockSpec((H, W, NB, Cin), lambda b: (0, 0, b, 0))]
    in_specs += [_full_spec(a.shape) for a in args[1:]]

    out = pl.pallas_call(
        _model_cnn_kernel,
        out_shape=jax.ShapeDtypeStruct((Npad, K * F3), jnp.float32),
        grid=(Npad // NB,),
        in_specs=in_specs,
        out_specs=pl.BlockSpec((NB, K * F3), lambda b: (b, 0)),
        compiler_params=pltpu.CompilerParams(
            dimension_semantics=("parallel",)),
    )(*args)

    # out[n, k*F3 + f] = sigmoid(z[n, f, k]); PyTorch layout is (N, F3, 1, K)
    out = out.reshape(Npad, K, F3)[:N]
    return jnp.transpose(out, (0, 2, 1))[:, :, None, :]


def model_cnn_reference(img, params):
    """Pure-JAX reference (matches the PyTorch forward)."""
    hi = jax.lax.Precision.HIGHEST

    def conv(x, w, b):
        y = jax.lax.conv_general_dilated(
            x, w, window_strides=(1, 1), padding="VALID",
            dimension_numbers=("NCHW", "OIHW", "NCHW"), precision=hi)
        return y + b[None, :, None, None]

    def pool(x):
        return jax.lax.reduce_window(
            x, jnp.float32(-jnp.inf), jax.lax.max,
            (1, 1, 2, 2), (1, 1, 2, 2), "VALID")

    h = pool(conv(img, params["conv1_w"], params["conv1_b"]))
    h = pool(conv(h, params["conv2_w"], params["conv2_b"]))
    h = pool(conv(h, params["conv3_w"], params["conv3_b"]))     # (N, F3, 1, 1)
    y = jnp.matmul(h, params["lin1_w"].T, precision=hi) + params["lin1_b"]
    z = jnp.matmul(y, params["lin2_w"].T, precision=hi) + params["lin2_b"]
    return jax.nn.sigmoid(z)                                    # (N, F3, 1, K)


if __name__ == "__main__":
    key = jax.random.PRNGKey(0)
    keys = jax.random.split(key, 12)
    N, Cin, H, W = 2, N_CHANNELS, 16, 16
    F1, F2, F3 = FILTERS
    L, K = LINEAR_DIM, N_CATEGORY

    img = jax.random.normal(keys[0], (N, Cin, H, W), jnp.float32)
    params = {
        "conv1_w": 0.2 * jax.random.normal(keys[1], (F1, Cin, KERNEL_SIZE, KERNEL_SIZE), jnp.float32),
        "conv1_b": 0.1 * jax.random.normal(keys[2], (F1,), jnp.float32),
        "conv2_w": 0.2 * jax.random.normal(keys[3], (F2, F1, KERNEL_SIZE, KERNEL_SIZE), jnp.float32),
        "conv2_b": 0.1 * jax.random.normal(keys[4], (F2,), jnp.float32),
        "conv3_w": 0.2 * jax.random.normal(keys[5], (F3, F2, KERNEL_SIZE, KERNEL_SIZE), jnp.float32),
        "conv3_b": 0.1 * jax.random.normal(keys[6], (F3,), jnp.float32),
        "lin1_w": 0.5 * jax.random.normal(keys[7], (L, 1), jnp.float32),
        "lin1_b": 0.1 * jax.random.normal(keys[8], (L,), jnp.float32),
        "lin2_w": 0.3 * jax.random.normal(keys[9], (K, L), jnp.float32),
        "lin2_b": 0.1 * jax.random.normal(keys[10], (K,), jnp.float32),
    }

    out = model_cnn_forward(img, params)
    out = jax.block_until_ready(out)
    assert out.shape == (N, F3, 1, K), out.shape

    ref = model_cnn_reference(img, params)
    max_err = float(jnp.max(jnp.abs(out - ref)))
    assert max_err < 1e-4, f"mismatch vs reference: {max_err}"
    print("KERNEL_OK")
</pallas_src>

<mosaic_0001>
module attributes {stable_mosaic.version = 11 : i64} {
  func.func @_model_cnn_kernel(%arg0: i32, %arg1: memref<16x16x8x4xf32, #tpu.memory_space<vmem>>, %arg2: memref<2x2x4x8xf32, #tpu.memory_space<vmem>>, %arg3: memref<1x8xf32, #tpu.memory_space<vmem>>, %arg4: memref<2x2x8x16xf32, #tpu.memory_space<vmem>>, %arg5: memref<1x16xf32, #tpu.memory_space<vmem>>, %arg6: memref<2x2x16x32xf32, #tpu.memory_space<vmem>>, %arg7: memref<1x32xf32, #tpu.memory_space<vmem>>, %arg8: memref<1x128xf32, #tpu.memory_space<vmem>>, %arg9: memref<1x128xf32, #tpu.memory_space<vmem>>, %arg10: memref<8x128xf32, #tpu.memory_space<vmem>>) attributes {dimension_semantics = [#tpu.dimension_semantics<parallel>], iteration_bounds = array<i64: 1>, scalar_prefetch = 0 : i64, scratch_operands = 0 : i64, tpu.core_type = #tpu.core_type<tc>, window_params = [{transform_indices = @transform_0, window_bounds = array<i64: 16, 16, 8, 4>}, {pipeline_mode = #tpu.pipeline_mode<synchronous>, transform_indices = @transform_1, window_bounds = array<i64: 2, 2, 4, 8>}, {pipeline_mode = #tpu.pipeline_mode<synchronous>, transform_indices = @transform_2, window_bounds = array<i64: 1, 8>}, {pipeline_mode = #tpu.pipeline_mode<synchronous>, transform_indices = @transform_3, window_bounds = array<i64: 2, 2, 8, 16>}, {pipeline_mode = #tpu.pipeline_mode<synchronous>, transform_indices = @transform_4, window_bounds = array<i64: 1, 16>}, {pipeline_mode = #tpu.pipeline_mode<synchronous>, transform_indices = @transform_5, window_bounds = array<i64: 2, 2, 16, 32>}, {pipeline_mode = #tpu.pipeline_mode<synchronous>, transform_indices = @transform_6, window_bounds = array<i64: 1, 32>}, {pipeline_mode = #tpu.pipeline_mode<synchronous>, transform_indices = @transform_7, window_bounds = array<i64: 1, 128>}, {pipeline_mode = #tpu.pipeline_mode<synchronous>, transform_indices = @transform_8, window_bounds = array<i64: 1, 128>}, {transform_indices = @transform_9, window_bounds = array<i64: 8, 128>}]} {
    %c0 = arith.constant 0 : index
    %c0_0 = arith.constant 0 : index
    %c0_1 = arith.constant 0 : index
    %c0_2 = arith.constant 0 : index
    %0 = vector.load %arg1[%c0, %c0_0, %c0_1, %c0_2] : memref<16x16x8x4xf32, #tpu.memory_space<vmem>>, vector<16x16x8x4xf32>
    %c0_3 = arith.constant 0 : index
    %c0_4 = arith.constant 0 : index
    %c0_5 = arith.constant 0 : index
    %c0_6 = arith.constant 0 : index
    %1 = vector.load %arg2[%c0_3, %c0_4, %c0_5, %c0_6] : memref<2x2x4x8xf32, #tpu.memory_space<vmem>>, vector<2x2x4x8xf32>
    %c0_7 = arith.constant 0 : index
    %c0_8 = arith.constant 0 : index
    %2 = vector.load %arg3[%c0_7, %c0_8] : memref<1x8xf32, #tpu.memory_space<vmem>>, vector<1x8xf32>
    %cst = arith.constant 0.000000e+00 : f32
    %3 = vector.broadcast %cst : f32 to vector<1800x8xf32>
    %4 = vector.extract_strided_slice %0 {offsets = [0, 0, 0, 0], sizes = [15, 15, 8, 4], strides = [1, 1, 1, 1]} : vector<16x16x8x4xf32> to vector<15x15x8x4xf32>
    %5 = vector.shape_cast %4 : vector<15x15x8x4xf32> to vector<1800x4xf32>
    %6 = vector.extract_strided_slice %1 {offsets = [0, 0, 0, 0], sizes = [1, 1, 4, 8], strides = [1, 1, 1, 1]} : vector<2x2x4x8xf32> to vector<1x1x4x8xf32>
    %7 = vector.shape_cast %6 : vector<1x1x4x8xf32> to vector<4x8xf32>
    %cst_9 = arith.constant dense<0.000000e+00> : vector<1800x8xf32>
    %8 = tpu.matmul %5, %7, %cst_9 {dimension_numbers = #tpu.dot_dimension_numbers<[1], [0], [0], [1], [0, 0, 1, 1], [], []>} : vector<1800x4xf32>, vector<4x8xf32>, vector<1800x8xf32> -> vector<1800x8xf32>
    %9 = arith.addf %3, %8 : vector<1800x8xf32>
    %10 = vector.extract_strided_slice %0 {offsets = [0, 1, 0, 0], sizes = [15, 15, 8, 4], strides = [1, 1, 1, 1]} : vector<16x16x8x4xf32> to vector<15x15x8x4xf32>
    %11 = vector.shape_cast %10 : vector<15x15x8x4xf32> to vector<1800x4xf32>
    %12 = vector.extract_strided_slice %1 {offsets = [0, 1, 0, 0], sizes = [1, 1, 4, 8], strides = [1, 1, 1, 1]} : vector<2x2x4x8xf32> to vector<1x1x4x8xf32>
    %13 = vector.shape_cast %12 : vector<1x1x4x8xf32> to vector<4x8xf32>
    %cst_10 = arith.constant dense<0.000000e+00> : vector<1800x8xf32>
    %14 = tpu.matmul %11, %13, %cst_10 {dimension_numbers = #tpu.dot_dimension_numbers<[1], [0], [0], [1], [0, 0, 1, 1], [], []>} : vector<1800x4xf32>, vector<4x8xf32>, vector<1800x8xf32> -> vector<1800x8xf32>
    %15 = arith.addf %9, %14 : vector<1800x8xf32>
    %16 = vector.extract_strided_slice %0 {offsets = [1, 0, 0, 0], sizes = [15, 15, 8, 4], strides = [1, 1, 1, 1]} : vector<16x16x8x4xf32> to vector<15x15x8x4xf32>
    %17 = vector.shape_cast %16 : vector<15x15x8x4xf32> to vector<1800x4xf32>
    %18 = vector.extract_strided_slice %1 {offsets = [1, 0, 0, 0], sizes = [1, 1, 4, 8], strides = [1, 1, 1, 1]} : vector<2x2x4x8xf32> to vector<1x1x4x8xf32>
    %19 = vector.shape_cast %18 : vector<1x1x4x8xf32> to vector<4x8xf32>
    %cst_11 = arith.constant dense<0.000000e+00> : vector<1800x8xf32>
    %20 = tpu.matmul %17, %19, %cst_11 {dimension_numbers = #tpu.dot_dimension_numbers<[1], [0], [0], [1], [0, 0, 1, 1], [], []>} : vector<1800x4xf32>, vector<4x8xf32>, vector<1800x8xf32> -> vector<1800x8xf32>
    %21 = arith.addf %15, %20 : vector<1800x8xf32>
    %22 = vector.extract_strided_slice %0 {offsets = [1, 1, 0, 0], sizes = [15, 15, 8, 4], strides = [1, 1, 1, 1]} : vector<16x16x8x4xf32> to vector<15x15x8x4xf32>
    %23 = vector.shape_cast %22 : vector<15x15x8x4xf32> to vector<1800x4xf32>
    %24 = vector.extract_strided_slice %1 {offsets = [1, 1, 0, 0], sizes = [1, 1, 4, 8], strides = [1, 1, 1, 1]} : vector<2x2x4x8xf32> to vector<1x1x4x8xf32>
    %25 = vector.shape_cast %24 : vector<1x1x4x8xf32> to vector<4x8xf32>
    %cst_12 = arith.constant dense<0.000000e+00> : vector<1800x8xf32>
    %26 = tpu.matmul %23, %25, %cst_12 {dimension_numbers = #tpu.dot_dimension_numbers<[1], [0], [0], [1], [0, 0, 1, 1], [], []>} : vector<1800x4xf32>, vector<4x8xf32>, vector<1800x8xf32> -> vector<1800x8xf32>
    %27 = arith.addf %21, %26 : vector<1800x8xf32>
    %28 = vector.shape_cast %27 : vector<1800x8xf32> to vector<15x15x8x8xf32>
    %29 = vector.extract_strided_slice %28 {offsets = [0, 0, 0, 0], sizes = [14, 15, 8, 8], strides = [1, 1, 1, 1]} : vector<15x15x8x8xf32> to vector<14x15x8x8xf32>
    %30 = vector.shape_cast %29 : vector<14x15x8x8xf32> to vector<7x2x15x8x8xf32>
    %cst_13 = arith.constant dense<0xFF800000> : vector<7x15x8x8xf32>
    %31 = vector.multi_reduction <maximumf>, %30, %cst_13 [1] : vector<7x2x15x8x8xf32> to vector<7x15x8x8xf32>
    %32 = vector.extract_strided_slice %31 {offsets = [0, 0, 0, 0], sizes = [7, 14, 8, 8], strides = [1, 1, 1, 1]} : vector<7x15x8x8xf32> to vector<7x14x8x8xf32>
    %33 = vector.shape_cast %32 : vector<7x14x8x8xf32> to vector<7x7x2x8x8xf32>
    %cst_14 = arith.constant dense<0xFF800000> : vector<7x7x8x8xf32>
    %34 = vector.multi_reduction <maximumf>, %33, %cst_14 [2] : vector<7x7x2x8x8xf32> to vector<7x7x8x8xf32>
    %35 = vector.shape_cast %2 : vector<1x8xf32> to vector<1x1x1x8xf32>
    %36 = vector.broadcast %35 : vector<1x1x1x8xf32> to vector<7x7x8x8xf32>
    %37 = arith.addf %34, %36 : vector<7x7x8x8xf32>
    %c0_15 = arith.constant 0 : index
    %c0_16 = arith.constant 0 : index
    %c0_17 = arith.constant 0 : index
    %c0_18 = arith.constant 0 : index
    %38 = vector.load %arg4[%c0_15, %c0_16, %c0_17, %c0_18] : memref<2x2x8x16xf32, #tpu.memory_space<vmem>>, vector<2x2x8x16xf32>
    %c0_19 = arith.constant 0 : index
    %c0_20 = arith.constant 0 : index
    %39 = vector.load %arg5[%c0_19, %c0_20] : memref<1x16xf32, #tpu.memory_space<vmem>>, vector<1x16xf32>
    %cst_21 = arith.constant 0.000000e+00 : f32
    %40 = vector.broadcast %cst_21 : f32 to vector<288x16xf32>
    %41 = vector.extract_strided_slice %37 {offsets = [0, 0, 0, 0], sizes = [6, 6, 8, 8], strides = [1, 1, 1, 1]} : vector<7x7x8x8xf32> to vector<6x6x8x8xf32>
    %42 = vector.shape_cast %41 : vector<6x6x8x8xf32> to vector<288x8xf32>
    %43 = vector.extract_strided_slice %38 {offsets = [0, 0, 0, 0], sizes = [1, 1, 8, 16], strides = [1, 1, 1, 1]} : vector<2x2x8x16xf32> to vector<1x1x8x16xf32>
    %44 = vector.shape_cast %43 : vector<1x1x8x16xf32> to vector<8x16xf32>
    %cst_22 = arith.constant dense<0.000000e+00> : vector<288x16xf32>
    %45 = tpu.matmul %42, %44, %cst_22 {dimension_numbers = #tpu.dot_dimension_numbers<[1], [0], [0], [1], [0, 0, 1, 1], [], []>} : vector<288x8xf32>, vector<8x16xf32>, vector<288x16xf32> -> vector<288x16xf32>
    %46 = arith.addf %40, %45 : vector<288x16xf32>
    %47 = vector.extract_strided_slice %37 {offsets = [0, 1, 0, 0], sizes = [6, 6, 8, 8], strides = [1, 1, 1, 1]} : vector<7x7x8x8xf32> to vector<6x6x8x8xf32>
    %48 = vector.shape_cast %47 : vector<6x6x8x8xf32> to vector<288x8xf32>
    %49 = vector.extract_strided_slice %38 {offsets = [0, 1, 0, 0], sizes = [1, 1, 8, 16], strides = [1, 1, 1, 1]} : vector<2x2x8x16xf32> to vector<1x1x8x16xf32>
    %50 = vector.shape_cast %49 : vector<1x1x8x16xf32> to vector<8x16xf32>
    %cst_23 = arith.constant dense<0.000000e+00> : vector<288x16xf32>
    %51 = tpu.matmul %48, %50, %cst_23 {dimension_numbers = #tpu.dot_dimension_numbers<[1], [0], [0], [1], [0, 0, 1, 1], [], []>} : vector<288x8xf32>, vector<8x16xf32>, vector<288x16xf32> -> vector<288x16xf32>
    %52 = arith.addf %46, %51 : vector<288x16xf32>
    %53 = vector.extract_strided_slice %37 {offsets = [1, 0, 0, 0], sizes = [6, 6, 8, 8], strides = [1, 1, 1, 1]} : vector<7x7x8x8xf32> to vector<6x6x8x8xf32>
    %54 = vector.shape_cast %53 : vector<6x6x8x8xf32> to vector<288x8xf32>
    %55 = vector.extract_strided_slice %38 {offsets = [1, 0, 0, 0], sizes = [1, 1, 8, 16], strides = [1, 1, 1, 1]} : vector<2x2x8x16xf32> to vector<1x1x8x16xf32>
    %56 = vector.shape_cast %55 : vector<1x1x8x16xf32> to vector<8x16xf32>
    %cst_24 = arith.constant dense<0.000000e+00> : vector<288x16xf32>
    %57 = tpu.matmul %54, %56, %cst_24 {dimension_numbers = #tpu.dot_dimension_numbers<[1], [0], [0], [1], [0, 0, 1, 1], [], []>} : vector<288x8xf32>, vector<8x16xf32>, vector<288x16xf32> -> vector<288x16xf32>
    %58 = arith.addf %52, %57 : vector<288x16xf32>
    %59 = vector.extract_strided_slice %37 {offsets = [1, 1, 0, 0], sizes = [6, 6, 8, 8], strides = [1, 1, 1, 1]} : vector<7x7x8x8xf32> to vector<6x6x8x8xf32>
    %60 = vector.shape_cast %59 : vector<6x6x8x8xf32> to vector<288x8xf32>
    %61 = vector.extract_strided_slice %38 {offsets = [1, 1, 0, 0], sizes = [1, 1, 8, 16], strides = [1, 1, 1, 1]} : vector<2x2x8x16xf32> to vector<1x1x8x16xf32>
    %62 = vector.shape_cast %61 : vector<1x1x8x16xf32> to vector<8x16xf32>
    %cst_25 = arith.constant dense<0.000000e+00> : vector<288x16xf32>
    %63 = tpu.matmul %60, %62, %cst_25 {dimension_numbers = #tpu.dot_dimension_numbers<[1], [0], [0], [1], [0, 0, 1, 1], [], []>} : vector<288x8xf32>, vector<8x16xf32>, vector<288x16xf32> -> vector<288x16xf32>
    %64 = arith.addf %58, %63 : vector<288x16xf32>
    %65 = vector.shape_cast %64 : vector<288x16xf32> to vector<6x6x8x16xf32>
    %66 = vector.shape_cast %65 : vector<6x6x8x16xf32> to vector<3x2x6x8x16xf32>
    %cst_26 = arith.constant dense<0xFF800000> : vector<3x6x8x16xf32>
    %67 = vector.multi_reduction <maximumf>, %66, %cst_26 [1] : vector<3x2x6x8x16xf32> to vector<3x6x8x16xf32>
    %68 = vector.shape_cast %67 : vector<3x6x8x16xf32> to vector<3x3x2x8x16xf32>
    %cst_27 = arith.constant dense<0xFF800000> : vector<3x3x8x16xf32>
    %69 = vector.multi_reduction <maximumf>, %68, %cst_27 [2] : vector<3x3x2x8x16xf32> to vector<3x3x8x16xf32>
    %70 = vector.shape_cast %39 : vector<1x16xf32> to vector<1x1x1x16xf32>
    %71 = vector.broadcast %70 : vector<1x1x1x16xf32> to vector<3x3x8x16xf32>
    %72 = arith.addf %69, %71 : vector<3x3x8x16xf32>
    %c0_28 = arith.constant 0 : index
    %c0_29 = arith.constant 0 : index
    %c0_30 = arith.constant 0 : index
    %c0_31 = arith.constant 0 : index
    %73 = vector.load %arg6[%c0_28, %c0_29, %c0_30, %c0_31] : memref<2x2x16x32xf32, #tpu.memory_space<vmem>>, vector<2x2x16x32xf32>
    %c0_32 = arith.constant 0 : index
    %c0_33 = arith.constant 0 : index
    %74 = vector.load %arg7[%c0_32, %c0_33] : memref<1x32xf32, #tpu.memory_space<vmem>>, vector<1x32xf32>
    %cst_34 = arith.constant 0.000000e+00 : f32
    %75 = vector.broadcast %cst_34 : f32 to vector<32x32xf32>
    %76 = vector.extract_strided_slice %72 {offsets = [0, 0, 0, 0], sizes = [2, 2, 8, 16], strides = [1, 1, 1, 1]} : vector<3x3x8x16xf32> to vector<2x2x8x16xf32>
    %77 = vector.shape_cast %76 : vector<2x2x8x16xf32> to vector<32x16xf32>
    %78 = vector.extract_strided_slice %73 {offsets = [0, 0, 0, 0], sizes = [1, 1, 16, 32], strides = [1, 1, 1, 1]} : vector<2x2x16x32xf32> to vector<1x1x16x32xf32>
    %79 = vector.shape_cast %78 : vector<1x1x16x32xf32> to vector<16x32xf32>
    %cst_35 = arith.constant dense<0.000000e+00> : vector<32x32xf32>
    %80 = tpu.matmul %77, %79, %cst_35 {dimension_numbers = #tpu.dot_dimension_numbers<[1], [0], [0], [1], [0, 0, 1, 1], [], []>} : vector<32x16xf32>, vector<16x32xf32>, vector<32x32xf32> -> vector<32x32xf32>
    %81 = arith.addf %75, %80 : vector<32x32xf32>
    %82 = vector.extract_strided_slice %72 {offsets = [0, 1, 0, 0], sizes = [2, 2, 8, 16], strides = [1, 1, 1, 1]} : vector<3x3x8x16xf32> to vector<2x2x8x16xf32>
    %83 = vector.shape_cast %82 : vector<2x2x8x16xf32> to vector<32x16xf32>
    %84 = vector.extract_strided_slice %73 {offsets = [0, 1, 0, 0], sizes = [1, 1, 16, 32], strides = [1, 1, 1, 1]} : vector<2x2x16x32xf32> to vector<1x1x16x32xf32>
    %85 = vector.shape_cast %84 : vector<1x1x16x32xf32> to vector<16x32xf32>
    %cst_36 = arith.constant dense<0.000000e+00> : vector<32x32xf32>
    %86 = tpu.matmul %83, %85, %cst_36 {dimension_numbers = #tpu.dot_dimension_numbers<[1], [0], [0], [1], [0, 0, 1, 1], [], []>} : vector<32x16xf32>, vector<16x32xf32>, vector<32x32xf32> -> vector<32x32xf32>
    %87 = arith.addf %81, %86 : vector<32x32xf32>
    %88 = vector.extract_strided_slice %72 {offsets = [1, 0, 0, 0], sizes = [2, 2, 8, 16], strides = [1, 1, 1, 1]} : vector<3x3x8x16xf32> to vector<2x2x8x16xf32>
    %89 = vector.shape_cast %88 : vector<2x2x8x16xf32> to vector<32x16xf32>
    %90 = vector.extract_strided_slice %73 {offsets = [1, 0, 0, 0], sizes = [1, 1, 16, 32], strides = [1, 1, 1, 1]} : vector<2x2x16x32xf32> to vector<1x1x16x32xf32>
    %91 = vector.shape_cast %90 : vector<1x1x16x32xf32> to vector<16x32xf32>
    %cst_37 = arith.constant dense<0.000000e+00> : vector<32x32xf32>
    %92 = tpu.matmul %89, %91, %cst_37 {dimension_numbers = #tpu.dot_dimension_numbers<[1], [0], [0], [1], [0, 0, 1, 1], [], []>} : vector<32x16xf32>, vector<16x32xf32>, vector<32x32xf32> -> vector<32x32xf32>
    %93 = arith.addf %87, %92 : vector<32x32xf32>
    %94 = vector.extract_strided_slice %72 {offsets = [1, 1, 0, 0], sizes = [2, 2, 8, 16], strides = [1, 1, 1, 1]} : vector<3x3x8x16xf32> to vector<2x2x8x16xf32>
    %95 = vector.shape_cast %94 : vector<2x2x8x16xf32> to vector<32x16xf32>
    %96 = vector.extract_strided_slice %73 {offsets = [1, 1, 0, 0], sizes = [1, 1, 16, 32], strides = [1, 1, 1, 1]} : vector<2x2x16x32xf32> to vector<1x1x16x32xf32>
    %97 = vector.shape_cast %96 : vector<1x1x16x32xf32> to vector<16x32xf32>
    %cst_38 = arith.constant dense<0.000000e+00> : vector<32x32xf32>
    %98 = tpu.matmul %95, %97, %cst_38 {dimension_numbers = #tpu.dot_dimension_numbers<[1], [0], [0], [1], [0, 0, 1, 1], [], []>} : vector<32x16xf32>, vector<16x32xf32>, vector<32x32xf32> -> vector<32x32xf32>
    %99 = arith.addf %93, %98 : vector<32x32xf32>
    %100 = vector.shape_cast %99 : vector<32x32xf32> to vector<2x2x8x32xf32>
    %101 = vector.shape_cast %100 : vector<2x2x8x32xf32> to vector<1x2x2x8x32xf32>
    %cst_39 = arith.constant dense<0xFF800000> : vector<1x2x8x32xf32>
    %102 = vector.multi_reduction <maximumf>, %101, %cst_39 [1] : vector<1x2x2x8x32xf32> to vector<1x2x8x32xf32>
    %103 = vector.shape_cast %102 : vector<1x2x8x32xf32> to vector<1x1x2x8x32xf32>
    %cst_40 = arith.constant dense<0xFF800000> : vector<1x1x8x32xf32>
    %104 = vector.multi_reduction <maximumf>, %103, %cst_40 [2] : vector<1x1x2x8x32xf32> to vector<1x1x8x32xf32>
    %105 = vector.shape_cast %74 : vector<1x32xf32> to vector<1x1x1x32xf32>
    %106 = vector.broadcast %105 : vector<1x1x1x32xf32> to vector<1x1x8x32xf32>
    %107 = arith.addf %104, %106 : vector<1x1x8x32xf32>
    %108 = vector.shape_cast %107 : vector<1x1x8x32xf32> to vector<8x32xf32>
    %109 = tpu.concatenate %108, %108, %108, %108 in 1 : vector<8x32xf32>, vector<8x32xf32>, vector<8x32xf32>, vector<8x32xf32> -> vector<8x128xf32>
    %c0_41 = arith.constant 0 : index
    %c0_42 = arith.constant 0 : index
    %110 = vector.load %arg8[%c0_41, %c0_42] : memref<1x128xf32, #tpu.memory_space<vmem>>, vector<1x128xf32>
    %111 = vector.broadcast %110 : vector<1x128xf32> to vector<8x128xf32>
    %112 = arith.mulf %109, %111 : vector<8x128xf32>
    %c0_43 = arith.constant 0 : index
    %c0_44 = arith.constant 0 : index
    %113 = vector.load %arg9[%c0_43, %c0_44] : memref<1x128xf32, #tpu.memory_space<vmem>>, vector<1x128xf32>
    %114 = vector.broadcast %113 : vector<1x128xf32> to vector<8x128xf32>
    %115 = arith.addf %112, %114 : vector<8x128xf32>
    %cst_45 = arith.constant 0.000000e+00 : f32
    %116 = vector.broadcast %cst_45 : f32 to vector<8x128xf32>
    %117 = arith.subf %116, %115 : vector<8x128xf32>
    %118 = math.exp %117 : vector<8x128xf32>
    %cst_46 = arith.constant 1.000000e+00 : f32
    %119 = vector.broadcast %cst_46 : f32 to vector<8x128xf32>
    %120 = arith.addf %119, %118 : vector<8x128xf32>
    %121 = tpu.reciprocal %120 : vector<8x128xf32> -> vector<8x128xf32>
    %c0_47 = arith.constant 0 : index
    %c0_48 = arith.constant 0 : index
    %122 = vector.load %arg10[%c0_47, %c0_48] : memref<8x128xf32, #tpu.memory_space<vmem>>, vector<8x128xf32>
    tpu.vector_store %arg10[%c0_47, %c0_48], %121 {strides = array<i32>} : memref<8x128xf32, #tpu.memory_space<vmem>>, vector<8x128xf32>,
    return
  }
  func.func @transform_0(%arg0: i32) -> (i32, i32, i32, i32) {
    %c0_i32 = arith.constant 0 : i32
    %c0_i32_0 = arith.constant 0 : i32
    %c0_i32_1 = arith.constant 0 : i32
    %c0_i32_2 = arith.constant 0 : i32
    return %c0_i32, %c0_i32_0, %arg0, %c0_i32_1 : i32, i32, i32, i32
  }
  func.func @transform_1(%arg0: i32) -> (i32, i32, i32, i32) {
    %c0_i32 = arith.constant 0 : i32
    %c0_i32_0 = arith.constant 0 : i32
    %c0_i32_1 = arith.constant 0 : i32
    %c0_i32_2 = arith.constant 0 : i32
    %c0_i32_3 = arith.constant 0 : i32
    return %c0_i32, %c0_i32_0, %c0_i32_1, %c0_i32_2 : i32, i32, i32, i32
  }
  func.func @transform_2(%arg0: i32) -> (i32, i32) {
    %c0_i32 = arith.constant 0 : i32
    %c0_i32_0 = arith.constant 0 : i32
    %c0_i32_1 = arith.constant 0 : i32
    return %c0_i32, %c0_i32_0 : i32, i32
  }
  func.func @transform_3(%arg0: i32) -> (i32, i32, i32, i32) {
    %c0_i32 = arith.constant 0 : i32
    %c0_i32_0 = arith.constant 0 : i32
    %c0_i32_1 = arith.constant 0 : i32
    %c0_i32_2 = arith.constant 0 : i32
    %c0_i32_3 = arith.constant 0 : i32
    return %c0_i32, %c0_i32_0, %c0_i32_1, %c0_i32_2 : i32, i32, i32, i32
  }
  func.func @transform_4(%arg0: i32) -> (i32, i32) {
    %c0_i32 = arith.constant 0 : i32
    %c0_i32_0 = arith.constant 0 : i32
    %c0_i32_1 = arith.constant 0 : i32
    return %c0_i32, %c0_i32_0 : i32, i32
  }
  func.func @transform_5(%arg0: i32) -> (i32, i32, i32, i32) {
    %c0_i32 = arith.constant 0 : i32
    %c0_i32_0 = arith.constant 0 : i32
    %c0_i32_1 = arith.constant 0 : i32
    %c0_i32_2 = arith.constant 0 : i32
    %c0_i32_3 = arith.constant 0 : i32
    return %c0_i32, %c0_i32_0, %c0_i32_1, %c0_i32_2 : i32, i32, i32, i32
  }
  func.func @transform_6(%arg0: i32) -> (i32, i32) {
    %c0_i32 = arith.constant 0 : i32
    %c0_i32_0 = arith.constant 0 : i32
    %c0_i32_1 = arith.constant 0 : i32
    return %c0_i32, %c0_i32_0 : i32, i32
  }
  func.func @transform_7(%arg0: i32) -> (i32, i32) {
    %c0_i32 = arith.constant 0 : i32
    %c0_i32_0 = arith.constant 0 : i32
    %c0_i32_1 = arith.constant 0 : i32
    return %c0_i32, %c0_i32_0 : i32, i32
  }
  func.func @transform_8(%arg0: i32) -> (i32, i32) {
    %c0_i32 = arith.constant 0 : i32
    %c0_i32_0 = arith.constant 0 : i32
    %c0_i32_1 = arith.constant 0 : i32
    return %c0_i32, %c0_i32_0 : i32, i32
  }
  func.func @transform_9(%arg0: i32) -> (i32, i32) {
    %c0_i32 = arith.constant 0 : i32
    %c0_i32_0 = arith.constant 0 : i32
    return %arg0, %c0_i32 : i32, i32
  }
}

</mosaic_0001>

<llo_original>
// kernel: model_cnn_forward.1
$region0: #{model_cnn_forward.1}
  #allocation0 [shape = 'u32[]', space=smem, size = 0x4, offset = 0x4, fixed_abs, tag = 'smem constant byte address 0x4 - core index']
  #allocation1 [shape = 'u32[72,128]{1,0:T(1,128)}', space=vmem, size = 0x9000, scoped, tag = 'internal scratch']
  %s0 = inlined_call_operand.vmem [shape: f32[16,16,8,4], index: 0, kind: input, shape index: {}]
  %s1 = inlined_call_operand.vmem [shape: f32[2,2,4,8], index: 1, kind: input, shape index: {}]
  %s2 = inlined_call_operand.vmem [shape: f32[1,8], index: 2, kind: input, shape index: {}]
  %s3 = inlined_call_operand.vmem [shape: f32[2,2,8,16], index: 3, kind: input, shape index: {}]
  %s4 = inlined_call_operand.vmem [shape: f32[1,16], index: 4, kind: input, shape index: {}]
  %s5 = inlined_call_operand.vmem [shape: f32[2,2,16,32], index: 5, kind: input, shape index: {}]
  %s6 = inlined_call_operand.vmem [shape: f32[1,32], index: 6, kind: input, shape index: {}]
  %s7 = inlined_call_operand.vmem [shape: f32[1,128], index: 7, kind: input, shape index: {}]
  %s8 = inlined_call_operand.vmem [shape: f32[1,128], index: 8, kind: input, shape index: {}]
  %s9 = inlined_call_operand.vmem [shape: f32[8,128], index: 9, kind: output, shape index: {}]
  %s10 = sld [smem:[#allocation0]]
  $region46: #{model_cnn_forward.1} parent=0
    _
  %s12 = ssub.s32 1, %s10
  %s13 = scalar_select 0, %s12, %s10
  // Predicated region
  $region2: #{model_cnn_forward.1} parent=0 // pred_check
    _
  $region3: #{model_cnn_forward.1} parent=0 // pred_check_branch
    %15 = sbr.rel (0) target = $region5
  $region4: #{model_cnn_forward.1} parent=0 // pred_region
    _
  $region5: #{model_cnn_forward.1} parent=0 // pred_fallthru
    _
  // Predicated region
  $region6: #{model_cnn_forward.1} parent=0 // pred_check
    _
  $region7: #{model_cnn_forward.1} parent=0 // pred_check_branch
    %17 = sbr.rel (0) target = $region9
  $region8: #{model_cnn_forward.1} parent=0 // pred_region
    _
  $region9: #{model_cnn_forward.1} parent=0 // pred_fallthru
    _
  // Predicated region
  $region10: #{model_cnn_forward.1} parent=0 // pred_check
    _
  $region11: #{model_cnn_forward.1} parent=0 // pred_check_branch
    %19 = sbr.rel (0) target = $region13
  $region12: #{model_cnn_forward.1} parent=0 // pred_region
    _
  $region13: #{model_cnn_forward.1} parent=0 // pred_fallthru
    _
  // Predicated region
  $region14: #{model_cnn_forward.1} parent=0 // pred_check
    _
  $region15: #{model_cnn_forward.1} parent=0 // pred_check_branch
    %21 = sbr.rel (0) target = $region17
  $region16: #{model_cnn_forward.1} parent=0 // pred_region
    _
  $region17: #{model_cnn_forward.1} parent=0 // pred_fallthru
    _
  // Predicated region
  $region18: #{model_cnn_forward.1} parent=0 // pred_check
    _
  $region19: #{model_cnn_forward.1} parent=0 // pred_check_branch
    %23 = sbr.rel (0) target = $region21
  $region20: #{model_cnn_forward.1} parent=0 // pred_region
    _
  $region21: #{model_cnn_forward.1} parent=0 // pred_fallthru
    _
  // Predicated region
  $region22: #{model_cnn_forward.1} parent=0 // pred_check
    _
  $region23: #{model_cnn_forward.1} parent=0 // pred_check_branch
    %25 = sbr.rel (0) target = $region25
  $region24: #{model_cnn_forward.1} parent=0 // pred_region
    _
  $region25: #{model_cnn_forward.1} parent=0 // pred_fallthru
    _
  // Predicated region
  $region26: #{model_cnn_forward.1} parent=0 // pred_check
    _
  $region27: #{model_cnn_forward.1} parent=0 // pred_check_branch
    %27 = sbr.rel (0) target = $region29
  $region28: #{model_cnn_forward.1} parent=0 // pred_region
    _
  $region29: #{model_cnn_forward.1} parent=0 // pred_fallthru
    _
  // Predicated region
  $region30: #{model_cnn_forward.1} parent=0 // pred_check
    _
  $region31: #{model_cnn_forward.1} parent=0 // pred_check_branch
    %29 = sbr.rel (0) target = $region33
  $region32: #{model_cnn_forward.1} parent=0 // pred_region
    _
  $region33: #{model_cnn_forward.1} parent=0 // pred_fallthru
    _
  // Predicated region
  $region34: #{model_cnn_forward.1} parent=0 // pred_check
    _
  $region35: #{model_cnn_forward.1} parent=0 // pred_check_branch
    %31 = sbr.rel (0) target = $region37
  $region36: #{model_cnn_forward.1} parent=0 // pred_region
    _
  $region37: #{model_cnn_forward.1} parent=0 // pred_fallthru
    _
  %v32 = vld [vmem:[%s0] sm:$0xff]
  %v33 = vld [vmem:[%s0 + $0x8] sm:$0xff]
  %v34 = vld [vmem:[%s0 + $0x10] sm:$0xff]
  %v35 = vld [vmem:[%s0 + $0x18] sm:$0xff]
  %v36 = vld [vmem:[%s0 + $0x20] sm:$0xff]
  %v37 = vld [vmem:[%s0 + $0x28] sm:$0xff]
  %v38 = vld [vmem:[%s0 + $0x30] sm:$0xff]
  %v39 = vld [vmem:[%s0 + $0x38] sm:$0xff]
  %v40 = vld [vmem:[%s0 + $0x40] sm:$0xff]
  %v41 = vld [vmem:[%s0 + $0x48] sm:$0xff]
  %v42 = vld [vmem:[%s0 + $0x50] sm:$0xff]
  %v43 = vld [vmem:[%s0 + $0x58] sm:$0xff]
  %v44 = vld [vmem:[%s0 + $0x60] sm:$0xff]
  %v45 = vld [vmem:[%s0 + $0x68] sm:$0xff]
  %v46 = vld [vmem:[%s0 + $0x70] sm:$0xff]
  %v47 = vld [vmem:[%s0 + $0x78] sm:$0xff]
  %v48 = vld [vmem:[%s0 + $0x80] sm:$0xff]
  %v49 = vld [vmem:[%s0 + $0x88] sm:$0xff]
  %v50 = vld [vmem:[%s0 + $0x90] sm:$0xff]
  %v51 = vld [vmem:[%s0 + $0x98] sm:$0xff]
  %v52 = vld [vmem:[%s0 + $0xa0] sm:$0xff]
  %v53 = vld [vmem:[%s0 + $0xa8] sm:$0xff]
  %v54 = vld [vmem:[%s0 + $0xb0] sm:$0xff]
  %v55 = vld [vmem:[%s0 + $0xb8] sm:$0xff]
  %v56 = vld [vmem:[%s0 + $0xc0] sm:$0xff]
  %v57 = vld [vmem:[%s0 + $0xc8] sm:$0xff]
  %v58 = vld [vmem:[%s0 + $0xd0] sm:$0xff]
  %v59 = vld [vmem:[%s0 + $0xd8] sm:$0xff]
  %v60 = vld [vmem:[%s0 + $0xe0] sm:$0xff]
  %v61 = vld [vmem:[%s0 + $0xe8] sm:$0xff]
  %v62 = vld [vmem:[%s0 + $0xf0] sm:$0xff]
  %v63 = vld [vmem:[%s0 + $0xf8] sm:$0xff]
  %v64 = vld [vmem:[%s0 + $0x100] sm:$0xff]
  %v65 = vld [vmem:[%s0 + $0x108] sm:$0xff]
  %v66 = vld [vmem:[%s0 + $0x110] sm:$0xff]
  %v67 = vld [vmem:[%s0 + $0x118] sm:$0xff]
  %v68 = vld [vmem:[%s0 + $0x120] sm:$0xff]
  %v69 = vld [vmem:[%s0 + $0x128] sm:$0xff]
  %v70 = vld [vmem:[%s0 + $0x130] sm:$0xff]
  %v71 = vld [vmem:[%s0 + $0x138] sm:$0xff]
  %v72 = vld [vmem:[%s0 + $0x140] sm:$0xff]
  %v73 = vld [vmem:[%s0 + $0x148] sm:$0xff]
  %v74 = vld [vmem:[%s0 + $0x150] sm:$0xff]
  %v75 = vld [vmem:[%s0 + $0x158] sm:$0xff]
  %v76 = vld [vmem:[%s0 + $0x160] sm:$0xff]
  %v77 = vld [vmem:[%s0 + $0x168] sm:$0xff]
  %v78 = vld [vmem:[%s0 + $0x170] sm:$0xff]
  %v79 = vld [vmem:[%s0 + $0x178] sm:$0xff]
  %v80 = vld [vmem:[%s0 + $0x180] sm:$0xff]
  %v81 = vld [vmem:[%s0 + $0x188] sm:$0xff]
  %v82 = vld [vmem:[%s0 + $0x190] sm:$0xff]
  %v83 = vld [vmem:[%s0 + $0x198] sm:$0xff]
  %v84 = vld [vmem:[%s0 + $0x1a0] sm:$0xff]
  %v85 = vld [vmem:[%s0 + $0x1a8] sm:$0xff]
  %v86 = vld [vmem:[%s0 + $0x1b0] sm:$0xff]
  %v87 = vld [vmem:[%s0 + $0x1b8] sm:$0xff]
  %v88 = vld [vmem:[%s0 + $0x1c0] sm:$0xff]
  %v89 = vld [vmem:[%s0 + $0x1c8] sm:$0xff]
  %v90 = vld [vmem:[%s0 + $0x1d0] sm:$0xff]
  %v91 = vld [vmem:[%s0 + $0x1d8] sm:$0xff]
  %v92 = vld [vmem:[%s0 + $0x1e0] sm:$0xff]
  %v93 = vld [vmem:[%s0 + $0x1e8] sm:$0xff]
  %v94 = vld [vmem:[%s0 + $0x1f0] sm:$0xff]
  %v95 = vld [vmem:[%s0 + $0x1f8] sm:$0xff]
  %v96 = vld [vmem:[%s0 + $0x200] sm:$0xff]
  %v97 = vld [vmem:[%s0 + $0x208] sm:$0xff]
  %v98 = vld [vmem:[%s0 + $0x210] sm:$0xff]
  %v99 = vld [vmem:[%s0 + $0x218] sm:$0xff]
  %v100 = vld [vmem:[%s0 + $0x220] sm:$0xff]
  %v101 = vld [vmem:[%s0 + $0x228] sm:$0xff]
  %v102 = vld [vmem:[%s0 + $0x230] sm:$0xff]
  %v103 = vld [vmem:[%s0 + $0x238] sm:$0xff]
  %v104 = vld [vmem:[%s0 + $0x240] sm:$0xff]
  %v105 = vld [vmem:[%s0 + $0x248] sm:$0xff]
  %v106 = vld [vmem:[%s0 + $0x250] sm:$0xff]
  %v107 = vld [vmem:[%s0 + $0x258] sm:$0xff]
  %v108 = vld [vmem:[%s0 + $0x260] sm:$0xff]
  %v109 = vld [vmem:[%s0 + $0x268] sm:$0xff]
  %v110 = vld [vmem:[%s0 + $0x270] sm:$0xff]
  %v111 = vld [vmem:[%s0 + $0x278] sm:$0xff]
  %v112 = vld [vmem:[%s0 + $0x280] sm:$0xff]
  %v113 = vld [vmem:[%s0 + $0x288] sm:$0xff]
  %v114 = vld [vmem:[%s0 + $0x290] sm:$0xff]
  %v115 = vld [vmem:[%s0 + $0x298] sm:$0xff]
  %v116 = vld [vmem:[%s0 + $0x2a0] sm:$0xff]
  %v117 = vld [vmem:[%s0 + $0x2a8] sm:$0xff]
  %v118 = vld [vmem:[%s0 + $0x2b0] sm:$0xff]
  %v119 = vld [vmem:[%s0 + $0x2b8] sm:$0xff]
  %v120 = vld [vmem:[%s0 + $0x2c0] sm:$0xff]
  %v121 = vld [vmem:[%s0 + $0x2c8] sm:$0xff]
  %v122 = vld [vmem:[%s0 + $0x2d0] sm:$0xff]
  %v123 = vld [vmem:[%s0 + $0x2d8] sm:$0xff]
  %v124 = vld [vmem:[%s0 + $0x2e0] sm:$0xff]
  %v125 = vld [vmem:[%s0 + $0x2e8] sm:$0xff]
  %v126 = vld [vmem:[%s0 + $0x2f0] sm:$0xff]
  %v127 = vld [vmem:[%s0 + $0x2f8] sm:$0xff]
  %v128 = vld [vmem:[%s0 + $0x300] sm:$0xff]
  %v129 = vld [vmem:[%s0 + $0x308] sm:$0xff]
  %v130 = vld [vmem:[%s0 + $0x310] sm:$0xff]
  %v131 = vld [vmem:[%s0 + $0x318] sm:$0xff]
  %v132 = vld [vmem:[%s0 + $0x320] sm:$0xff]
  %v133 = vld [vmem:[%s0 + $0x328] sm:$0xff]
  %v134 = vld [vmem:[%s0 + $0x330] sm:$0xff]
  %v135 = vld [vmem:[%s0 + $0x338] sm:$0xff]
  %v136 = vld [vmem:[%s0 + $0x340] sm:$0xff]
  %v137 = vld [vmem:[%s0 + $0x348] sm:$0xff]
  %v138 = vld [vmem:[%s0 + $0x350] sm:$0xff]
  %v139 = vld [vmem:[%s0 + $0x358] sm:$0xff]
  %v140 = vld [vmem:[%s0 + $0x360] sm:$0xff]
  %v141 = vld [vmem:[%s0 + $0x368] sm:$0xff]
  %v142 = vld [vmem:[%s0 + $0x370] sm:$0xff]
  %v143 = vld [vmem:[%s0 + $0x378] sm:$0xff]
  %v144 = vld [vmem:[%s0 + $0x380] sm:$0xff]
  %v145 = vld [vmem:[%s0 + $0x388] sm:$0xff]
  %v146 = vld [vmem:[%s0 + $0x390] sm:$0xff]
  %v147 = vld [vmem:[%s0 + $0x398] sm:$0xff]
  %v148 = vld [vmem:[%s0 + $0x3a0] sm:$0xff]
  %v149 = vld [vmem:[%s0 + $0x3a8] sm:$0xff]
  %v150 = vld [vmem:[%s0 + $0x3b0] sm:$0xff]
  %v151 = vld [vmem:[%s0 + $0x3b8] sm:$0xff]
  %v152 = vld [vmem:[%s0 + $0x3c0] sm:$0xff]
  %v153 = vld [vmem:[%s0 + $0x3c8] sm:$0xff]
  %v154 = vld [vmem:[%s0 + $0x3d0] sm:$0xff]
  %v155 = vld [vmem:[%s0 + $0x3d8] sm:$0xff]
  %v156 = vld [vmem:[%s0 + $0x3e0] sm:$0xff]
  %v157 = vld [vmem:[%s0 + $0x3e8] sm:$0xff]
  %v158 = vld [vmem:[%s0 + $0x3f0] sm:$0xff]
  %v159 = vld [vmem:[%s0 + $0x3f8] sm:$0xff]
  %v160 = vld [vmem:[%s0 + $0x400] sm:$0xff]
  %v161 = vld [vmem:[%s0 + $0x408] sm:$0xff]
  %v162 = vld [vmem:[%s0 + $0x410] sm:$0xff]
  %v163 = vld [vmem:[%s0 + $0x418] sm:$0xff]
  %v164 = vld [vmem:[%s0 + $0x420] sm:$0xff]
  %v165 = vld [vmem:[%s0 + $0x428] sm:$0xff]
  %v166 = vld [vmem:[%s0 + $0x430] sm:$0xff]
  %v167 = vld [vmem:[%s0 + $0x438] sm:$0xff]
  %v168 = vld [vmem:[%s0 + $0x440] sm:$0xff]
  %v169 = vld [vmem:[%s0 + $0x448] sm:$0xff]
  %v170 = vld [vmem:[%s0 + $0x450] sm:$0xff]
  %v171 = vld [vmem:[%s0 + $0x458] sm:$0xff]
  %v172 = vld [vmem:[%s0 + $0x460] sm:$0xff]
  %v173 = vld [vmem:[%s0 + $0x468] sm:$0xff]
  %v174 = vld [vmem:[%s0 + $0x470] sm:$0xff]
  %v175 = vld [vmem:[%s0 + $0x478] sm:$0xff]
  %v176 = vld [vmem:[%s0 + $0x480] sm:$0xff]
  %v177 = vld [vmem:[%s0 + $0x488] sm:$0xff]
  %v178 = vld [vmem:[%s0 + $0x490] sm:$0xff]
  %v179 = vld [vmem:[%s0 + $0x498] sm:$0xff]
  %v180 = vld [vmem:[%s0 + $0x4a0] sm:$0xff]
  %v181 = vld [vmem:[%s0 + $0x4a8] sm:$0xff]
  %v182 = vld [vmem:[%s0 + $0x4b0] sm:$0xff]
  %v183 = vld [vmem:[%s0 + $0x4b8] sm:$0xff]
  %v184 = vld [vmem:[%s0 + $0x4c0] sm:$0xff]
  %v185 = vld [vmem:[%s0 + $0x4c8] sm:$0xff]
  %v186 = vld [vmem:[%s0 + $0x4d0] sm:$0xff]
  %v187 = vld [vmem:[%s0 + $0x4d8] sm:$0xff]
  %v188 = vld [vmem:[%s0 + $0x4e0] sm:$0xff]
  %v189 = vld [vmem:[%s0 + $0x4e8] sm:$0xff]
  %v190 = vld [vmem:[%s0 + $0x4f0] sm:$0xff]
  %v191 = vld [vmem:[%s0 + $0x4f8] sm:$0xff]
  %v192 = vld [vmem:[%s0 + $0x500] sm:$0xff]
  %v193 = vld [vmem:[%s0 + $0x508] sm:$0xff]
  %v194 = vld [vmem:[%s0 + $0x510] sm:$0xff]
  %v195 = vld [vmem:[%s0 + $0x518] sm:$0xff]
  %v196 = vld [vmem:[%s0 + $0x520] sm:$0xff]
  %v197 = vld [vmem:[%s0 + $0x528] sm:$0xff]
  %v198 = vld [vmem:[%s0 + $0x530] sm:$0xff]
  %v199 = vld [vmem:[%s0 + $0x538] sm:$0xff]
  %v200 = vld [vmem:[%s0 + $0x540] sm:$0xff]
  %v201 = vld [vmem:[%s0 + $0x548] sm:$0xff]
  %v202 = vld [vmem:[%s0 + $0x550] sm:$0xff]
  %v203 = vld [vmem:[%s0 + $0x558] sm:$0xff]
  %v204 = vld [vmem:[%s0 + $0x560] sm:$0xff]
  %v205 = vld [vmem:[%s0 + $0x568] sm:$0xff]
  %v206 = vld [vmem:[%s0 + $0x570] sm:$0xff]
  %v207 = vld [vmem:[%s0 + $0x578] sm:$0xff]
  %v208 = vld [vmem:[%s0 + $0x580] sm:$0xff]
  %v209 = vld [vmem:[%s0 + $0x588] sm:$0xff]
  %v210 = vld [vmem:[%s0 + $0x590] sm:$0xff]
  %v211 = vld [vmem:[%s0 + $0x598] sm:$0xff]
  %v212 = vld [vmem:[%s0 + $0x5a0] sm:$0xff]
  %v213 = vld [vmem:[%s0 + $0x5a8] sm:$0xff]
  %v214 = vld [vmem:[%s0 + $0x5b0] sm:$0xff]
  %v215 = vld [vmem:[%s0 + $0x5b8] sm:$0xff]
  %v216 = vld [vmem:[%s0 + $0x5c0] sm:$0xff]
  %v217 = vld [vmem:[%s0 + $0x5c8] sm:$0xff]
  %v218 = vld [vmem:[%s0 + $0x5d0] sm:$0xff]
  %v219 = vld [vmem:[%s0 + $0x5d8] sm:$0xff]
  %v220 = vld [vmem:[%s0 + $0x5e0] sm:$0xff]
  %v221 = vld [vmem:[%s0 + $0x5e8] sm:$0xff]
  %v222 = vld [vmem:[%s0 + $0x5f0] sm:$0xff]
  %v223 = vld [vmem:[%s0 + $0x5f8] sm:$0xff]
  %v224 = vld [vmem:[%s0 + $0x600] sm:$0xff]
  %v225 = vld [vmem:[%s0 + $0x608] sm:$0xff]
  %v226 = vld [vmem:[%s0 + $0x610] sm:$0xff]
  %v227 = vld [vmem:[%s0 + $0x618] sm:$0xff]
  %v228 = vld [vmem:[%s0 + $0x620] sm:$0xff]
  %v229 = vld [vmem:[%s0 + $0x628] sm:$0xff]
  %v230 = vld [vmem:[%s0 + $0x630] sm:$0xff]
  %v231 = vld [vmem:[%s0 + $0x638] sm:$0xff]
  %v232 = vld [vmem:[%s0 + $0x640] sm:$0xff]
  %v233 = vld [vmem:[%s0 + $0x648] sm:$0xff]
  %v234 = vld [vmem:[%s0 + $0x650] sm:$0xff]
  %v235 = vld [vmem:[%s0 + $0x658] sm:$0xff]
  %v236 = vld [vmem:[%s0 + $0x660] sm:$0xff]
  %v237 = vld [vmem:[%s0 + $0x668] sm:$0xff]
  %v238 = vld [vmem:[%s0 + $0x670] sm:$0xff]
  %v239 = vld [vmem:[%s0 + $0x678] sm:$0xff]
  %v240 = vld [vmem:[%s0 + $0x680] sm:$0xff]
  %v241 = vld [vmem:[%s0 + $0x688] sm:$0xff]
  %v242 = vld [vmem:[%s0 + $0x690] sm:$0xff]
  %v243 = vld [vmem:[%s0 + $0x698] sm:$0xff]
  %v244 = vld [vmem:[%s0 + $0x6a0] sm:$0xff]
  %v245 = vld [vmem:[%s0 + $0x6a8] sm:$0xff]
  %v246 = vld [vmem:[%s0 + $0x6b0] sm:$0xff]
  %v247 = vld [vmem:[%s0 + $0x6b8] sm:$0xff]
  %v248 = vld [vmem:[%s0 + $0x6c0] sm:$0xff]
  %v249 = vld [vmem:[%s0 + $0x6c8] sm:$0xff]
  %v250 = vld [vmem:[%s0 + $0x6d0] sm:$0xff]
  %v251 = vld [vmem:[%s0 + $0x6d8] sm:$0xff]
  %v252 = vld [vmem:[%s0 + $0x6e0] sm:$0xff]
  %v253 = vld [vmem:[%s0 + $0x6e8] sm:$0xff]
  %v254 = vld [vmem:[%s0 + $0x6f0] sm:$0xff]
  %v255 = vld [vmem:[%s0 + $0x6f8] sm:$0xff]
  %v256 = vld [vmem:[%s0 + $0x700] sm:$0xff]
  %v257 = vld [vmem:[%s0 + $0x708] sm:$0xff]
  %v258 = vld [vmem:[%s0 + $0x710] sm:$0xff]
  %v259 = vld [vmem:[%s0 + $0x718] sm:$0xff]
  %v260 = vld [vmem:[%s0 + $0x720] sm:$0xff]
  %v261 = vld [vmem:[%s0 + $0x728] sm:$0xff]
  %v262 = vld [vmem:[%s0 + $0x730] sm:$0xff]
  %v263 = vld [vmem:[%s0 + $0x738] sm:$0xff]
  %v264 = vld [vmem:[%s0 + $0x740] sm:$0xff]
  %v265 = vld [vmem:[%s0 + $0x748] sm:$0xff]
  %v266 = vld [vmem:[%s0 + $0x750] sm:$0xff]
  %v267 = vld [vmem:[%s0 + $0x758] sm:$0xff]
  %v268 = vld [vmem:[%s0 + $0x760] sm:$0xff]
  %v269 = vld [vmem:[%s0 + $0x768] sm:$0xff]
  %v270 = vld [vmem:[%s0 + $0x770] sm:$0xff]
  %v271 = vld [vmem:[%s0 + $0x778] sm:$0xff]
  %v272 = vld [vmem:[%s0 + $0x780] sm:$0xff]
  %v273 = vld [vmem:[%s0 + $0x788] sm:$0xff]
  %v274 = vld [vmem:[%s0 + $0x790] sm:$0xff]
  %v275 = vld [vmem:[%s0 + $0x798] sm:$0xff]
  %v276 = vld [vmem:[%s0 + $0x7a0] sm:$0xff]
  %v277 = vld [vmem:[%s0 + $0x7a8] sm:$0xff]
  %v278 = vld [vmem:[%s0 + $0x7b0] sm:$0xff]
  %v279 = vld [vmem:[%s0 + $0x7b8] sm:$0xff]
  %v280 = vld [vmem:[%s0 + $0x7c0] sm:$0xff]
  %v281 = vld [vmem:[%s0 + $0x7c8] sm:$0xff]
  %v282 = vld [vmem:[%s0 + $0x7d0] sm:$0xff]
  %v283 = vld [vmem:[%s0 + $0x7d8] sm:$0xff]
  %v284 = vld [vmem:[%s0 + $0x7e0] sm:$0xff]
  %v285 = vld [vmem:[%s0 + $0x7e8] sm:$0xff]
  %v286 = vld [vmem:[%s0 + $0x7f0] sm:$0xff]
  %v287 = vld [vmem:[%s0 + $0x7f8] sm:$0xff]
  %v288 = vld [vmem:[%s1] sm:$0xf]
  %v289 = vld [vmem:[%s1 + $0x4] sm:$0xf]
  %v290 = vld [vmem:[%s1 + $0x8] sm:$0xf]
  %v291 = vld [vmem:[%s1 + $0xc] sm:$0xf]
  %v292 = vld [vmem:[%s2] sm:$0x1]
  %vm293 = vcmask 31744
  %v295 = vsel %vm293, %v33, 0
  %v298 = vsel %vm293, %v34, 0
  %v301 = vsel %vm293, %v35, 0
  %v304 = vsel %vm293, %v36, 0
  %v307 = vsel %vm293, %v37, 0
  %v310 = vsel %vm293, %v38, 0
  %v313 = vsel %vm293, %v39, 0
  %v316 = vsel %vm293, %v40, 0
  %v319 = vsel %vm293, %v41, 0
  %v322 = vsel %vm293, %v42, 0
  %v325 = vsel %vm293, %v43, 0
  %v328 = vsel %vm293, %v44, 0
  %v331 = vsel %vm293, %v45, 0
  %v334 = vsel %vm293, %v46, 0
  %v337 = vsel %vm293, %v47, 0
  %v340 = vsel %vm293, %v49, 0
  %v343 = vsel %vm293, %v50, 0
  %v346 = vsel %vm293, %v51, 0
  %v349 = vsel %vm293, %v52, 0
  %v352 = vsel %vm293, %v53, 0
  %v355 = vsel %vm293, %v54, 0
  %v358 = vsel %vm293, %v55, 0
  %v361 = vsel %vm293, %v56, 0
  %v364 = vsel %vm293, %v57, 0
  %v367 = vsel %vm293, %v58, 0
  %v370 = vsel %vm293, %v59, 0
  %v373 = vsel %vm293, %v60, 0
  %v376 = vsel %vm293, %v61, 0
  %v379 = vsel %vm293, %v62, 0
  %v382 = vsel %vm293, %v63, 0
  %v385 = vsel %vm293, %v65, 0
  %v388 = vsel %vm293, %v66, 0
  %v391 = vsel %vm293, %v67, 0
  %v394 = vsel %vm293, %v68, 0
  %v397 = vsel %vm293, %v69, 0
  %v400 = vsel %vm293, %v70, 0
  %v403 = vsel %vm293, %v71, 0
  %v406 = vsel %vm293, %v72, 0
  %v409 = vsel %vm293, %v73, 0
  %v412 = vsel %vm293, %v74, 0
  %v415 = vsel %vm293, %v75, 0
  %v418 = vsel %vm293, %v76, 0
  %v421 = vsel %vm293, %v77, 0
  %v424 = vsel %vm293, %v78, 0
  %v427 = vsel %vm293, %v79, 0
  %v430 = vsel %vm293, %v81, 0
  %v433 = vsel %vm293, %v82, 0
  %v436 = vsel %vm293, %v83, 0
  %v439 = vsel %vm293, %v84, 0
  %v442 = vsel %vm293, %v85, 0
  %v445 = vsel %vm293, %v86, 0
  %v448 = vsel %vm293, %v87, 0
  %v451 = vsel %vm293, %v88, 0
  %v454 = vsel %vm293, %v89, 0
  %v457 = vsel %vm293, %v90, 0
  %v460 = vsel %vm293, %v91, 0
  %v463 = vsel %vm293, %v92, 0
  %v466 = vsel %vm293, %v93, 0
  %v469 = vsel %vm293, %v94, 0
  %v472 = vsel %vm293, %v95, 0
  %v475 = vsel %vm293, %v97, 0
  %v478 = vsel %vm293, %v98, 0
  %v481 = vsel %vm293, %v99, 0
  %v484 = vsel %vm293, %v100, 0
  %v487 = vsel %vm293, %v101, 0
  %v490 = vsel %vm293, %v102, 0
  %v493 = vsel %vm293, %v103, 0
  %v496 = vsel %vm293, %v104, 0
  %v499 = vsel %vm293, %v105, 0
  %v502 = vsel %vm293, %v106, 0
  %v505 = vsel %vm293, %v107, 0
  %v508 = vsel %vm293, %v108, 0
  %v511 = vsel %vm293, %v109, 0
  %v514 = vsel %vm293, %v110, 0
  %v517 = vsel %vm293, %v111, 0
  %v520 = vsel %vm293, %v113, 0
  %v523 = vsel %vm293, %v114, 0
  %v526 = vsel %vm293, %v115, 0
  %v529 = vsel %vm293, %v116, 0
  %v532 = vsel %vm293, %v117, 0
  %v535 = vsel %vm293, %v118, 0
  %v538 = vsel %vm293, %v119, 0
  %v541 = vsel %vm293, %v120, 0
  %v544 = vsel %vm293, %v121, 0
  %v547 = vsel %vm293, %v122, 0
  %v550 = vsel %vm293, %v123, 0
  %v553 = vsel %vm293, %v124, 0
  %v556 = vsel %vm293, %v125, 0
  %v559 = vsel %vm293, %v126, 0
  %v562 = vsel %vm293, %v127, 0
  %v565 = vsel %vm293, %v129, 0
  %v568 = vsel %vm293, %v130, 0
  %v571 = vsel %vm293, %v131, 0
  %v574 = vsel %vm293, %v132, 0
  %v577 = vsel %vm293, %v133, 0
  %v580 = vsel %vm293, %v134, 0
  %v583 = vsel %vm293, %v135, 0
  %v586 = vsel %vm293, %v136, 0
  %v589 = vsel %vm293, %v137, 0
  %v592 = vsel %vm293, %v138, 0
  %v595 = vsel %vm293, %v139, 0
  %v598 = vsel %vm293, %v140, 0
  %v601 = vsel %vm293, %v141, 0
  %v604 = vsel %vm293, %v142, 0
  %v607 = vsel %vm293, %v143, 0
  %v610 = vsel %vm293, %v145, 0
  %v613 = vsel %vm293, %v146, 0
  %v616 = vsel %vm293, %v147, 0
  %v619 = vsel %vm293, %v148, 0
  %v622 = vsel %vm293, %v149, 0
  %v625 = vsel %vm293, %v150, 0
  %v628 = vsel %vm293, %v151, 0
  %v631 = vsel %vm293, %v152, 0
  %v634 = vsel %vm293, %v153, 0
  %v637 = vsel %vm293, %v154, 0
  %v640 = vsel %vm293, %v155, 0
  %v643 = vsel %vm293, %v156, 0
  %v646 = vsel %vm293, %v157, 0
  %v649 = vsel %vm293, %v158, 0
  %v652 = vsel %vm293, %v159, 0
  %v655 = vsel %vm293, %v161, 0
  %v658 = vsel %vm293, %v162, 0
  %v661 = vsel %vm293, %v163, 0
  %v664 = vsel %vm293, %v164, 0
  %v667 = vsel %vm293, %v165, 0
  %v670 = vsel %vm293, %v166, 0
  %v673 = vsel %vm293, %v167, 0
  %v676 = vsel %vm293, %v168, 0
  %v679 = vsel %vm293, %v169, 0
  %v682 = vsel %vm293, %v170, 0
  %v685 = vsel %vm293, %v171, 0
  %v688 = vsel %vm293, %v172, 0
  %v691 = vsel %vm293, %v173, 0
  %v694 = vsel %vm293, %v174, 0
  %v697 = vsel %vm293, %v175, 0
  %v700 = vsel %vm293, %v177, 0
  %v703 = vsel %vm293, %v178, 0
  %v706 = vsel %vm293, %v179, 0
  %v709 = vsel %vm293, %v180, 0
  %v712 = vsel %vm293, %v181, 0
  %v715 = vsel %vm293, %v182, 0
  %v718 = vsel %vm293, %v183, 0
  %v721 = vsel %vm293, %v184, 0
  %v724 = vsel %vm293, %v185, 0
  %v727 = vsel %vm293, %v186, 0
  %v730 = vsel %vm293, %v187, 0
  %v733 = vsel %vm293, %v188, 0
  %v736 = vsel %vm293, %v189, 0
  %v739 = vsel %vm293, %v190, 0
  %v742 = vsel %vm293, %v191, 0
  %v745 = vsel %vm293, %v193, 0
  %v748 = vsel %vm293, %v194, 0
  %v751 = vsel %vm293, %v195, 0
  %v754 = vsel %vm293, %v196, 0
  %v757 = vsel %vm293, %v197, 0
  %v760 = vsel %vm293, %v198, 0
  %v763 = vsel %vm293, %v199, 0
  %v766 = vsel %vm293, %v200, 0
  %v769 = vsel %vm293, %v201, 0
  %v772 = vsel %vm293, %v202, 0
  %v775 = vsel %vm293, %v203, 0
  %v778 = vsel %vm293, %v204, 0
  %v781 = vsel %vm293, %v205, 0
  %v784 = vsel %vm293, %v206, 0
  %v787 = vsel %vm293, %v207, 0
  %v790 = vsel %vm293, %v209, 0
  %v793 = vsel %vm293, %v210, 0
  %v796 = vsel %vm293, %v211, 0
  %v799 = vsel %vm293, %v212, 0
  %v802 = vsel %vm293, %v213, 0
  %v805 = vsel %vm293, %v214, 0
  %v808 = vsel %vm293, %v215, 0
  %v811 = vsel %vm293, %v216, 0
  %v814 = vsel %vm293, %v217, 0
  %v817 = vsel %vm293, %v218, 0
  %v820 = vsel %vm293, %v219, 0
  %v823 = vsel %vm293, %v220, 0
  %v826 = vsel %vm293, %v221, 0
  %v829 = vsel %vm293, %v222, 0
  %v832 = vsel %vm293, %v223, 0
  %v835 = vsel %vm293, %v225, 0
  %v838 = vsel %vm293, %v226, 0
  %v841 = vsel %vm293, %v227, 0
  %v844 = vsel %vm293, %v228, 0
  %v847 = vsel %vm293, %v229, 0
  %v850 = vsel %vm293, %v230, 0
  %v853 = vsel %vm293, %v231, 0
  %v856 = vsel %vm293, %v232, 0
  %v859 = vsel %vm293, %v233, 0
  %v862 = vsel %vm293, %v234, 0
  %v865 = vsel %vm293, %v235, 0
  %v868 = vsel %vm293, %v236, 0
  %v871 = vsel %vm293, %v237, 0
  %v874 = vsel %vm293, %v238, 0
  %v877 = vsel %vm293, %v239, 0
  %v880 = vsel %vm293, %v241, 0
  %v883 = vsel %vm293, %v242, 0
  %v886 = vsel %vm293, %v243, 0
  %v889 = vsel %vm293, %v244, 0
  %v892 = vsel %vm293, %v245, 0
  %v895 = vsel %vm293, %v246, 0
  %v898 = vsel %vm293, %v247, 0
  %v901 = vsel %vm293, %v248, 0
  %v904 = vsel %vm293, %v249, 0
  %v907 = vsel %vm293, %v250, 0
  %v910 = vsel %vm293, %v251, 0
  %v913 = vsel %vm293, %v252, 0
  %v916 = vsel %vm293, %v253, 0
  %v919 = vsel %vm293, %v254, 0
  %v922 = vsel %vm293, %v255, 0
  %v925 = vsel %vm293, %v257, 0
  %v928 = vsel %vm293, %v258, 0
  %v931 = vsel %vm293, %v259, 0
  %v934 = vsel %vm293, %v260, 0
  %v937 = vsel %vm293, %v261, 0
  %v940 = vsel %vm293, %v262, 0
  %v943 = vsel %vm293, %v263, 0
  %v946 = vsel %vm293, %v264, 0
  %v949 = vsel %vm293, %v265, 0
  %v952 = vsel %vm293, %v266, 0
  %v955 = vsel %vm293, %v267, 0
  %v958 = vsel %vm293, %v268, 0
  %v961 = vsel %vm293, %v269, 0
  %v964 = vsel %vm293, %v270, 0
  %v967 = vsel %vm293, %v271, 0
  %vm969 = vcmask 1043456
  %v971 = vsel %vm969, %v289, 0
  %973 = vmatpush.msra.mxu0 0.0
  %974 = vmatpush.msra.mxu0 0.0
  %975 = vmatpush.msra.mxu0 0.0
  %976 = vmatpush.msra.mxu0 0.0
  %977 = vmatpush.msra.mxu0 0.0
  %978 = vmatpush.msra.mxu0 0.0
  %979 = vmatpush.msra.mxu0 0.0
  %980 = vmatpush.msra.mxu0 0.0
  %981 = vmatpush.msra.mxu0 0.0
  %982 = vmatpush.msra.mxu0 0.0
  %983 = vmatpush.msra.mxu0 0.0
  %984 = vmatpush.msra.mxu0 0.0
  %985 = vmatpush.msra.mxu0 0.0
  %986 = vmatpush.msra.mxu0 0.0
  %987 = vmatpush.msra.mxu0 0.0
  %988 = vmatpush.msra.mxu0 %v971
  %989 = vmatmul.f32.gmra.mxu0 %v295
  %v990 = vpop.f32.mrf.mxu0
  %v991 = vadd.f32 0.0, %v990
  %992 = vmatmul.f32.gmra.mxu0 %v298
  %v993 = vpop.f32.mrf.mxu0
  %v994 = vadd.f32 0.0, %v993
  %995 = vmatmul.f32.gmra.mxu0 %v301
  %v996 = vpop.f32.mrf.mxu0
  %v997 = vadd.f32 0.0, %v996
  %998 = vmatmul.f32.gmra.mxu0 %v304
  %v999 = vpop.f32.mrf.mxu0
  %v1000 = vadd.f32 0.0, %v999
  %1001 = vmatmul.f32.gmra.mxu0 %v307
  %v1002 = vpop.f32.mrf.mxu0
  %v1003 = vadd.f32 0.0, %v1002
  %1004 = vmatmul.f32.gmra.mxu0 %v310
  %v1005 = vpop.f32.mrf.mxu0
  %v1006 = vadd.f32 0.0, %v1005
  %1007 = vmatmul.f32.gmra.mxu0 %v313
  %v1008 = vpop.f32.mrf.mxu0
  %v1009 = vadd.f32 0.0, %v1008
  %1010 = vmatmul.f32.gmra.mxu0 %v316
  %v1011 = vpop.f32.mrf.mxu0
  %v1012 = vadd.f32 0.0, %v1011
  %1013 = vmatmul.f32.gmra.mxu0 %v319
  %v1014 = vpop.f32.mrf.mxu0
  %v1015 = vadd.f32 0.0, %v1014
  %1016 = vmatmul.f32.gmra.mxu0 %v322
  %v1017 = vpop.f32.mrf.mxu0
  %v1018 = vadd.f32 0.0, %v1017
  %1019 = vmatmul.f32.gmra.mxu0 %v325
  %v1020 = vpop.f32.mrf.mxu0
  %v1021 = vadd.f32 0.0, %v1020
  %1022 = vmatmul.f32.gmra.mxu0 %v328
  %v1023 = vpop.f32.mrf.mxu0
  %v1024 = vadd.f32 0.0, %v1023
  %1025 = vmatmul.f32.gmra.mxu0 %v331
  %v1026 = vpop.f32.mrf.mxu0
  %v1027 = vadd.f32 0.0, %v1026
  %1028 = vmatmul.f32.gmra.mxu0 %v334
  %v1029 = vpop.f32.mrf.mxu0
  %v1030 = vadd.f32 0.0, %v1029
  %1031 = vmatmul.f32.gmra.mxu0 %v337
  %v1032 = vpop.f32.mrf.mxu0
  %1033 = vmatmul.f32.gmra.mxu0 %v340
  %v1034 = vpop.f32.mrf.mxu0
  %v1035 = vadd.f32 0.0, %v1034
  %1036 = vmatmul.f32.gmra.mxu0 %v343
  %v1037 = vpop.f32.mrf.mxu0
  %v1038 = vadd.f32 0.0, %v1037
  %1039 = vmatmul.f32.gmra.mxu0 %v346
  %v1040 = vpop.f32.mrf.mxu0
  %v1041 = vadd.f32 0.0, %v1040
  %1042 = vmatmul.f32.gmra.mxu0 %v349
  %v1043 = vpop.f32.mrf.mxu0
  %v1044 = vadd.f32 0.0, %v1043
  %1045 = vmatmul.f32.gmra.mxu0 %v352
  %v1046 = vpop.f32.mrf.mxu0
  %v1047 = vadd.f32 0.0, %v1046
  %1048 = vmatmul.f32.gmra.mxu0 %v355
  %v1049 = vpop.f32.mrf.mxu0
  %v1050 = vadd.f32 0.0, %v1049
  %1051 = vmatmul.f32.gmra.mxu0 %v358
  %v1052 = vpop.f32.mrf.mxu0
  %v1053 = vadd.f32 0.0, %v1052
  %1054 = vmatmul.f32.gmra.mxu0 %v361
  %v1055 = vpop.f32.mrf.mxu0
  %v1056 = vadd.f32 0.0, %v1055
  %1057 = vmatmul.f32.gmra.mxu0 %v364
  %v1058 = vpop.f32.mrf.mxu0
  %v1059 = vadd.f32 0.0, %v1058
  %1060 = vmatmul.f32.gmra.mxu0 %v367
  %v1061 = vpop.f32.mrf.mxu0
  %v1062 = vadd.f32 0.0, %v1061
  %1063 = vmatmul.f32.gmra.mxu0 %v370
  %v1064 = vpop.f32.mrf.mxu0
  %v1065 = vadd.f32 0.0, %v1064
  %1066 = vmatmul.f32.gmra.mxu0 %v373
  %v1067 = vpop.f32.mrf.mxu0
  %v1068 = vadd.f32 0.0, %v1067
  %1069 = vmatmul.f32.gmra.mxu0 %v376
  %v1070 = vpop.f32.mrf.mxu0
  %v1071 = vadd.f32 0.0, %v1070
  %1072 = vmatmul.f32.gmra.mxu0 %v379
  %v1073 = vpop.f32.mrf.mxu0
  %v1074 = vadd.f32 0.0, %v1073
  %1075 = vmatmul.f32.gmra.mxu0 %v382
  %v1076 = vpop.f32.mrf.mxu0
  %1077 = vmatmul.f32.gmra.mxu0 %v385
  %v1078 = vpop.f32.mrf.mxu0
  %v1079 = vadd.f32 0.0, %v1078
  %1080 = vmatmul.f32.gmra.mxu0 %v388
  %v1081 = vpop.f32.mrf.mxu0
  %v1082 = vadd.f32 0.0, %v1081
  %1083 = vmatmul.f32.gmra.mxu0 %v391
  %v1084 = vpop.f32.mrf.mxu0
  %v1085 = vadd.f32 0.0, %v1084
  %1086 = vmatmul.f32.gmra.mxu0 %v394
  %v1087 = vpop.f32.mrf.mxu0
  %v1088 = vadd.f32 0.0, %v1087
  %1089 = vmatmul.f32.gmra.mxu0 %v397
  %v1090 = vpop.f32.mrf.mxu0
  %v1091 = vadd.f32 0.0, %v1090
  %1092 = vmatmul.f32.gmra.mxu0 %v400
  %v1093 = vpop.f32.mrf.mxu0
  %v1094 = vadd.f32 0.0, %v1093
  %1095 = vmatmul.f32.gmra.mxu0 %v403
  %v1096 = vpop.f32.mrf.mxu0
  %v1097 = vadd.f32 0.0, %v1096
  %1098 = vmatmul.f32.gmra.mxu0 %v406
  %v1099 = vpop.f32.mrf.mxu0
  %v1100 = vadd.f32 0.0, %v1099
  %1101 = vmatmul.f32.gmra.mxu0 %v409
  %v1102 = vpop.f32.mrf.mxu0
  %v1103 = vadd.f32 0.0, %v1102
  %1104 = vmatmul.f32.gmra.mxu0 %v412
  %v1105 = vpop.f32.mrf.mxu0
  %v1106 = vadd.f32 0.0, %v1105
  %1107 = vmatmul.f32.gmra.mxu0 %v415
  %v1108 = vpop.f32.mrf.mxu0
  %v1109 = vadd.f32 0.0, %v1108
  %1110 = vmatmul.f32.gmra.mxu0 %v418
  %v1111 = vpop.f32.mrf.mxu0
  %v1112 = vadd.f32 0.0, %v1111
  %1113 = vmatmul.f32.gmra.mxu0 %v421
  %v1114 = vpop.f32.mrf.mxu0
  %v1115 = vadd.f32 0.0, %v1114
  %1116 = vmatmul.f32.gmra.mxu0 %v424
  %v1117 = vpop.f32.mrf.mxu0
  %v1118 = vadd.f32 0.0, %v1117
  %1119 = vmatmul.f32.gmra.mxu0 %v427
  %v1120 = vpop.f32.mrf.mxu0
  %1121 = vmatmul.f32.gmra.mxu0 %v430
  %v1122 = vpop.f32.mrf.mxu0
  %v1123 = vadd.f32 0.0, %v1122
  %1124 = vmatmul.f32.gmra.mxu0 %v433
  %v1125 = vpop.f32.mrf.mxu0
  %v1126 = vadd.f32 0.0, %v1125
  %1127 = vmatmul.f32.gmra.mxu0 %v436
  %v1128 = vpop.f32.mrf.mxu0
  %v1129 = vadd.f32 0.0, %v1128
  %1130 = vmatmul.f32.gmra.mxu0 %v439
  %v1131 = vpop.f32.mrf.mxu0
  %v1132 = vadd.f32 0.0, %v1131
  %1133 = vmatmul.f32.gmra.mxu0 %v442
  %v1134 = vpop.f32.mrf.mxu0
  %v1135 = vadd.f32 0.0, %v1134
  %1136 = vmatmul.f32.gmra.mxu0 %v445
  %v1137 = vpop.f32.mrf.mxu0
  %v1138 = vadd.f32 0.0, %v1137
  %1139 = vmatmul.f32.gmra.mxu0 %v448
  %v1140 = vpop.f32.mrf.mxu0
  %v1141 = vadd.f32 0.0, %v1140
  %1142 = vmatmul.f32.gmra.mxu0 %v451
  %v1143 = vpop.f32.mrf.mxu0
  %v1144 = vadd.f32 0.0, %v1143
  %1145 = vmatmul.f32.gmra.mxu0 %v454
  %v1146 = vpop.f32.mrf.mxu0
  %v1147 = vadd.f32 0.0, %v1146
  %1148 = vmatmul.f32.gmra.mxu0 %v457
  %v1149 = vpop.f32.mrf.mxu0
  %v1150 = vadd.f32 0.0, %v1149
  %1151 = vmatmul.f32.gmra.mxu0 %v460
  %v1152 = vpop.f32.mrf.mxu0
  %v1153 = vadd.f32 0.0, %v1152
  %1154 = vmatmul.f32.gmra.mxu0 %v463
  %v1155 = vpop.f32.mrf.mxu0
  %v1156 = vadd.f32 0.0, %v1155
  %1157 = vmatmul.f32.gmra.mxu0 %v466
  %v1158 = vpop.f32.mrf.mxu0
  %v1159 = vadd.f32 0.0, %v1158
  %1160 = vmatmul.f32.gmra.mxu0 %v469
  %v1161 = vpop.f32.mrf.mxu0
  %v1162 = vadd.f32 0.0, %v1161
  %1163 = vmatmul.f32.gmra.mxu0 %v472
  %v1164 = vpop.f32.mrf.mxu0
  %1165 = vmatmul.f32.gmra.mxu0 %v475
  %v1166 = vpop.f32.mrf.mxu0
  %v1167 = vadd.f32 0.0, %v1166
  %1168 = vmatmul.f32.gmra.mxu0 %v478
  %v1169 = vpop.f32.mrf.mxu0
  %v1170 = vadd.f32 0.0, %v1169
  %1171 = vmatmul.f32.gmra.mxu0 %v481
  %v1172 = vpop.f32.mrf.mxu0
  %v1173 = vadd.f32 0.0, %v1172
  %1174 = vmatmul.f32.gmra.mxu0 %v484
  %v1175 = vpop.f32.mrf.mxu0
  %v1176 = vadd.f32 0.0, %v1175
  %1177 = vmatmul.f32.gmra.mxu0 %v487
  %v1178 = vpop.f32.mrf.mxu0
  %v1179 = vadd.f32 0.0, %v1178
  %1180 = vmatmul.f32.gmra.mxu0 %v490
  %v1181 = vpop.f32.mrf.mxu0
  %v1182 = vadd.f32 0.0, %v1181
  %1183 = vmatmul.f32.gmra.mxu0 %v493
  %v1184 = vpop.f32.mrf.mxu0
  %v1185 = vadd.f32 0.0, %v1184
  %1186 = vmatmul.f32.gmra.mxu0 %v496
  %v1187 = vpop.f32.mrf.mxu0
  %v1188 = vadd.f32 0.0, %v1187
  %1189 = vmatmul.f32.gmra.mxu0 %v499
  %v1190 = vpop.f32.mrf.mxu0
  %v1191 = vadd.f32 0.0, %v1190
  %1192 = vmatmul.f32.gmra.mxu0 %v502
  %v1193 = vpop.f32.mrf.mxu0
  %v1194 = vadd.f32 0.0, %v1193
  %1195 = vmatmul.f32.gmra.mxu0 %v505
  %v1196 = vpop.f32.mrf.mxu0
  %v1197 = vadd.f32 0.0, %v1196
  %1198 = vmatmul.f32.gmra.mxu0 %v508
  %v1199 = vpop.f32.mrf.mxu0
  %v1200 = vadd.f32 0.0, %v1199
  %1201 = vmatmul.f32.gmra.mxu0 %v511
  %v1202 = vpop.f32.mrf.mxu0
  %v1203 = vadd.f32 0.0, %v1202
  %1204 = vmatmul.f32.gmra.mxu0 %v514
  %v1205 = vpop.f32.mrf.mxu0
  %v1206 = vadd.f32 0.0, %v1205
  %1207 = vmatmul.f32.gmra.mxu0 %v517
  %v1208 = vpop.f32.mrf.mxu0
  %1209 = vmatmul.f32.gmra.mxu0 %v520
  %v1210 = vpop.f32.mrf.mxu0
  %v1211 = vadd.f32 0.0, %v1210
  %1212 = vmatmul.f32.gmra.mxu0 %v523
  %v1213 = vpop.f32.mrf.mxu0
  %v1214 = vadd.f32 0.0, %v1213
  %1215 = vmatmul.f32.gmra.mxu0 %v526
  %v1216 = vpop.f32.mrf.mxu0
  %v1217 = vadd.f32 0.0, %v1216
  %1218 = vmatmul.f32.gmra.mxu0 %v529
  %v1219 = vpop.f32.mrf.mxu0
  %v1220 = vadd.f32 0.0, %v1219
  %1221 = vmatmul.f32.gmra.mxu0 %v532
  %v1222 = vpop.f32.mrf.mxu0
  %v1223 = vadd.f32 0.0, %v1222
  %1224 = vmatmul.f32.gmra.mxu0 %v535
  %v1225 = vpop.f32.mrf.mxu0
  %v1226 = vadd.f32 0.0, %v1225
  %1227 = vmatmul.f32.gmra.mxu0 %v538
  %v1228 = vpop.f32.mrf.mxu0
  %v1229 = vadd.f32 0.0, %v1228
  %1230 = vmatmul.f32.gmra.mxu0 %v541
  %v1231 = vpop.f32.mrf.mxu0
  %v1232 = vadd.f32 0.0, %v1231
  %1233 = vmatmul.f32.gmra.mxu0 %v544
  %v1234 = vpop.f32.mrf.mxu0
  %v1235 = vadd.f32 0.0, %v1234
  %1236 = vmatmul.f32.gmra.mxu0 %v547
  %v1237 = vpop.f32.mrf.mxu0
  %v1238 = vadd.f32 0.0, %v1237
  %1239 = vmatmul.f32.gmra.mxu0 %v550
  %v1240 = vpop.f32.mrf.mxu0
  %v1241 = vadd.f32 0.0, %v1240
  %1242 = vmatmul.f32.gmra.mxu0 %v553
  %v1243 = vpop.f32.mrf.mxu0
  %v1244 = vadd.f32 0.0, %v1243
  %1245 = vmatmul.f32.gmra.mxu0 %v556
  %v1246 = vpop.f32.mrf.mxu0
  %v1247 = vadd.f32 0.0, %v1246
  %1248 = vmatmul.f32.gmra.mxu0 %v559
  %v1249 = vpop.f32.mrf.mxu0
  %v1250 = vadd.f32 0.0, %v1249
  %1251 = vmatmul.f32.gmra.mxu0 %v562
  %v1252 = vpop.f32.mrf.mxu0
  %1253 = vmatmul.f32.gmra.mxu0 %v565
  %v1254 = vpop.f32.mrf.mxu0
  %v1255 = vadd.f32 0.0, %v1254
  %1256 = vmatmul.f32.gmra.mxu0 %v568
  %v1257 = vpop.f32.mrf.mxu0
  %v1258 = vadd.f32 0.0, %v1257
  %1259 = vmatmul.f32.gmra.mxu0 %v571
  %v1260 = vpop.f32.mrf.mxu0
  %v1261 = vadd.f32 0.0, %v1260
  %1262 = vmatmul.f32.gmra.mxu0 %v574
  %v1263 = vpop.f32.mrf.mxu0
  %v1264 = vadd.f32 0.0, %v1263
  %1265 = vmatmul.f32.gmra.mxu0 %v577
  %v1266 = vpop.f32.mrf.mxu0
  %v1267 = vadd.f32 0.0, %v1266
  %1268 = vmatmul.f32.gmra.mxu0 %v580
  %v1269 = vpop.f32.mrf.mxu0
  %v1270 = vadd.f32 0.0, %v1269
  %1271 = vmatmul.f32.gmra.mxu0 %v583
  %v1272 = vpop.f32.mrf.mxu0
  %v1273 = vadd.f32 0.0, %v1272
  %1274 = vmatmul.f32.gmra.mxu0 %v586
  %v1275 = vpop.f32.mrf.mxu0
  %v1276 = vadd.f32 0.0, %v1275
  %1277 = vmatmul.f32.gmra.mxu0 %v589
  %v1278 = vpop.f32.mrf.mxu0
  %v1279 = vadd.f32 0.0, %v1278
  %1280 = vmatmul.f32.gmra.mxu0 %v592
  %v1281 = vpop.f32.mrf.mxu0
  %v1282 = vadd.f32 0.0, %v1281
  %1283 = vmatmul.f32.gmra.mxu0 %v595
  %v1284 = vpop.f32.mrf.mxu0
  %v1285 = vadd.f32 0.0, %v1284
  %1286 = vmatmul.f32.gmra.mxu0 %v598
  %v1287 = vpop.f32.mrf.mxu0
  %v1288 = vadd.f32 0.0, %v1287
  %1289 = vmatmul.f32.gmra.mxu0 %v601
  %v1290 = vpop.f32.mrf.mxu0
  %v1291 = vadd.f32 0.0, %v1290
  %1292 = vmatmul.f32.gmra.mxu0 %v604
  %v1293 = vpop.f32.mrf.mxu0
  %v1294 = vadd.f32 0.0, %v1293
  %1295 = vmatmul.f32.gmra.mxu0 %v607
  %v1296 = vpop.f32.mrf.mxu0
  %1297 = vmatmul.f32.gmra.mxu0 %v610
  %v1298 = vpop.f32.mrf.mxu0
  %v1299 = vadd.f32 0.0, %v1298
  %1300 = vmatmul.f32.gmra.mxu0 %v613
  %v1301 = vpop.f32.mrf.mxu0
  %v1302 = vadd.f32 0.0, %v1301
  %1303 = vmatmul.f32.gmra.mxu0 %v616
  %v1304 = vpop.f32.mrf.mxu0
  %v1305 = vadd.f32 0.0, %v1304
  %1306 = vmatmul.f32.gmra.mxu0 %v619
  %v1307 = vpop.f32.mrf.mxu0
  %v1308 = vadd.f32 0.0, %v1307
  %1309 = vmatmul.f32.gmra.mxu0 %v622
  %v1310 = vpop.f32.mrf.mxu0
  %v1311 = vadd.f32 0.0, %v1310
  %1312 = vmatmul.f32.gmra.mxu0 %v625
  %v1313 = vpop.f32.mrf.mxu0
  %v1314 = vadd.f32 0.0, %v1313
  %1315 = vmatmul.f32.gmra.mxu0 %v628
  %v1316 = vpop.f32.mrf.mxu0
  %v1317 = vadd.f32 0.0, %v1316
  %1318 = vmatmul.f32.gmra.mxu0 %v631
  %v1319 = vpop.f32.mrf.mxu0
  %v1320 = vadd.f32 0.0, %v1319
  %1321 = vmatmul.f32.gmra.mxu0 %v634
  %v1322 = vpop.f32.mrf.mxu0
  %v1323 = vadd.f32 0.0, %v1322
  %1324 = vmatmul.f32.gmra.mxu0 %v637
  %v1325 = vpop.f32.mrf.mxu0
  %v1326 = vadd.f32 0.0, %v1325
  %1327 = vmatmul.f32.gmra.mxu0 %v640
  %v1328 = vpop.f32.mrf.mxu0
  %v1329 = vadd.f32 0.0, %v1328
  %1330 = vmatmul.f32.gmra.mxu0 %v643
  %v1331 = vpop.f32.mrf.mxu0
  %v1332 = vadd.f32 0.0, %v1331
  %1333 = vmatmul.f32.gmra.mxu0 %v646
  %v1334 = vpop.f32.mrf.mxu0
  %v1335 = vadd.f32 0.0, %v1334
  %1336 = vmatmul.f32.gmra.mxu0 %v649
  %v1337 = vpop.f32.mrf.mxu0
  %v1338 = vadd.f32 0.0, %v1337
  %1339 = vmatmul.f32.gmra.mxu0 %v652
  %v1340 = vpop.f32.mrf.mxu0
  %1341 = vmatmul.f32.gmra.mxu0 %v655
  %v1342 = vpop.f32.mrf.mxu0
  %v1343 = vadd.f32 0.0, %v1342
  %1344 = vmatmul.f32.gmra.mxu0 %v658
  %v1345 = vpop.f32.mrf.mxu0
  %v1346 = vadd.f32 0.0, %v1345
  %1347 = vmatmul.f32.gmra.mxu0 %v661
  %v1348 = vpop.f32.mrf.mxu0
  %v1349 = vadd.f32 0.0, %v1348
  %1350 = vmatmul.f32.gmra.mxu0 %v664
  %v1351 = vpop.f32.mrf.mxu0
  %v1352 = vadd.f32 0.0, %v1351
  %1353 = vmatmul.f32.gmra.mxu0 %v667
  %v1354 = vpop.f32.mrf.mxu0
  %v1355 = vadd.f32 0.0, %v1354
  %1356 = vmatmul.f32.gmra.mxu0 %v670
  %v1357 = vpop.f32.mrf.mxu0
  %v1358 = vadd.f32 0.0, %v1357
  %1359 = vmatmul.f32.gmra.mxu0 %v673
  %v1360 = vpop.f32.mrf.mxu0
  %v1361 = vadd.f32 0.0, %v1360
  %1362 = vmatmul.f32.gmra.mxu0 %v676
  %v1363 = vpop.f32.mrf.mxu0
  %v1364 = vadd.f32 0.0, %v1363
  %1365 = vmatmul.f32.gmra.mxu0 %v679
  %v1366 = vpop.f32.mrf.mxu0
  %v1367 = vadd.f32 0.0, %v1366
  %1368 = vmatmul.f32.gmra.mxu0 %v682
  %v1369 = vpop.f32.mrf.mxu0
  %v1370 = vadd.f32 0.0, %v1369
  %1371 = vmatmul.f32.gmra.mxu0 %v685
  %v1372 = vpop.f32.mrf.mxu0
  %v1373 = vadd.f32 0.0, %v1372
  %1374 = vmatmul.f32.gmra.mxu0 %v688
  %v1375 = vpop.f32.mrf.mxu0
  %v1376 = vadd.f32 0.0, %v1375
  %1377 = vmatmul.f32.gmra.mxu0 %v691
  %v1378 = vpop.f32.mrf.mxu0
  %v1379 = vadd.f32 0.0, %v1378
  %1380 = vmatmul.f32.gmra.mxu0 %v694
  %v1381 = vpop.f32.mrf.mxu0
  %v1382 = vadd.f32 0.0, %v1381
  %1383 = vmatmul.f32.gmra.mxu0 %v697
  %v1384 = vpop.f32.mrf.mxu0
  %1385 = vmatmul.f32.gmra.mxu0 %v700
  %v1386 = vpop.f32.mrf.mxu0
  %v1387 = vadd.f32 0.0, %v1386
  %1388 = vmatmul.f32.gmra.mxu0 %v703
  %v1389 = vpop.f32.mrf.mxu0
  %v1390 = vadd.f32 0.0, %v1389
  %1391 = vmatmul.f32.gmra.mxu0 %v706
  %v1392 = vpop.f32.mrf.mxu0
  %v1393 = vadd.f32 0.0, %v1392
  %1394 = vmatmul.f32.gmra.mxu0 %v709
  %v1395 = vpop.f32.mrf.mxu0
  %v1396 = vadd.f32 0.0, %v1395
  %1397 = vmatmul.f32.gmra.mxu0 %v712
  %v1398 = vpop.f32.mrf.mxu0
  %v1399 = vadd.f32 0.0, %v1398
  %1400 = vmatmul.f32.gmra.mxu0 %v715
  %v1401 = vpop.f32.mrf.mxu0
  %v1402 = vadd.f32 0.0, %v1401
  %1403 = vmatmul.f32.gmra.mxu0 %v718
  %v1404 = vpop.f32.mrf.mxu0
  %v1405 = vadd.f32 0.0, %v1404
  %1406 = vmatmul.f32.gmra.mxu0 %v721
  %v1407 = vpop.f32.mrf.mxu0
  %v1408 = vadd.f32 0.0, %v1407
  %1409 = vmatmul.f32.gmra.mxu0 %v724
  %v1410 = vpop.f32.mrf.mxu0
  %v1411 = vadd.f32 0.0, %v1410
  %1412 = vmatmul.f32.gmra.mxu0 %v727
  %v1413 = vpop.f32.mrf.mxu0
  %v1414 = vadd.f32 0.0, %v1413
  %1415 = vmatmul.f32.gmra.mxu0 %v730
  %v1416 = vpop.f32.mrf.mxu0
  %v1417 = vadd.f32 0.0, %v1416
  %1418 = vmatmul.f32.gmra.mxu0 %v733
  %v1419 = vpop.f32.mrf.mxu0
  %v1420 = vadd.f32 0.0, %v1419
  %1421 = vmatmul.f32.gmra.mxu0 %v736
  %v1422 = vpop.f32.mrf.mxu0
  %v1423 = vadd.f32 0.0, %v1422
  %1424 = vmatmul.f32.gmra.mxu0 %v739
  %v1425 = vpop.f32.mrf.mxu0
  %v1426 = vadd.f32 0.0, %v1425
  %1427 = vmatmul.f32.gmra.mxu0 %v742
  %v1428 = vpop.f32.mrf.mxu0
  %1429 = vmatmul.f32.gmra.mxu0 %v745
  %v1430 = vpop.f32.mrf.mxu0
  %v1431 = vadd.f32 0.0, %v1430
  %1432 = vmatmul.f32.gmra.mxu0 %v748
  %v1433 = vpop.f32.mrf.mxu0
  %v1434 = vadd.f32 0.0, %v1433
  %1435 = vmatmul.f32.gmra.mxu0 %v751
  %v1436 = vpop.f32.mrf.mxu0
  %v1437 = vadd.f32 0.0, %v1436
  %1438 = vmatmul.f32.gmra.mxu0 %v754
  %v1439 = vpop.f32.mrf.mxu0
  %v1440 = vadd.f32 0.0, %v1439
  %1441 = vmatmul.f32.gmra.mxu0 %v757
  %v1442 = vpop.f32.mrf.mxu0
  %v1443 = vadd.f32 0.0, %v1442
  %1444 = vmatmul.f32.gmra.mxu0 %v760
  %v1445 = vpop.f32.mrf.mxu0
  %v1446 = vadd.f32 0.0, %v1445
  %1447 = vmatmul.f32.gmra.mxu0 %v763
  %v1448 = vpop.f32.mrf.mxu0
  %v1449 = vadd.f32 0.0, %v1448
  %1450 = vmatmul.f32.gmra.mxu0 %v766
  %v1451 = vpop.f32.mrf.mxu0
  %v1452 = vadd.f32 0.0, %v1451
  %1453 = vmatmul.f32.gmra.mxu0 %v769
  %v1454 = vpop.f32.mrf.mxu0
  %v1455 = vadd.f32 0.0, %v1454
  %1456 = vmatmul.f32.gmra.mxu0 %v772
  %v1457 = vpop.f32.mrf.mxu0
  %v1458 = vadd.f32 0.0, %v1457
  %1459 = vmatmul.f32.gmra.mxu0 %v775
  %v1460 = vpop.f32.mrf.mxu0
  %v1461 = vadd.f32 0.0, %v1460
  %1462 = vmatmul.f32.gmra.mxu0 %v778
  %v1463 = vpop.f32.mrf.mxu0
  %v1464 = vadd.f32 0.0, %v1463
  %1465 = vmatmul.f32.gmra.mxu0 %v781
  %v1466 = vpop.f32.mrf.mxu0
  %v1467 = vadd.f32 0.0, %v1466
  %1468 = vmatmul.f32.gmra.mxu0 %v784
  %v1469 = vpop.f32.mrf.mxu0
  %v1470 = vadd.f32 0.0, %v1469
  %1471 = vmatmul.f32.gmra.mxu0 %v787
  %v1472 = vpop.f32.mrf.mxu0
  %1473 = vmatmul.f32.gmra.mxu0 %v790
  %v1474 = vpop.f32.mrf.mxu0
  %v1475 = vadd.f32 0.0, %v1474
  %1476 = vmatmul.f32.gmra.mxu0 %v793
  %v1477 = vpop.f32.mrf.mxu0
  %v1478 = vadd.f32 0.0, %v1477
  %1479 = vmatmul.f32.gmra.mxu0 %v796
  %v1480 = vpop.f32.mrf.mxu0
  %v1481 = vadd.f32 0.0, %v1480
  %1482 = vmatmul.f32.gmra.mxu0 %v799
  %v1483 = vpop.f32.mrf.mxu0
  %v1484 = vadd.f32 0.0, %v1483
  %1485 = vmatmul.f32.gmra.mxu0 %v802
  %v1486 = vpop.f32.mrf.mxu0
  %v1487 = vadd.f32 0.0, %v1486
  %1488 = vmatmul.f32.gmra.mxu0 %v805
  %v1489 = vpop.f32.mrf.mxu0
  %v1490 = vadd.f32 0.0, %v1489
  %1491 = vmatmul.f32.gmra.mxu0 %v808
  %v1492 = vpop.f32.mrf.mxu0
  %v1493 = vadd.f32 0.0, %v1492
  %1494 = vmatmul.f32.gmra.mxu0 %v811
  %v1495 = vpop.f32.mrf.mxu0
  %v1496 = vadd.f32 0.0, %v1495
  %1497 = vmatmul.f32.gmra.mxu0 %v814
  %v1498 = vpop.f32.mrf.mxu0
  %v1499 = vadd.f32 0.0, %v1498
  %1500 = vmatmul.f32.gmra.mxu0 %v817
  %v1501 = vpop.f32.mrf.mxu0
  %v1502 = vadd.f32 0.0, %v1501
  %1503 = vmatmul.f32.gmra.mxu0 %v820
  %v1504 = vpop.f32.mrf.mxu0
  %v1505 = vadd.f32 0.0, %v1504
  %1506 = vmatmul.f32.gmra.mxu0 %v823
  %v1507 = vpop.f32.mrf.mxu0
  %v1508 = vadd.f32 0.0, %v1507
  %1509 = vmatmul.f32.gmra.mxu0 %v826
  %v1510 = vpop.f32.mrf.mxu0
  %v1511 = vadd.f32 0.0, %v1510
  %1512 = vmatmul.f32.gmra.mxu0 %v829
  %v1513 = vpop.f32.mrf.mxu0
  %v1514 = vadd.f32 0.0, %v1513
  %1515 = vmatmul.f32.gmra.mxu0 %v832
  %v1516 = vpop.f32.mrf.mxu0
  %1517 = vmatmul.f32.gmra.mxu0 %v835
  %v1518 = vpop.f32.mrf.mxu0
  %v1519 = vadd.f32 0.0, %v1518
  %1520 = vmatmul.f32.gmra.mxu0 %v838
  %v1521 = vpop.f32.mrf.mxu0
  %v1522 = vadd.f32 0.0, %v1521
  %1523 = vmatmul.f32.gmra.mxu0 %v841
  %v1524 = vpop.f32.mrf.mxu0
  %v1525 = vadd.f32 0.0, %v1524
  %1526 = vmatmul.f32.gmra.mxu0 %v844
  %v1527 = vpop.f32.mrf.mxu0
  %v1528 = vadd.f32 0.0, %v1527
  %1529 = vmatmul.f32.gmra.mxu0 %v847
  %v1530 = vpop.f32.mrf.mxu0
  %v1531 = vadd.f32 0.0, %v1530
  %1532 = vmatmul.f32.gmra.mxu0 %v850
  %v1533 = vpop.f32.mrf.mxu0
  %v1534 = vadd.f32 0.0, %v1533
  %1535 = vmatmul.f32.gmra.mxu0 %v853
  %v1536 = vpop.f32.mrf.mxu0
  %v1537 = vadd.f32 0.0, %v1536
  %1538 = vmatmul.f32.gmra.mxu0 %v856
  %v1539 = vpop.f32.mrf.mxu0
  %v1540 = vadd.f32 0.0, %v1539
  %1541 = vmatmul.f32.gmra.mxu0 %v859
  %v1542 = vpop.f32.mrf.mxu0
  %v1543 = vadd.f32 0.0, %v1542
  %1544 = vmatmul.f32.gmra.mxu0 %v862
  %v1545 = vpop.f32.mrf.mxu0
  %v1546 = vadd.f32 0.0, %v1545
  %1547 = vmatmul.f32.gmra.mxu0 %v865
  %v1548 = vpop.f32.mrf.mxu0
  %v1549 = vadd.f32 0.0, %v1548
  %1550 = vmatmul.f32.gmra.mxu0 %v868
  %v1551 = vpop.f32.mrf.mxu0
  %v1552 = vadd.f32 0.0, %v1551
  %1553 = vmatmul.f32.gmra.mxu0 %v871
  %v1554 = vpop.f32.mrf.mxu0
  %v1555 = vadd.f32 0.0, %v1554
  %1556 = vmatmul.f32.gmra.mxu0 %v874
  %v1557 = vpop.f32.mrf.mxu0
  %v1558 = vadd.f32 0.0, %v1557
  %1559 = vmatmul.f32.gmra.mxu0 %v877
  %v1560 = vpop.f32.mrf.mxu0
  %1561 = vmatmul.f32.gmra.mxu0 %v880
  %v1562 = vpop.f32.mrf.mxu0
  %v1563 = vadd.f32 0.0, %v1562
  %1564 = vmatmul.f32.gmra.mxu0 %v883
  %v1565 = vpop.f32.mrf.mxu0
  %v1566 = vadd.f32 0.0, %v1565
  %1567 = vmatmul.f32.gmra.mxu0 %v886
  %v1568 = vpop.f32.mrf.mxu0
  %v1569 = vadd.f32 0.0, %v1568
  %1570 = vmatmul.f32.gmra.mxu0 %v889
  %v1571 = vpop.f32.mrf.mxu0
  %v1572 = vadd.f32 0.0, %v1571
  %1573 = vmatmul.f32.gmra.mxu0 %v892
  %v1574 = vpop.f32.mrf.mxu0
  %v1575 = vadd.f32 0.0, %v1574
  %1576 = vmatmul.f32.gmra.mxu0 %v895
  %v1577 = vpop.f32.mrf.mxu0
  %v1578 = vadd.f32 0.0, %v1577
  %1579 = vmatmul.f32.gmra.mxu0 %v898
  %v1580 = vpop.f32.mrf.mxu0
  %v1581 = vadd.f32 0.0, %v1580
  %1582 = vmatmul.f32.gmra.mxu0 %v901
  %v1583 = vpop.f32.mrf.mxu0
  %v1584 = vadd.f32 0.0, %v1583
  %1585 = vmatmul.f32.gmra.mxu0 %v904
  %v1586 = vpop.f32.mrf.mxu0
  %v1587 = vadd.f32 0.0, %v1586
  %1588 = vmatmul.f32.gmra.mxu0 %v907
  %v1589 = vpop.f32.mrf.mxu0
  %v1590 = vadd.f32 0.0, %v1589
  %1591 = vmatmul.f32.gmra.mxu0 %v910
  %v1592 = vpop.f32.mrf.mxu0
  %v1593 = vadd.f32 0.0, %v1592
  %1594 = vmatmul.f32.gmra.mxu0 %v913
  %v1595 = vpop.f32.mrf.mxu0
  %v1596 = vadd.f32 0.0, %v1595
  %1597 = vmatmul.f32.gmra.mxu0 %v916
  %v1598 = vpop.f32.mrf.mxu0
  %v1599 = vadd.f32 0.0, %v1598
  %1600 = vmatmul.f32.gmra.mxu0 %v919
  %v1601 = vpop.f32.mrf.mxu0
  %v1602 = vadd.f32 0.0, %v1601
  %1603 = vmatmul.f32.gmra.mxu0 %v922
  %v1604 = vpop.f32.mrf.mxu0
  %1605 = vmatmul.f32.gmra.mxu0 %v925
  %v1606 = vpop.f32.mrf.mxu0
  %1607 = vmatmul.f32.gmra.mxu0 %v928
  %v1608 = vpop.f32.mrf.mxu0
  %1609 = vmatmul.f32.gmra.mxu0 %v931
  %v1610 = vpop.f32.mrf.mxu0
  %1611 = vmatmul.f32.gmra.mxu0 %v934
  %v1612 = vpop.f32.mrf.mxu0
  %1613 = vmatmul.f32.gmra.mxu0 %v937
  %v1614 = vpop.f32.mrf.mxu0
  %1615 = vmatmul.f32.gmra.mxu0 %v940
  %v1616 = vpop.f32.mrf.mxu0
  %1617 = vmatmul.f32.gmra.mxu0 %v943
  %v1618 = vpop.f32.mrf.mxu0
  %1619 = vmatmul.f32.gmra.mxu0 %v946
  %v1620 = vpop.f32.mrf.mxu0
  %1621 = vmatmul.f32.gmra.mxu0 %v949
  %v1622 = vpop.f32.mrf.mxu0
  %1623 = vmatmul.f32.gmra.mxu0 %v952
  %v1624 = vpop.f32.mrf.mxu0
  %1625 = vmatmul.f32.gmra.mxu0 %v955
  %v1626 = vpop.f32.mrf.mxu0
  %1627 = vmatmul.f32.gmra.mxu0 %v958
  %v1628 = vpop.f32.mrf.mxu0
  %1629 = vmatmul.f32.gmra.mxu0 %v961
  %v1630 = vpop.f32.mrf.mxu0
  %1631 = vmatmul.f32.gmra.mxu0 %v964
  %v1632 = vpop.f32.mrf.mxu0
  %1633 = vmatmul.f32.gmra.mxu0 %v967
  %v1634 = vpop.f32.mrf.mxu0
  %1635 = vdwg.mxu0
  %v1637 = vsel %vm293, %v32, 0
  %v1640 = vsel %vm293, %v48, 0
  %v1643 = vsel %vm293, %v64, 0
  %v1646 = vsel %vm293, %v80, 0
  %v1649 = vsel %vm293, %v96, 0
  %v1652 = vsel %vm293, %v112, 0
  %v1655 = vsel %vm293, %v128, 0
  %v1658 = vsel %vm293, %v144, 0
  %v1661 = vsel %vm293, %v160, 0
  %v1664 = vsel %vm293, %v176, 0
  %v1667 = vsel %vm293, %v192, 0
  %v1670 = vsel %vm293, %v208, 0
  %v1673 = vsel %vm293, %v224, 0
  %v1676 = vsel %vm293, %v240, 0
  %v1679 = vsel %vm293, %v256, 0
  %v1682 = vsel %vm969, %v288, 0
  %1684 = vmatpush.msra.mxu0 0.0
  %1685 = vmatpush.msra.mxu0 0.0
  %1686 = vmatpush.msra.mxu0 0.0
  %1687 = vmatpush.msra.mxu0 0.0
  %1688 = vmatpush.msra.mxu0 0.0
  %1689 = vmatpush.msra.mxu0 0.0
  %1690 = vmatpush.msra.mxu0 0.0
  %1691 = vmatpush.msra.mxu0 0.0
  %1692 = vmatpush.msra.mxu0 0.0
  %1693 = vmatpush.msra.mxu0 0.0
  %1694 = vmatpush.msra.mxu0 0.0
  %1695 = vmatpush.msra.mxu0 0.0
  %1696 = vmatpush.msra.mxu0 0.0
  %1697 = vmatpush.msra.mxu0 0.0
  %1698 = vmatpush.msra.mxu0 0.0
  %1699 = vmatpush.msra.mxu0 %v1682
  %1700 = vmatmul.f32.gmra.mxu0 %v1637
  %v1701 = vpop.f32.mrf.mxu0
  %v1702 = vadd.f32 %v991, %v1701
  %1703 = vmatmul.f32.gmra.mxu0 %v295
  %v1704 = vpop.f32.mrf.mxu0
  %v1705 = vadd.f32 %v994, %v1704
  %1706 = vmatmul.f32.gmra.mxu0 %v298
  %v1707 = vpop.f32.mrf.mxu0
  %v1708 = vadd.f32 %v997, %v1707
  %1709 = vmatmul.f32.gmra.mxu0 %v301
  %v1710 = vpop.f32.mrf.mxu0
  %v1711 = vadd.f32 %v1000, %v1710
  %1712 = vmatmul.f32.gmra.mxu0 %v304
  %v1713 = vpop.f32.mrf.mxu0
  %v1714 = vadd.f32 %v1003, %v1713
  %1715 = vmatmul.f32.gmra.mxu0 %v307
  %v1716 = vpop.f32.mrf.mxu0
  %v1717 = vadd.f32 %v1006, %v1716
  %1718 = vmatmul.f32.gmra.mxu0 %v310
  %v1719 = vpop.f32.mrf.mxu0
  %v1720 = vadd.f32 %v1009, %v1719
  %1721 = vmatmul.f32.gmra.mxu0 %v313
  %v1722 = vpop.f32.mrf.mxu0
  %v1723 = vadd.f32 %v1012, %v1722
  %1724 = vmatmul.f32.gmra.mxu0 %v316
  %v1725 = vpop.f32.mrf.mxu0
  %v1726 = vadd.f32 %v1015, %v1725
  %1727 = vmatmul.f32.gmra.mxu0 %v319
  %v1728 = vpop.f32.mrf.mxu0
  %v1729 = vadd.f32 %v1018, %v1728
  %1730 = vmatmul.f32.gmra.mxu0 %v322
  %v1731 = vpop.f32.mrf.mxu0
  %v1732 = vadd.f32 %v1021, %v1731
  %1733 = vmatmul.f32.gmra.mxu0 %v325
  %v1734 = vpop.f32.mrf.mxu0
  %v1735 = vadd.f32 %v1024, %v1734
  %1736 = vmatmul.f32.gmra.mxu0 %v328
  %v1737 = vpop.f32.mrf.mxu0
  %v1738 = vadd.f32 %v1027, %v1737
  %1739 = vmatmul.f32.gmra.mxu0 %v331
  %v1740 = vpop.f32.mrf.mxu0
  %v1741 = vadd.f32 %v1030, %v1740
  %1742 = vmatmul.f32.gmra.mxu0 %v334
  %v1743 = vpop.f32.mrf.mxu0
  %1744 = vmatmul.f32.gmra.mxu0 %v1640
  %v1745 = vpop.f32.mrf.mxu0
  %v1746 = vadd.f32 %v1035, %v1745
  %1747 = vmatmul.f32.gmra.mxu0 %v340
  %v1748 = vpop.f32.mrf.mxu0
  %v1749 = vadd.f32 %v1038, %v1748
  %1750 = vmatmul.f32.gmra.mxu0 %v343
  %v1751 = vpop.f32.mrf.mxu0
  %v1752 = vadd.f32 %v1041, %v1751
  %1753 = vmatmul.f32.gmra.mxu0 %v346
  %v1754 = vpop.f32.mrf.mxu0
  %v1755 = vadd.f32 %v1044, %v1754
  %1756 = vmatmul.f32.gmra.mxu0 %v349
  %v1757 = vpop.f32.mrf.mxu0
  %v1758 = vadd.f32 %v1047, %v1757
  %1759 = vmatmul.f32.gmra.mxu0 %v352
  %v1760 = vpop.f32.mrf.mxu0
  %v1761 = vadd.f32 %v1050, %v1760
  %1762 = vmatmul.f32.gmra.mxu0 %v355
  %v1763 = vpop.f32.mrf.mxu0
  %v1764 = vadd.f32 %v1053, %v1763
  %1765 = vmatmul.f32.gmra.mxu0 %v358
  %v1766 = vpop.f32.mrf.mxu0
  %v1767 = vadd.f32 %v1056, %v1766
  %1768 = vmatmul.f32.gmra.mxu0 %v361
  %v1769 = vpop.f32.mrf.mxu0
  %v1770 = vadd.f32 %v1059, %v1769
  %1771 = vmatmul.f32.gmra.mxu0 %v364
  %v1772 = vpop.f32.mrf.mxu0
  %v1773 = vadd.f32 %v1062, %v1772
  %1774 = vmatmul.f32.gmra.mxu0 %v367
  %v1775 = vpop.f32.mrf.mxu0
  %v1776 = vadd.f32 %v1065, %v1775
  %1777 = vmatmul.f32.gmra.mxu0 %v370
  %v1778 = vpop.f32.mrf.mxu0
  %v1779 = vadd.f32 %v1068, %v1778
  %1780 = vmatmul.f32.gmra.mxu0 %v373
  %v1781 = vpop.f32.mrf.mxu0
  %v1782 = vadd.f32 %v1071, %v1781
  %1783 = vmatmul.f32.gmra.mxu0 %v376
  %v1784 = vpop.f32.mrf.mxu0
  %v1785 = vadd.f32 %v1074, %v1784
  %1786 = vmatmul.f32.gmra.mxu0 %v379
  %v1787 = vpop.f32.mrf.mxu0
  %1788 = vmatmul.f32.gmra.mxu0 %v1643
  %v1789 = vpop.f32.mrf.mxu0
  %v1790 = vadd.f32 %v1079, %v1789
  %1791 = vmatmul.f32.gmra.mxu0 %v385
  %v1792 = vpop.f32.mrf.mxu0
  %v1793 = vadd.f32 %v1082, %v1792
  %1794 = vmatmul.f32.gmra.mxu0 %v388
  %v1795 = vpop.f32.mrf.mxu0
  %v1796 = vadd.f32 %v1085, %v1795
  %1797 = vmatmul.f32.gmra.mxu0 %v391
  %v1798 = vpop.f32.mrf.mxu0
  %v1799 = vadd.f32 %v1088, %v1798
  %1800 = vmatmul.f32.gmra.mxu0 %v394
  %v1801 = vpop.f32.mrf.mxu0
  %v1802 = vadd.f32 %v1091, %v1801
  %1803 = vmatmul.f32.gmra.mxu0 %v397
  %v1804 = vpop.f32.mrf.mxu0
  %v1805 = vadd.f32 %v1094, %v1804
  %1806 = vmatmul.f32.gmra.mxu0 %v400
  %v1807 = vpop.f32.mrf.mxu0
  %v1808 = vadd.f32 %v1097, %v1807
  %1809 = vmatmul.f32.gmra.mxu0 %v403
  %v1810 = vpop.f32.mrf.mxu0
  %v1811 = vadd.f32 %v1100, %v1810
  %1812 = vmatmul.f32.gmra.mxu0 %v406
  %v1813 = vpop.f32.mrf.mxu0
  %v1814 = vadd.f32 %v1103, %v1813
  %1815 = vmatmul.f32.gmra.mxu0 %v409
  %v1816 = vpop.f32.mrf.mxu0
  %v1817 = vadd.f32 %v1106, %v1816
  %1818 = vmatmul.f32.gmra.mxu0 %v412
  %v1819 = vpop.f32.mrf.mxu0
  %v1820 = vadd.f32 %v1109, %v1819
  %1821 = vmatmul.f32.gmra.mxu0 %v415
  %v1822 = vpop.f32.mrf.mxu0
  %v1823 = vadd.f32 %v1112, %v1822
  %1824 = vmatmul.f32.gmra.mxu0 %v418
  %v1825 = vpop.f32.mrf.mxu0
  %v1826 = vadd.f32 %v1115, %v1825
  %1827 = vmatmul.f32.gmra.mxu0 %v421
  %v1828 = vpop.f32.mrf.mxu0
  %v1829 = vadd.f32 %v1118, %v1828
  %1830 = vmatmul.f32.gmra.mxu0 %v424
  %v1831 = vpop.f32.mrf.mxu0
  %1832 = vmatmul.f32.gmra.mxu0 %v1646
  %v1833 = vpop.f32.mrf.mxu0
  %v1834 = vadd.f32 %v1123, %v1833
  %1835 = vmatmul.f32.gmra.mxu0 %v430
  %v1836 = vpop.f32.mrf.mxu0
  %v1837 = vadd.f32 %v1126, %v1836
  %1838 = vmatmul.f32.gmra.mxu0 %v433
  %v1839 = vpop.f32.mrf.mxu0
  %v1840 = vadd.f32 %v1129, %v1839
  %1841 = vmatmul.f32.gmra.mxu0 %v436
  %v1842 = vpop.f32.mrf.mxu0
  %v1843 = vadd.f32 %v1132, %v1842
  %1844 = vmatmul.f32.gmra.mxu0 %v439
  %v1845 = vpop.f32.mrf.mxu0
  %v1846 = vadd.f32 %v1135, %v1845
  %1847 = vmatmul.f32.gmra.mxu0 %v442
  %v1848 = vpop.f32.mrf.mxu0
  %v1849 = vadd.f32 %v1138, %v1848
  %1850 = vmatmul.f32.gmra.mxu0 %v445
  %v1851 = vpop.f32.mrf.mxu0
  %v1852 = vadd.f32 %v1141, %v1851
  %1853 = vmatmul.f32.gmra.mxu0 %v448
  %v1854 = vpop.f32.mrf.mxu0
  %v1855 = vadd.f32 %v1144, %v1854
  %1856 = vmatmul.f32.gmra.mxu0 %v451
  %v1857 = vpop.f32.mrf.mxu0
  %v1858 = vadd.f32 %v1147, %v1857
  %1859 = vmatmul.f32.gmra.mxu0 %v454
  %v1860 = vpop.f32.mrf.mxu0
  %v1861 = vadd.f32 %v1150, %v1860
  %1862 = vmatmul.f32.gmra.mxu0 %v457
  %v1863 = vpop.f32.mrf.mxu0
  %v1864 = vadd.f32 %v1153, %v1863
  %1865 = vmatmul.f32.gmra.mxu0 %v460
  %v1866 = vpop.f32.mrf.mxu0
  %v1867 = vadd.f32 %v1156, %v1866
  %1868 = vmatmul.f32.gmra.mxu0 %v463
  %v1869 = vpop.f32.mrf.mxu0
  %v1870 = vadd.f32 %v1159, %v1869
  %1871 = vmatmul.f32.gmra.mxu0 %v466
  %v1872 = vpop.f32.mrf.mxu0
  %v1873 = vadd.f32 %v1162, %v1872
  %1874 = vmatmul.f32.gmra.mxu0 %v469
  %v1875 = vpop.f32.mrf.mxu0
  %1876 = vmatmul.f32.gmra.mxu0 %v1649
  %v1877 = vpop.f32.mrf.mxu0
  %v1878 = vadd.f32 %v1167, %v1877
  %1879 = vmatmul.f32.gmra.mxu0 %v475
  %v1880 = vpop.f32.mrf.mxu0
  %v1881 = vadd.f32 %v1170, %v1880
  %1882 = vmatmul.f32.gmra.mxu0 %v478
  %v1883 = vpop.f32.mrf.mxu0
  %v1884 = vadd.f32 %v1173, %v1883
  %1885 = vmatmul.f32.gmra.mxu0 %v481
  %v1886 = vpop.f32.mrf.mxu0
  %v1887 = vadd.f32 %v1176, %v1886
  %1888 = vmatmul.f32.gmra.mxu0 %v484
  %v1889 = vpop.f32.mrf.mxu0
  %v1890 = vadd.f32 %v1179, %v1889
  %1891 = vmatmul.f32.gmra.mxu0 %v487
  %v1892 = vpop.f32.mrf.mxu0
  %v1893 = vadd.f32 %v1182, %v1892
  %1894 = vmatmul.f32.gmra.mxu0 %v490
  %v1895 = vpop.f32.mrf.mxu0
  %v1896 = vadd.f32 %v1185, %v1895
  %1897 = vmatmul.f32.gmra.mxu0 %v493
  %v1898 = vpop.f32.mrf.mxu0
  %v1899 = vadd.f32 %v1188, %v1898
  %1900 = vmatmul.f32.gmra.mxu0 %v496
  %v1901 = vpop.f32.mrf.mxu0
  %v1902 = vadd.f32 %v1191, %v1901
  %1903 = vmatmul.f32.gmra.mxu0 %v499
  %v1904 = vpop.f32.mrf.mxu0
  %v1905 = vadd.f32 %v1194, %v1904
  %1906 = vmatmul.f32.gmra.mxu0 %v502
  %v1907 = vpop.f32.mrf.mxu0
  %v1908 = vadd.f32 %v1197, %v1907
  %1909 = vmatmul.f32.gmra.mxu0 %v505
  %v1910 = vpop.f32.mrf.mxu0
  %v1911 = vadd.f32 %v1200, %v1910
  %1912 = vmatmul.f32.gmra.mxu0 %v508
  %v1913 = vpop.f32.mrf.mxu0
  %v1914 = vadd.f32 %v1203, %v1913
  %1915 = vmatmul.f32.gmra.mxu0 %v511
  %v1916 = vpop.f32.mrf.mxu0
  %v1917 = vadd.f32 %v1206, %v1916
  %1918 = vmatmul.f32.gmra.mxu0 %v514
  %v1919 = vpop.f32.mrf.mxu0
  %1920 = vmatmul.f32.gmra.mxu0 %v1652
  %v1921 = vpop.f32.mrf.mxu0
  %v1922 = vadd.f32 %v1211, %v1921
  %1923 = vmatmul.f32.gmra.mxu0 %v520
  %v1924 = vpop.f32.mrf.mxu0
  %v1925 = vadd.f32 %v1214, %v1924
  %1926 = vmatmul.f32.gmra.mxu0 %v523
  %v1927 = vpop.f32.mrf.mxu0
  %v1928 = vadd.f32 %v1217, %v1927
  %1929 = vmatmul.f32.gmra.mxu0 %v526
  %v1930 = vpop.f32.mrf.mxu0
  %v1931 = vadd.f32 %v1220, %v1930
  %1932 = vmatmul.f32.gmra.mxu0 %v529
  %v1933 = vpop.f32.mrf.mxu0
  %v1934 = vadd.f32 %v1223, %v1933
  %1935 = vmatmul.f32.gmra.mxu0 %v532
  %v1936 = vpop.f32.mrf.mxu0
  %v1937 = vadd.f32 %v1226, %v1936
  %1938 = vmatmul.f32.gmra.mxu0 %v535
  %v1939 = vpop.f32.mrf.mxu0
  %v1940 = vadd.f32 %v1229, %v1939
  %1941 = vmatmul.f32.gmra.mxu0 %v538
  %v1942 = vpop.f32.mrf.mxu0
  %v1943 = vadd.f32 %v1232, %v1942
  %1944 = vmatmul.f32.gmra.mxu0 %v541
  %v1945 = vpop.f32.mrf.mxu0
  %v1946 = vadd.f32 %v1235, %v1945
  %1947 = vmatmul.f32.gmra.mxu0 %v544
  %v1948 = vpop.f32.mrf.mxu0
  %v1949 = vadd.f32 %v1238, %v1948
  %1950 = vmatmul.f32.gmra.mxu0 %v547
  %v1951 = vpop.f32.mrf.mxu0
  %v1952 = vadd.f32 %v1241, %v1951
  %1953 = vmatmul.f32.gmra.mxu0 %v550
  %v1954 = vpop.f32.mrf.mxu0
  %v1955 = vadd.f32 %v1244, %v1954
  %1956 = vmatmul.f32.gmra.mxu0 %v553
  %v1957 = vpop.f32.mrf.mxu0
  %v1958 = vadd.f32 %v1247, %v1957
  %1959 = vmatmul.f32.gmra.mxu0 %v556
  %v1960 = vpop.f32.mrf.mxu0
  %v1961 = vadd.f32 %v1250, %v1960
  %1962 = vmatmul.f32.gmra.mxu0 %v559
  %v1963 = vpop.f32.mrf.mxu0
  %1964 = vmatmul.f32.gmra.mxu0 %v1655
  %v1965 = vpop.f32.mrf.mxu0
  %v1966 = vadd.f32 %v1255, %v1965
  %1967 = vmatmul.f32.gmra.mxu0 %v565
  %v1968 = vpop.f32.mrf.mxu0
  %v1969 = vadd.f32 %v1258, %v1968
  %1970 = vmatmul.f32.gmra.mxu0 %v568
  %v1971 = vpop.f32.mrf.mxu0
  %v1972 = vadd.f32 %v1261, %v1971
  %1973 = vmatmul.f32.gmra.mxu0 %v571
  %v1974 = vpop.f32.mrf.mxu0
  %v1975 = vadd.f32 %v1264, %v1974
  %1976 = vmatmul.f32.gmra.mxu0 %v574
  %v1977 = vpop.f32.mrf.mxu0
  %v1978 = vadd.f32 %v1267, %v1977
  %1979 = vmatmul.f32.gmra.mxu0 %v577
  %v1980 = vpop.f32.mrf.mxu0
  %v1981 = vadd.f32 %v1270, %v1980
  %1982 = vmatmul.f32.gmra.mxu0 %v580
  %v1983 = vpop.f32.mrf.mxu0
  %v1984 = vadd.f32 %v1273, %v1983
  %1985 = vmatmul.f32.gmra.mxu0 %v583
  %v1986 = vpop.f32.mrf.mxu0
  %v1987 = vadd.f32 %v1276, %v1986
  %1988 = vmatmul.f32.gmra.mxu0 %v586
  %v1989 = vpop.f32.mrf.mxu0
  %v1990 = vadd.f32 %v1279, %v1989
  %1991 = vmatmul.f32.gmra.mxu0 %v589
  %v1992 = vpop.f32.mrf.mxu0
  %v1993 = vadd.f32 %v1282, %v1992
  %1994 = vmatmul.f32.gmra.mxu0 %v592
  %v1995 = vpop.f32.mrf.mxu0
  %v1996 = vadd.f32 %v1285, %v1995
  %1997 = vmatmul.f32.gmra.mxu0 %v595
  %v1998 = vpop.f32.mrf.mxu0
  %v1999 = vadd.f32 %v1288, %v1998
  %2000 = vmatmul.f32.gmra.mxu0 %v598
  %v2001 = vpop.f32.mrf.mxu0
  %v2002 = vadd.f32 %v1291, %v2001
  %2003 = vmatmul.f32.gmra.mxu0 %v601
  %v2004 = vpop.f32.mrf.mxu0
  %v2005 = vadd.f32 %v1294, %v2004
  %2006 = vmatmul.f32.gmra.mxu0 %v604
  %v2007 = vpop.f32.mrf.mxu0
  %2008 = vmatmul.f32.gmra.mxu0 %v1658
  %v2009 = vpop.f32.mrf.mxu0
  %v2010 = vadd.f32 %v1299, %v2009
  %2011 = vmatmul.f32.gmra.mxu0 %v610
  %v2012 = vpop.f32.mrf.mxu0
  %v2013 = vadd.f32 %v1302, %v2012
  %2014 = vmatmul.f32.gmra.mxu0 %v613
  %v2015 = vpop.f32.mrf.mxu0
  %v2016 = vadd.f32 %v1305, %v2015
  %2017 = vmatmul.f32.gmra.mxu0 %v616
  %v2018 = vpop.f32.mrf.mxu0
  %v2019 = vadd.f32 %v1308, %v2018
  %2020 = vmatmul.f32.gmra.mxu0 %v619
  %v2021 = vpop.f32.mrf.mxu0
  %v2022 = vadd.f32 %v1311, %v2021
  %2023 = vmatmul.f32.gmra.mxu0 %v622
  %v2024 = vpop.f32.mrf.mxu0
  %v2025 = vadd.f32 %v1314, %v2024
  %2026 = vmatmul.f32.gmra.mxu0 %v625
  %v2027 = vpop.f32.mrf.mxu0
  %v2028 = vadd.f32 %v1317, %v2027
  %2029 = vmatmul.f32.gmra.mxu0 %v628
  %v2030 = vpop.f32.mrf.mxu0
  %v2031 = vadd.f32 %v1320, %v2030
  %2032 = vmatmul.f32.gmra.mxu0 %v631
  %v2033 = vpop.f32.mrf.mxu0
  %v2034 = vadd.f32 %v1323, %v2033
  %2035 = vmatmul.f32.gmra.mxu0 %v634
  %v2036 = vpop.f32.mrf.mxu0
  %v2037 = vadd.f32 %v1326, %v2036
  %2038 = vmatmul.f32.gmra.mxu0 %v637
  %v2039 = vpop.f32.mrf.mxu0
  %v2040 = vadd.f32 %v1329, %v2039
  %2041 = vmatmul.f32.gmra.mxu0 %v640
  %v2042 = vpop.f32.mrf.mxu0
  %v2043 = vadd.f32 %v1332, %v2042
  %2044 = vmatmul.f32.gmra.mxu0 %v643
  %v2045 = vpop.f32.mrf.mxu0
  %v2046 = vadd.f32 %v1335, %v2045
  %2047 = vmatmul.f32.gmra.mxu0 %v646
  %v2048 = vpop.f32.mrf.mxu0
  %v2049 = vadd.f32 %v1338, %v2048
  %2050 = vmatmul.f32.gmra.mxu0 %v649
  %v2051 = vpop.f32.mrf.mxu0
  %2052 = vmatmul.f32.gmra.mxu0 %v1661
  %v2053 = vpop.f32.mrf.mxu0
  %v2054 = vadd.f32 %v1343, %v2053
  %2055 = vmatmul.f32.gmra.mxu0 %v655
  %v2056 = vpop.f32.mrf.mxu0
  %v2057 = vadd.f32 %v1346, %v2056
  %2058 = vmatmul.f32.gmra.mxu0 %v658
  %v2059 = vpop.f32.mrf.mxu0
  %v2060 = vadd.f32 %v1349, %v2059
  %2061 = vmatmul.f32.gmra.mxu0 %v661
  %v2062 = vpop.f32.mrf.mxu0
  %v2063 = vadd.f32 %v1352, %v2062
  %2064 = vmatmul.f32.gmra.mxu0 %v664
  %v2065 = vpop.f32.mrf.mxu0
  %v2066 = vadd.f32 %v1355, %v2065
  %2067 = vmatmul.f32.gmra.mxu0 %v667
  %v2068 = vpop.f32.mrf.mxu0
  %v2069 = vadd.f32 %v1358, %v2068
  %2070 = vmatmul.f32.gmra.mxu0 %v670
  %v2071 = vpop.f32.mrf.mxu0
  %v2072 = vadd.f32 %v1361, %v2071
  %2073 = vmatmul.f32.gmra.mxu0 %v673
  %v2074 = vpop.f32.mrf.mxu0
  %v2075 = vadd.f32 %v1364, %v2074
  %2076 = vmatmul.f32.gmra.mxu0 %v676
  %v2077 = vpop.f32.mrf.mxu0
  %v2078 = vadd.f32 %v1367, %v2077
  %2079 = vmatmul.f32.gmra.mxu0 %v679
  %v2080 = vpop.f32.mrf.mxu0
  %v2081 = vadd.f32 %v1370, %v2080
  %2082 = vmatmul.f32.gmra.mxu0 %v682
  %v2083 = vpop.f32.mrf.mxu0
  %v2084 = vadd.f32 %v1373, %v2083
  %2085 = vmatmul.f32.gmra.mxu0 %v685
  %v2086 = vpop.f32.mrf.mxu0
  %v2087 = vadd.f32 %v1376, %v2086
  %2088 = vmatmul.f32.gmra.mxu0 %v688
  %v2089 = vpop.f32.mrf.mxu0
  %v2090 = vadd.f32 %v1379, %v2089
  %2091 = vmatmul.f32.gmra.mxu0 %v691
  %v2092 = vpop.f32.mrf.mxu0
  %v2093 = vadd.f32 %v1382, %v2092
  %2094 = vmatmul.f32.gmra.mxu0 %v694
  %v2095 = vpop.f32.mrf.mxu0
  %2096 = vmatmul.f32.gmra.mxu0 %v1664
  %v2097 = vpop.f32.mrf.mxu0
  %v2098 = vadd.f32 %v1387, %v2097
  %2099 = vmatmul.f32.gmra.mxu0 %v700
  %v2100 = vpop.f32.mrf.mxu0
  %v2101 = vadd.f32 %v1390, %v2100
  %2102 = vmatmul.f32.gmra.mxu0 %v703
  %v2103 = vpop.f32.mrf.mxu0
  %v2104 = vadd.f32 %v1393, %v2103
  %2105 = vmatmul.f32.gmra.mxu0 %v706
  %v2106 = vpop.f32.mrf.mxu0
  %v2107 = vadd.f32 %v1396, %v2106
  %2108 = vmatmul.f32.gmra.mxu0 %v709
  %v2109 = vpop.f32.mrf.mxu0
  %v2110 = vadd.f32 %v1399, %v2109
  %2111 = vmatmul.f32.gmra.mxu0 %v712
  %v2112 = vpop.f32.mrf.mxu0
  %v2113 = vadd.f32 %v1402, %v2112
  %2114 = vmatmul.f32.gmra.mxu0 %v715
  %v2115 = vpop.f32.mrf.mxu0
  %v2116 = vadd.f32 %v1405, %v2115
  %2117 = vmatmul.f32.gmra.mxu0 %v718
  %v2118 = vpop.f32.mrf.mxu0
  %v2119 = vadd.f32 %v1408, %v2118
  %2120 = vmatmul.f32.gmra.mxu0 %v721
  %v2121 = vpop.f32.mrf.mxu0
  %v2122 = vadd.f32 %v1411, %v2121
  %2123 = vmatmul.f32.gmra.mxu0 %v724
  %v2124 = vpop.f32.mrf.mxu0
  %v2125 = vadd.f32 %v1414, %v2124
  %2126 = vmatmul.f32.gmra.mxu0 %v727
  %v2127 = vpop.f32.mrf.mxu0
  %v2128 = vadd.f32 %v1417, %v2127
  %2129 = vmatmul.f32.gmra.mxu0 %v730
  %v2130 = vpop.f32.mrf.mxu0
  %v2131 = vadd.f32 %v1420, %v2130
  %2132 = vmatmul.f32.gmra.mxu0 %v733
  %v2133 = vpop.f32.mrf.mxu0
  %v2134 = vadd.f32 %v1423, %v2133
  %2135 = vmatmul.f32.gmra.mxu0 %v736
  %v2136 = vpop.f32.mrf.mxu0
  %v2137 = vadd.f32 %v1426, %v2136
  %2138 = vmatmul.f32.gmra.mxu0 %v739
  %v2139 = vpop.f32.mrf.mxu0
  %2140 = vmatmul.f32.gmra.mxu0 %v1667
  %v2141 = vpop.f32.mrf.mxu0
  %v2142 = vadd.f32 %v1431, %v2141
  %2143 = vmatmul.f32.gmra.mxu0 %v745
  %v2144 = vpop.f32.mrf.mxu0
  %v2145 = vadd.f32 %v1434, %v2144
  %2146 = vmatmul.f32.gmra.mxu0 %v748
  %v2147 = vpop.f32.mrf.mxu0
  %v2148 = vadd.f32 %v1437, %v2147
  %2149 = vmatmul.f32.gmra.mxu0 %v751
  %v2150 = vpop.f32.mrf.mxu0
  %v2151 = vadd.f32 %v1440, %v2150
  %2152 = vmatmul.f32.gmra.mxu0 %v754
  %v2153 = vpop.f32.mrf.mxu0
  %v2154 = vadd.f32 %v1443, %v2153
  %2155 = vmatmul.f32.gmra.mxu0 %v757
  %v2156 = vpop.f32.mrf.mxu0
  %v2157 = vadd.f32 %v1446, %v2156
  %2158 = vmatmul.f32.gmra.mxu0 %v760
  %v2159 = vpop.f32.mrf.mxu0
  %v2160 = vadd.f32 %v1449, %v2159
  %2161 = vmatmul.f32.gmra.mxu0 %v763
  %v2162 = vpop.f32.mrf.mxu0
  %v2163 = vadd.f32 %v1452, %v2162
  %2164 = vmatmul.f32.gmra.mxu0 %v766
  %v2165 = vpop.f32.mrf.mxu0
  %v2166 = vadd.f32 %v1455, %v2165
  %2167 = vmatmul.f32.gmra.mxu0 %v769
  %v2168 = vpop.f32.mrf.mxu0
  %v2169 = vadd.f32 %v1458, %v2168
  %2170 = vmatmul.f32.gmra.mxu0 %v772
  %v2171 = vpop.f32.mrf.mxu0
  %v2172 = vadd.f32 %v1461, %v2171
  %2173 = vmatmul.f32.gmra.mxu0 %v775
  %v2174 = vpop.f32.mrf.mxu0
  %v2175 = vadd.f32 %v1464, %v2174
  %2176 = vmatmul.f32.gmra.mxu0 %v778
  %v2177 = vpop.f32.mrf.mxu0
  %v2178 = vadd.f32 %v1467, %v2177
  %2179 = vmatmul.f32.gmra.mxu0 %v781
  %v2180 = vpop.f32.mrf.mxu0
  %v2181 = vadd.f32 %v1470, %v2180
  %2182 = vmatmul.f32.gmra.mxu0 %v784
  %v2183 = vpop.f32.mrf.mxu0
  %2184 = vmatmul.f32.gmra.mxu0 %v1670
  %v2185 = vpop.f32.mrf.mxu0
  %v2186 = vadd.f32 %v1475, %v2185
  %2187 = vmatmul.f32.gmra.mxu0 %v790
  %v2188 = vpop.f32.mrf.mxu0
  %v2189 = vadd.f32 %v1478, %v2188
  %2190 = vmatmul.f32.gmra.mxu0 %v793
  %v2191 = vpop.f32.mrf.mxu0
  %v2192 = vadd.f32 %v1481, %v2191
  %2193 = vmatmul.f32.gmra.mxu0 %v796
  %v2194 = vpop.f32.mrf.mxu0
  %v2195 = vadd.f32 %v1484, %v2194
  %2196 = vmatmul.f32.gmra.mxu0 %v799
  %v2197 = vpop.f32.mrf.mxu0
  %v2198 = vadd.f32 %v1487, %v2197
  %2199 = vmatmul.f32.gmra.mxu0 %v802
  %v2200 = vpop.f32.mrf.mxu0
  %v2201 = vadd.f32 %v1490, %v2200
  %2202 = vmatmul.f32.gmra.mxu0 %v805
  %v2203 = vpop.f32.mrf.mxu0
  %v2204 = vadd.f32 %v1493, %v2203
  %2205 = vmatmul.f32.gmra.mxu0 %v808
  %v2206 = vpop.f32.mrf.mxu0
  %v2207 = vadd.f32 %v1496, %v2206
  %2208 = vmatmul.f32.gmra.mxu0 %v811
  %v2209 = vpop.f32.mrf.mxu0
  %v2210 = vadd.f32 %v1499, %v2209
  %2211 = vmatmul.f32.gmra.mxu0 %v814
  %v2212 = vpop.f32.mrf.mxu0
  %v2213 = vadd.f32 %v1502, %v2212
  %2214 = vmatmul.f32.gmra.mxu0 %v817
  %v2215 = vpop.f32.mrf.mxu0
  %v2216 = vadd.f32 %v1505, %v2215
  %2217 = vmatmul.f32.gmra.mxu0 %v820
  %v2218 = vpop.f32.mrf.mxu0
  %v2219 = vadd.f32 %v1508, %v2218
  %2220 = vmatmul.f32.gmra.mxu0 %v823
  %v2221 = vpop.f32.mrf.mxu0
  %v2222 = vadd.f32 %v1511, %v2221
  %2223 = vmatmul.f32.gmra.mxu0 %v826
  %v2224 = vpop.f32.mrf.mxu0
  %v2225 = vadd.f32 %v1514, %v2224
  %2226 = vmatmul.f32.gmra.mxu0 %v829
  %v2227 = vpop.f32.mrf.mxu0
  %2228 = vmatmul.f32.gmra.mxu0 %v1673
  %v2229 = vpop.f32.mrf.mxu0
  %v2230 = vadd.f32 %v1519, %v2229
  %2231 = vmatmul.f32.gmra.mxu0 %v835
  %v2232 = vpop.f32.mrf.mxu0
  %v2233 = vadd.f32 %v1522, %v2232
  %2234 = vmatmul.f32.gmra.mxu0 %v838
  %v2235 = vpop.f32.mrf.mxu0
  %v2236 = vadd.f32 %v1525, %v2235
  %2237 = vmatmul.f32.gmra.mxu0 %v841
  %v2238 = vpop.f32.mrf.mxu0
  %v2239 = vadd.f32 %v1528, %v2238
  %2240 = vmatmul.f32.gmra.mxu0 %v844
  %v2241 = vpop.f32.mrf.mxu0
  %v2242 = vadd.f32 %v1531, %v2241
  %2243 = vmatmul.f32.gmra.mxu0 %v847
  %v2244 = vpop.f32.mrf.mxu0
  %v2245 = vadd.f32 %v1534, %v2244
  %2246 = vmatmul.f32.gmra.mxu0 %v850
  %v2247 = vpop.f32.mrf.mxu0
  %v2248 = vadd.f32 %v1537, %v2247
  %2249 = vmatmul.f32.gmra.mxu0 %v853
  %v2250 = vpop.f32.mrf.mxu0
  %v2251 = vadd.f32 %v1540, %v2250
  %2252 = vmatmul.f32.gmra.mxu0 %v856
  %v2253 = vpop.f32.mrf.mxu0
  %v2254 = vadd.f32 %v1543, %v2253
  %2255 = vmatmul.f32.gmra.mxu0 %v859
  %v2256 = vpop.f32.mrf.mxu0
  %v2257 = vadd.f32 %v1546, %v2256
  %2258 = vmatmul.f32.gmra.mxu0 %v862
  %v2259 = vpop.f32.mrf.mxu0
  %v2260 = vadd.f32 %v1549, %v2259
  %2261 = vmatmul.f32.gmra.mxu0 %v865
  %v2262 = vpop.f32.mrf.mxu0
  %v2263 = vadd.f32 %v1552, %v2262
  %2264 = vmatmul.f32.gmra.mxu0 %v868
  %v2265 = vpop.f32.mrf.mxu0
  %v2266 = vadd.f32 %v1555, %v2265
  %2267 = vmatmul.f32.gmra.mxu0 %v871
  %v2268 = vpop.f32.mrf.mxu0
  %v2269 = vadd.f32 %v1558, %v2268
  %2270 = vmatmul.f32.gmra.mxu0 %v874
  %v2271 = vpop.f32.mrf.mxu0
  %2272 = vmatmul.f32.gmra.mxu0 %v1676
  %v2273 = vpop.f32.mrf.mxu0
  %v2274 = vadd.f32 %v1563, %v2273
  %2275 = vmatmul.f32.gmra.mxu0 %v880
  %v2276 = vpop.f32.mrf.mxu0
  %v2277 = vadd.f32 %v1566, %v2276
  %2278 = vmatmul.f32.gmra.mxu0 %v883
  %v2279 = vpop.f32.mrf.mxu0
  %v2280 = vadd.f32 %v1569, %v2279
  %2281 = vmatmul.f32.gmra.mxu0 %v886
  %v2282 = vpop.f32.mrf.mxu0
  %v2283 = vadd.f32 %v1572, %v2282
  %2284 = vmatmul.f32.gmra.mxu0 %v889
  %v2285 = vpop.f32.mrf.mxu0
  %v2286 = vadd.f32 %v1575, %v2285
  %2287 = vmatmul.f32.gmra.mxu0 %v892
  %v2288 = vpop.f32.mrf.mxu0
  %v2289 = vadd.f32 %v1578, %v2288
  %2290 = vmatmul.f32.gmra.mxu0 %v895
  %v2291 = vpop.f32.mrf.mxu0
  %v2292 = vadd.f32 %v1581, %v2291
  %2293 = vmatmul.f32.gmra.mxu0 %v898
  %v2294 = vpop.f32.mrf.mxu0
  %v2295 = vadd.f32 %v1584, %v2294
  %2296 = vmatmul.f32.gmra.mxu0 %v901
  %v2297 = vpop.f32.mrf.mxu0
  %v2298 = vadd.f32 %v1587, %v2297
  %2299 = vmatmul.f32.gmra.mxu0 %v904
  %v2300 = vpop.f32.mrf.mxu0
  %v2301 = vadd.f32 %v1590, %v2300
  %2302 = vmatmul.f32.gmra.mxu0 %v907
  %v2303 = vpop.f32.mrf.mxu0
  %v2304 = vadd.f32 %v1593, %v2303
  %2305 = vmatmul.f32.gmra.mxu0 %v910
  %v2306 = vpop.f32.mrf.mxu0
  %v2307 = vadd.f32 %v1596, %v2306
  %2308 = vmatmul.f32.gmra.mxu0 %v913
  %v2309 = vpop.f32.mrf.mxu0
  %v2310 = vadd.f32 %v1599, %v2309
  %2311 = vmatmul.f32.gmra.mxu0 %v916
  %v2312 = vpop.f32.mrf.mxu0
  %v2313 = vadd.f32 %v1602, %v2312
  %2314 = vmatmul.f32.gmra.mxu0 %v919
  %v2315 = vpop.f32.mrf.mxu0
  %2316 = vmatmul.f32.gmra.mxu0 %v1679
  %v2317 = vpop.f32.mrf.mxu0
  %2318 = vmatmul.f32.gmra.mxu0 %v925
  %v2319 = vpop.f32.mrf.mxu0
  %2320 = vmatmul.f32.gmra.mxu0 %v928
  %v2321 = vpop.f32.mrf.mxu0
  %2322 = vmatmul.f32.gmra.mxu0 %v931
  %v2323 = vpop.f32.mrf.mxu0
  %2324 = vmatmul.f32.gmra.mxu0 %v934
  %v2325 = vpop.f32.mrf.mxu0
  %2326 = vmatmul.f32.gmra.mxu0 %v937
  %v2327 = vpop.f32.mrf.mxu0
  %2328 = vmatmul.f32.gmra.mxu0 %v940
  %v2329 = vpop.f32.mrf.mxu0
  %2330 = vmatmul.f32.gmra.mxu0 %v943
  %v2331 = vpop.f32.mrf.mxu0
  %2332 = vmatmul.f32.gmra.mxu0 %v946
  %v2333 = vpop.f32.mrf.mxu0
  %2334 = vmatmul.f32.gmra.mxu0 %v949
  %v2335 = vpop.f32.mrf.mxu0
  %2336 = vmatmul.f32.gmra.mxu0 %v952
  %v2337 = vpop.f32.mrf.mxu0
  %2338 = vmatmul.f32.gmra.mxu0 %v955
  %v2339 = vpop.f32.mrf.mxu0
  %2340 = vmatmul.f32.gmra.mxu0 %v958
  %v2341 = vpop.f32.mrf.mxu0
  %2342 = vmatmul.f32.gmra.mxu0 %v961
  %v2343 = vpop.f32.mrf.mxu0
  %2344 = vmatmul.f32.gmra.mxu0 %v964
  %v2345 = vpop.f32.mrf.mxu0
  %2346 = vdwg.mxu0
  %v2348 = vsel %vm293, %v272, 0
  %v2351 = vsel %vm293, %v273, 0
  %v2354 = vsel %vm293, %v274, 0
  %v2357 = vsel %vm293, %v275, 0
  %v2360 = vsel %vm293, %v276, 0
  %v2363 = vsel %vm293, %v277, 0
  %v2366 = vsel %vm293, %v278, 0
  %v2369 = vsel %vm293, %v279, 0
  %v2372 = vsel %vm293, %v280, 0
  %v2375 = vsel %vm293, %v281, 0
  %v2378 = vsel %vm293, %v282, 0
  %v2381 = vsel %vm293, %v283, 0
  %v2384 = vsel %vm293, %v284, 0
  %v2387 = vsel %vm293, %v285, 0
  %v2390 = vsel %vm293, %v286, 0
  %v2393 = vsel %vm969, %v290, 0
  %2395 = vmatpush.msra.mxu0 0.0
  %2396 = vmatpush.msra.mxu0 0.0
  %2397 = vmatpush.msra.mxu0 0.0
  %2398 = vmatpush.msra.mxu0 0.0
  %2399 = vmatpush.msra.mxu0 0.0
  %2400 = vmatpush.msra.mxu0 0.0
  %2401 = vmatpush.msra.mxu0 0.0
  %2402 = vmatpush.msra.mxu0 0.0
  %2403 = vmatpush.msra.mxu0 0.0
  %2404 = vmatpush.msra.mxu0 0.0
  %2405 = vmatpush.msra.mxu0 0.0
  %2406 = vmatpush.msra.mxu0 0.0
  %2407 = vmatpush.msra.mxu0 0.0
  %2408 = vmatpush.msra.mxu0 0.0
  %2409 = vmatpush.msra.mxu0 0.0
  %2410 = vmatpush.msra.mxu0 %v2393
  %2411 = vmatmul.f32.gmra.mxu0 %v1640
  %v2412 = vpop.f32.mrf.mxu0
  %v2413 = vadd.f32 0.0, %v2412
  %2414 = vmatmul.f32.gmra.mxu0 %v340
  %v2415 = vpop.f32.mrf.mxu0
  %v2416 = vadd.f32 0.0, %v2415
  %2417 = vmatmul.f32.gmra.mxu0 %v343
  %v2418 = vpop.f32.mrf.mxu0
  %v2419 = vadd.f32 0.0, %v2418
  %2420 = vmatmul.f32.gmra.mxu0 %v346
  %v2421 = vpop.f32.mrf.mxu0
  %v2422 = vadd.f32 0.0, %v2421
  %2423 = vmatmul.f32.gmra.mxu0 %v349
  %v2424 = vpop.f32.mrf.mxu0
  %v2425 = vadd.f32 0.0, %v2424
  %2426 = vmatmul.f32.gmra.mxu0 %v352
  %v2427 = vpop.f32.mrf.mxu0
  %v2428 = vadd.f32 0.0, %v2427
  %2429 = vmatmul.f32.gmra.mxu0 %v355
  %v2430 = vpop.f32.mrf.mxu0
  %v2431 = vadd.f32 0.0, %v2430
  %2432 = vmatmul.f32.gmra.mxu0 %v358
  %v2433 = vpop.f32.mrf.mxu0
  %v2434 = vadd.f32 0.0, %v2433
  %2435 = vmatmul.f32.gmra.mxu0 %v361
  %v2436 = vpop.f32.mrf.mxu0
  %v2437 = vadd.f32 0.0, %v2436
  %2438 = vmatmul.f32.gmra.mxu0 %v364
  %v2439 = vpop.f32.mrf.mxu0
  %v2440 = vadd.f32 0.0, %v2439
  %2441 = vmatmul.f32.gmra.mxu0 %v367
  %v2442 = vpop.f32.mrf.mxu0
  %v2443 = vadd.f32 0.0, %v2442
  %2444 = vmatmul.f32.gmra.mxu0 %v370
  %v2445 = vpop.f32.mrf.mxu0
  %v2446 = vadd.f32 0.0, %v2445
  %2447 = vmatmul.f32.gmra.mxu0 %v373
  %v2448 = vpop.f32.mrf.mxu0
  %v2449 = vadd.f32 0.0, %v2448
  %2450 = vmatmul.f32.gmra.mxu0 %v376
  %v2451 = vpop.f32.mrf.mxu0
  %v2452 = vadd.f32 0.0, %v2451
  %2453 = vmatmul.f32.gmra.mxu0 %v379
  %v2454 = vpop.f32.mrf.mxu0
  %2455 = vmatmul.f32.gmra.mxu0 %v1643
  %v2456 = vpop.f32.mrf.mxu0
  %v2457 = vadd.f32 0.0, %v2456
  %2458 = vmatmul.f32.gmra.mxu0 %v385
  %v2459 = vpop.f32.mrf.mxu0
  %v2460 = vadd.f32 0.0, %v2459
  %2461 = vmatmul.f32.gmra.mxu0 %v388
  %v2462 = vpop.f32.mrf.mxu0
  %v2463 = vadd.f32 0.0, %v2462
  %2464 = vmatmul.f32.gmra.mxu0 %v391
  %v2465 = vpop.f32.mrf.mxu0
  %v2466 = vadd.f32 0.0, %v2465
  %2467 = vmatmul.f32.gmra.mxu0 %v394
  %v2468 = vpop.f32.mrf.mxu0
  %v2469 = vadd.f32 0.0, %v2468
  %2470 = vmatmul.f32.gmra.mxu0 %v397
  %v2471 = vpop.f32.mrf.mxu0
  %v2472 = vadd.f32 0.0, %v2471
  %2473 = vmatmul.f32.gmra.mxu0 %v400
  %v2474 = vpop.f32.mrf.mxu0
  %v2475 = vadd.f32 0.0, %v2474
  %2476 = vmatmul.f32.gmra.mxu0 %v403
  %v2477 = vpop.f32.mrf.mxu0
  %v2478 = vadd.f32 0.0, %v2477
  %2479 = vmatmul.f32.gmra.mxu0 %v406
  %v2480 = vpop.f32.mrf.mxu0
  %v2481 = vadd.f32 0.0, %v2480
  %2482 = vmatmul.f32.gmra.mxu0 %v409
  %v2483 = vpop.f32.mrf.mxu0
  %v2484 = vadd.f32 0.0, %v2483
  %2485 = vmatmul.f32.gmra.mxu0 %v412
  %v2486 = vpop.f32.mrf.mxu0
  %v2487 = vadd.f32 0.0, %v2486
  %2488 = vmatmul.f32.gmra.mxu0 %v415
  %v2489 = vpop.f32.mrf.mxu0
  %v2490 = vadd.f32 0.0, %v2489
  %2491 = vmatmul.f32.gmra.mxu0 %v418
  %v2492 = vpop.f32.mrf.mxu0
  %v2493 = vadd.f32 0.0, %v2492
  %2494 = vmatmul.f32.gmra.mxu0 %v421
  %v2495 = vpop.f32.mrf.mxu0
  %v2496 = vadd.f32 0.0, %v2495
  %2497 = vmatmul.f32.gmra.mxu0 %v424
  %v2498 = vpop.f32.mrf.mxu0
  %2499 = vmatmul.f32.gmra.mxu0 %v1646
  %v2500 = vpop.f32.mrf.mxu0
  %v2501 = vadd.f32 0.0, %v2500
  %2502 = vmatmul.f32.gmra.mxu0 %v430
  %v2503 = vpop.f32.mrf.mxu0
  %v2504 = vadd.f32 0.0, %v2503
  %2505 = vmatmul.f32.gmra.mxu0 %v433
  %v2506 = vpop.f32.mrf.mxu0
  %v2507 = vadd.f32 0.0, %v2506
  %2508 = vmatmul.f32.gmra.mxu0 %v436
  %v2509 = vpop.f32.mrf.mxu0
  %v2510 = vadd.f32 0.0, %v2509
  %2511 = vmatmul.f32.gmra.mxu0 %v439
  %v2512 = vpop.f32.mrf.mxu0
  %v2513 = vadd.f32 0.0, %v2512
  %2514 = vmatmul.f32.gmra.mxu0 %v442
  %v2515 = vpop.f32.mrf.mxu0
  %v2516 = vadd.f32 0.0, %v2515
  %2517 = vmatmul.f32.gmra.mxu0 %v445
  %v2518 = vpop.f32.mrf.mxu0
  %v2519 = vadd.f32 0.0, %v2518
  %2520 = vmatmul.f32.gmra.mxu0 %v448
  %v2521 = vpop.f32.mrf.mxu0
  %v2522 = vadd.f32 0.0, %v2521
  %2523 = vmatmul.f32.gmra.mxu0 %v451
  %v2524 = vpop.f32.mrf.mxu0
  %v2525 = vadd.f32 0.0, %v2524
  %2526 = vmatmul.f32.gmra.mxu0 %v454
  %v2527 = vpop.f32.mrf.mxu0
  %v2528 = vadd.f32 0.0, %v2527
  %2529 = vmatmul.f32.gmra.mxu0 %v457
  %v2530 = vpop.f32.mrf.mxu0
  %v2531 = vadd.f32 0.0, %v2530
  %2532 = vmatmul.f32.gmra.mxu0 %v460
  %v2533 = vpop.f32.mrf.mxu0
  %v2534 = vadd.f32 0.0, %v2533
  %2535 = vmatmul.f32.gmra.mxu0 %v463
  %v2536 = vpop.f32.mrf.mxu0
  %v2537 = vadd.f32 0.0, %v2536
  %2538 = vmatmul.f32.gmra.mxu0 %v466
  %v2539 = vpop.f32.mrf.mxu0
  %v2540 = vadd.f32 0.0, %v2539
  %2541 = vmatmul.f32.gmra.mxu0 %v469
  %v2542 = vpop.f32.mrf.mxu0
  %2543 = vmatmul.f32.gmra.mxu0 %v1649
  %v2544 = vpop.f32.mrf.mxu0
  %v2545 = vadd.f32 0.0, %v2544
  %2546 = vmatmul.f32.gmra.mxu0 %v475
  %v2547 = vpop.f32.mrf.mxu0
  %v2548 = vadd.f32 0.0, %v2547
  %2549 = vmatmul.f32.gmra.mxu0 %v478
  %v2550 = vpop.f32.mrf.mxu0
  %v2551 = vadd.f32 0.0, %v2550
  %2552 = vmatmul.f32.gmra.mxu0 %v481
  %v2553 = vpop.f32.mrf.mxu0
  %v2554 = vadd.f32 0.0, %v2553
  %2555 = vmatmul.f32.gmra.mxu0 %v484
  %v2556 = vpop.f32.mrf.mxu0
  %v2557 = vadd.f32 0.0, %v2556
  %2558 = vmatmul.f32.gmra.mxu0 %v487
  %v2559 = vpop.f32.mrf.mxu0
  %v2560 = vadd.f32 0.0, %v2559
  %2561 = vmatmul.f32.gmra.mxu0 %v490
  %v2562 = vpop.f32.mrf.mxu0
  %v2563 = vadd.f32 0.0, %v2562
  %2564 = vmatmul.f32.gmra.mxu0 %v493
  %v2565 = vpop.f32.mrf.mxu0
  %v2566 = vadd.f32 0.0, %v2565
  %2567 = vmatmul.f32.gmra.mxu0 %v496
  %v2568 = vpop.f32.mrf.mxu0
  %v2569 = vadd.f32 0.0, %v2568
  %2570 = vmatmul.f32.gmra.mxu0 %v499
  %v2571 = vpop.f32.mrf.mxu0
  %v2572 = vadd.f32 0.0, %v2571
  %2573 = vmatmul.f32.gmra.mxu0 %v502
  %v2574 = vpop.f32.mrf.mxu0
  %v2575 = vadd.f32 0.0, %v2574
  %2576 = vmatmul.f32.gmra.mxu0 %v505
  %v2577 = vpop.f32.mrf.mxu0
  %v2578 = vadd.f32 0.0, %v2577
  %2579 = vmatmul.f32.gmra.mxu0 %v508
  %v2580 = vpop.f32.mrf.mxu0
  %v2581 = vadd.f32 0.0, %v2580
  %2582 = vmatmul.f32.gmra.mxu0 %v511
  %v2583 = vpop.f32.mrf.mxu0
  %v2584 = vadd.f32 0.0, %v2583
  %2585 = vmatmul.f32.gmra.mxu0 %v514
  %v2586 = vpop.f32.mrf.mxu0
  %2587 = vmatmul.f32.gmra.mxu0 %v1652
  %v2588 = vpop.f32.mrf.mxu0
  %v2589 = vadd.f32 0.0, %v2588
  %2590 = vmatmul.f32.gmra.mxu0 %v520
  %v2591 = vpop.f32.mrf.mxu0
  %v2592 = vadd.f32 0.0, %v2591
  %2593 = vmatmul.f32.gmra.mxu0 %v523
  %v2594 = vpop.f32.mrf.mxu0
  %v2595 = vadd.f32 0.0, %v2594
  %2596 = vmatmul.f32.gmra.mxu0 %v526
  %v2597 = vpop.f32.mrf.mxu0
  %v2598 = vadd.f32 0.0, %v2597
  %2599 = vmatmul.f32.gmra.mxu0 %v529
  %v2600 = vpop.f32.mrf.mxu0
  %v2601 = vadd.f32 0.0, %v2600
  %2602 = vmatmul.f32.gmra.mxu0 %v532
  %v2603 = vpop.f32.mrf.mxu0
  %v2604 = vadd.f32 0.0, %v2603
  %2605 = vmatmul.f32.gmra.mxu0 %v535
  %v2606 = vpop.f32.mrf.mxu0
  %v2607 = vadd.f32 0.0, %v2606
  %2608 = vmatmul.f32.gmra.mxu0 %v538
  %v2609 = vpop.f32.mrf.mxu0
  %v2610 = vadd.f32 0.0, %v2609
  %2611 = vmatmul.f32.gmra.mxu0 %v541
  %v2612 = vpop.f32.mrf.mxu0
  %v2613 = vadd.f32 0.0, %v2612
  %2614 = vmatmul.f32.gmra.mxu0 %v544
  %v2615 = vpop.f32.mrf.mxu0
  %v2616 = vadd.f32 0.0, %v2615
  %2617 = vmatmul.f32.gmra.mxu0 %v547
  %v2618 = vpop.f32.mrf.mxu0
  %v2619 = vadd.f32 0.0, %v2618
  %2620 = vmatmul.f32.gmra.mxu0 %v550
  %v2621 = vpop.f32.mrf.mxu0
  %v2622 = vadd.f32 0.0, %v2621
  %2623 = vmatmul.f32.gmra.mxu0 %v553
  %v2624 = vpop.f32.mrf.mxu0
  %v2625 = vadd.f32 0.0, %v2624
  %2626 = vmatmul.f32.gmra.mxu0 %v556
  %v2627 = vpop.f32.mrf.mxu0
  %v2628 = vadd.f32 0.0, %v2627
  %2629 = vmatmul.f32.gmra.mxu0 %v559
  %v2630 = vpop.f32.mrf.mxu0
  %2631 = vmatmul.f32.gmra.mxu0 %v1655
  %v2632 = vpop.f32.mrf.mxu0
  %v2633 = vadd.f32 0.0, %v2632
  %2634 = vmatmul.f32.gmra.mxu0 %v565
  %v2635 = vpop.f32.mrf.mxu0
  %v2636 = vadd.f32 0.0, %v2635
  %2637 = vmatmul.f32.gmra.mxu0 %v568
  %v2638 = vpop.f32.mrf.mxu0
  %v2639 = vadd.f32 0.0, %v2638
  %2640 = vmatmul.f32.gmra.mxu0 %v571
  %v2641 = vpop.f32.mrf.mxu0
  %v2642 = vadd.f32 0.0, %v2641
  %2643 = vmatmul.f32.gmra.mxu0 %v574
  %v2644 = vpop.f32.mrf.mxu0
  %v2645 = vadd.f32 0.0, %v2644
  %2646 = vmatmul.f32.gmra.mxu0 %v577
  %v2647 = vpop.f32.mrf.mxu0
  %v2648 = vadd.f32 0.0, %v2647
  %2649 = vmatmul.f32.gmra.mxu0 %v580
  %v2650 = vpop.f32.mrf.mxu0
  %v2651 = vadd.f32 0.0, %v2650
  %2652 = vmatmul.f32.gmra.mxu0 %v583
  %v2653 = vpop.f32.mrf.mxu0
  %v2654 = vadd.f32 0.0, %v2653
  %2655 = vmatmul.f32.gmra.mxu0 %v586
  %v2656 = vpop.f32.mrf.mxu0
  %v2657 = vadd.f32 0.0, %v2656
  %2658 = vmatmul.f32.gmra.mxu0 %v589
  %v2659 = vpop.f32.mrf.mxu0
  %v2660 = vadd.f32 0.0, %v2659
  %2661 = vmatmul.f32.gmra.mxu0 %v592
  %v2662 = vpop.f32.mrf.mxu0
  %v2663 = vadd.f32 0.0, %v2662
  %2664 = vmatmul.f32.gmra.mxu0 %v595
  %v2665 = vpop.f32.mrf.mxu0
  %v2666 = vadd.f32 0.0, %v2665
  %2667 = vmatmul.f32.gmra.mxu0 %v598
  %v2668 = vpop.f32.mrf.mxu0
  %v2669 = vadd.f32 0.0, %v2668
  %2670 = vmatmul.f32.gmra.mxu0 %v601
  %v2671 = vpop.f32.mrf.mxu0
  %v2672 = vadd.f32 0.0, %v2671
  %2673 = vmatmul.f32.gmra.mxu0 %v604
  %v2674 = vpop.f32.mrf.mxu0
  %2675 = vmatmul.f32.gmra.mxu0 %v1658
  %v2676 = vpop.f32.mrf.mxu0
  %v2677 = vadd.f32 0.0, %v2676
  %2678 = vmatmul.f32.gmra.mxu0 %v610
  %v2679 = vpop.f32.mrf.mxu0
  %v2680 = vadd.f32 0.0, %v2679
  %2681 = vmatmul.f32.gmra.mxu0 %v613
  %v2682 = vpop.f32.mrf.mxu0
  %v2683 = vadd.f32 0.0, %v2682
  %2684 = vmatmul.f32.gmra.mxu0 %v616
  %v2685 = vpop.f32.mrf.mxu0
  %v2686 = vadd.f32 0.0, %v2685
  %2687 = vmatmul.f32.gmra.mxu0 %v619
  %v2688 = vpop.f32.mrf.mxu0
  %v2689 = vadd.f32 0.0, %v2688
  %2690 = vmatmul.f32.gmra.mxu0 %v622
  %v2691 = vpop.f32.mrf.mxu0
  %v2692 = vadd.f32 0.0, %v2691
  %2693 = vmatmul.f32.gmra.mxu0 %v625
  %v2694 = vpop.f32.mrf.mxu0
  %v2695 = vadd.f32 0.0, %v2694
  %2696 = vmatmul.f32.gmra.mxu0 %v628
  %v2697 = vpop.f32.mrf.mxu0
  %v2698 = vadd.f32 0.0, %v2697
  %2699 = vmatmul.f32.gmra.mxu0 %v631
  %v2700 = vpop.f32.mrf.mxu0
  %v2701 = vadd.f32 0.0, %v2700
  %2702 = vmatmul.f32.gmra.mxu0 %v634
  %v2703 = vpop.f32.mrf.mxu0
  %v2704 = vadd.f32 0.0, %v2703
  %2705 = vmatmul.f32.gmra.mxu0 %v637
  %v2706 = vpop.f32.mrf.mxu0
  %v2707 = vadd.f32 0.0, %v2706
  %2708 = vmatmul.f32.gmra.mxu0 %v640
  %v2709 = vpop.f32.mrf.mxu0
  %v2710 = vadd.f32 0.0, %v2709
  %2711 = vmatmul.f32.gmra.mxu0 %v643
  %v2712 = vpop.f32.mrf.mxu0
  %v2713 = vadd.f32 0.0, %v2712
  %2714 = vmatmul.f32.gmra.mxu0 %v646
  %v2715 = vpop.f32.mrf.mxu0
  %v2716 = vadd.f32 0.0, %v2715
  %2717 = vmatmul.f32.gmra.mxu0 %v649
  %v2718 = vpop.f32.mrf.mxu0
  %2719 = vmatmul.f32.gmra.mxu0 %v1661
  %v2720 = vpop.f32.mrf.mxu0
  %v2721 = vadd.f32 0.0, %v2720
  %2722 = vmatmul.f32.gmra.mxu0 %v655
  %v2723 = vpop.f32.mrf.mxu0
  %v2724 = vadd.f32 0.0, %v2723
  %2725 = vmatmul.f32.gmra.mxu0 %v658
  %v2726 = vpop.f32.mrf.mxu0
  %v2727 = vadd.f32 0.0, %v2726
  %2728 = vmatmul.f32.gmra.mxu0 %v661
  %v2729 = vpop.f32.mrf.mxu0
  %v2730 = vadd.f32 0.0, %v2729
  %2731 = vmatmul.f32.gmra.mxu0 %v664
  %v2732 = vpop.f32.mrf.mxu0
  %v2733 = vadd.f32 0.0, %v2732
  %2734 = vmatmul.f32.gmra.mxu0 %v667
  %v2735 = vpop.f32.mrf.mxu0
  %v2736 = vadd.f32 0.0, %v2735
  %2737 = vmatmul.f32.gmra.mxu0 %v670
  %v2738 = vpop.f32.mrf.mxu0
  %v2739 = vadd.f32 0.0, %v2738
  %2740 = vmatmul.f32.gmra.mxu0 %v673
  %v2741 = vpop.f32.mrf.mxu0
  %v2742 = vadd.f32 0.0, %v2741
  %2743 = vmatmul.f32.gmra.mxu0 %v676
  %v2744 = vpop.f32.mrf.mxu0
  %v2745 = vadd.f32 0.0, %v2744
  %2746 = vmatmul.f32.gmra.mxu0 %v679
  %v2747 = vpop.f32.mrf.mxu0
  %v2748 = vadd.f32 0.0, %v2747
  %2749 = vmatmul.f32.gmra.mxu0 %v682
  %v2750 = vpop.f32.mrf.mxu0
  %v2751 = vadd.f32 0.0, %v2750
  %2752 = vmatmul.f32.gmra.mxu0 %v685
  %v2753 = vpop.f32.mrf.mxu0
  %v2754 = vadd.f32 0.0, %v2753
  %2755 = vmatmul.f32.gmra.mxu0 %v688
  %v2756 = vpop.f32.mrf.mxu0
  %v2757 = vadd.f32 0.0, %v2756
  %2758 = vmatmul.f32.gmra.mxu0 %v691
  %v2759 = vpop.f32.mrf.mxu0
  %v2760 = vadd.f32 0.0, %v2759
  %2761 = vmatmul.f32.gmra.mxu0 %v694
  %v2762 = vpop.f32.mrf.mxu0
  %2763 = vmatmul.f32.gmra.mxu0 %v1664
  %v2764 = vpop.f32.mrf.mxu0
  %v2765 = vadd.f32 0.0, %v2764
  %2766 = vmatmul.f32.gmra.mxu0 %v700
  %v2767 = vpop.f32.mrf.mxu0
  %v2768 = vadd.f32 0.0, %v2767
  %2769 = vmatmul.f32.gmra.mxu0 %v703
  %v2770 = vpop.f32.mrf.mxu0
  %v2771 = vadd.f32 0.0, %v2770
  %2772 = vmatmul.f32.gmra.mxu0 %v706
  %v2773 = vpop.f32.mrf.mxu0
  %v2774 = vadd.f32 0.0, %v2773
  %2775 = vmatmul.f32.gmra.mxu0 %v709
  %v2776 = vpop.f32.mrf.mxu0
  %v2777 = vadd.f32 0.0, %v2776
  %2778 = vmatmul.f32.gmra.mxu0 %v712
  %v2779 = vpop.f32.mrf.mxu0
  %v2780 = vadd.f32 0.0, %v2779
  %2781 = vmatmul.f32.gmra.mxu0 %v715
  %v2782 = vpop.f32.mrf.mxu0
  %v2783 = vadd.f32 0.0, %v2782
  %2784 = vmatmul.f32.gmra.mxu0 %v718
  %v2785 = vpop.f32.mrf.mxu0
  %v2786 = vadd.f32 0.0, %v2785
  %2787 = vmatmul.f32.gmra.mxu0 %v721
  %v2788 = vpop.f32.mrf.mxu0
  %v2789 = vadd.f32 0.0, %v2788
  %2790 = vmatmul.f32.gmra.mxu0 %v724
  %v2791 = vpop.f32.mrf.mxu0
  %v2792 = vadd.f32 0.0, %v2791
  %2793 = vmatmul.f32.gmra.mxu0 %v727
  %v2794 = vpop.f32.mrf.mxu0
  %v2795 = vadd.f32 0.0, %v2794
  %2796 = vmatmul.f32.gmra.mxu0 %v730
  %v2797 = vpop.f32.mrf.mxu0
  %v2798 = vadd.f32 0.0, %v2797
  %2799 = vmatmul.f32.gmra.mxu0 %v733
  %v2800 = vpop.f32.mrf.mxu0
  %v2801 = vadd.f32 0.0, %v2800
  %2802 = vmatmul.f32.gmra.mxu0 %v736
  %v2803 = vpop.f32.mrf.mxu0
  %v2804 = vadd.f32 0.0, %v2803
  %2805 = vmatmul.f32.gmra.mxu0 %v739
  %v2806 = vpop.f32.mrf.mxu0
  %2807 = vmatmul.f32.gmra.mxu0 %v1667
  %v2808 = vpop.f32.mrf.mxu0
  %v2809 = vadd.f32 0.0, %v2808
  %2810 = vmatmul.f32.gmra.mxu0 %v745
  %v2811 = vpop.f32.mrf.mxu0
  %v2812 = vadd.f32 0.0, %v2811
  %2813 = vmatmul.f32.gmra.mxu0 %v748
  %v2814 = vpop.f32.mrf.mxu0
  %v2815 = vadd.f32 0.0, %v2814
  %2816 = vmatmul.f32.gmra.mxu0 %v751
  %v2817 = vpop.f32.mrf.mxu0
  %v2818 = vadd.f32 0.0, %v2817
  %2819 = vmatmul.f32.gmra.mxu0 %v754
  %v2820 = vpop.f32.mrf.mxu0
  %v2821 = vadd.f32 0.0, %v2820
  %2822 = vmatmul.f32.gmra.mxu0 %v757
  %v2823 = vpop.f32.mrf.mxu0
  %v2824 = vadd.f32 0.0, %v2823
  %2825 = vmatmul.f32.gmra.mxu0 %v760
  %v2826 = vpop.f32.mrf.mxu0
  %v2827 = vadd.f32 0.0, %v2826
  %2828 = vmatmul.f32.gmra.mxu0 %v763
  %v2829 = vpop.f32.mrf.mxu0
  %v2830 = vadd.f32 0.0, %v2829
  %2831 = vmatmul.f32.gmra.mxu0 %v766
  %v2832 = vpop.f32.mrf.mxu0
  %v2833 = vadd.f32 0.0, %v2832
  %2834 = vmatmul.f32.gmra.mxu0 %v769
  %v2835 = vpop.f32.mrf.mxu0
  %v2836 = vadd.f32 0.0, %v2835
  %2837 = vmatmul.f32.gmra.mxu0 %v772
  %v2838 = vpop.f32.mrf.mxu0
  %v2839 = vadd.f32 0.0, %v2838
  %2840 = vmatmul.f32.gmra.mxu0 %v775
  %v2841 = vpop.f32.mrf.mxu0
  %v2842 = vadd.f32 0.0, %v2841
  %2843 = vmatmul.f32.gmra.mxu0 %v778
  %v2844 = vpop.f32.mrf.mxu0
  %v2845 = vadd.f32 0.0, %v2844
  %2846 = vmatmul.f32.gmra.mxu0 %v781
  %v2847 = vpop.f32.mrf.mxu0
  %v2848 = vadd.f32 0.0, %v2847
  %2849 = vmatmul.f32.gmra.mxu0 %v784
  %v2850 = vpop.f32.mrf.mxu0
  %2851 = vmatmul.f32.gmra.mxu0 %v1670
  %v2852 = vpop.f32.mrf.mxu0
  %v2853 = vadd.f32 0.0, %v2852
  %2854 = vmatmul.f32.gmra.mxu0 %v790
  %v2855 = vpop.f32.mrf.mxu0
  %v2856 = vadd.f32 0.0, %v2855
  %2857 = vmatmul.f32.gmra.mxu0 %v793
  %v2858 = vpop.f32.mrf.mxu0
  %v2859 = vadd.f32 0.0, %v2858
  %2860 = vmatmul.f32.gmra.mxu0 %v796
  %v2861 = vpop.f32.mrf.mxu0
  %v2862 = vadd.f32 0.0, %v2861
  %2863 = vmatmul.f32.gmra.mxu0 %v799
  %v2864 = vpop.f32.mrf.mxu0
  %v2865 = vadd.f32 0.0, %v2864
  %2866 = vmatmul.f32.gmra.mxu0 %v802
  %v2867 = vpop.f32.mrf.mxu0
  %v2868 = vadd.f32 0.0, %v2867
  %2869 = vmatmul.f32.gmra.mxu0 %v805
  %v2870 = vpop.f32.mrf.mxu0
  %v2871 = vadd.f32 0.0, %v2870
  %2872 = vmatmul.f32.gmra.mxu0 %v808
  %v2873 = vpop.f32.mrf.mxu0
  %v2874 = vadd.f32 0.0, %v2873
  %2875 = vmatmul.f32.gmra.mxu0 %v811
  %v2876 = vpop.f32.mrf.mxu0
  %v2877 = vadd.f32 0.0, %v2876
  %2878 = vmatmul.f32.gmra.mxu0 %v814
  %v2879 = vpop.f32.mrf.mxu0
  %v2880 = vadd.f32 0.0, %v2879
  %2881 = vmatmul.f32.gmra.mxu0 %v817
  %v2882 = vpop.f32.mrf.mxu0
  %v2883 = vadd.f32 0.0, %v2882
  %2884 = vmatmul.f32.gmra.mxu0 %v820
  %v2885 = vpop.f32.mrf.mxu0
  %v2886 = vadd.f32 0.0, %v2885
  %2887 = vmatmul.f32.gmra.mxu0 %v823
  %v2888 = vpop.f32.mrf.mxu0
  %v2889 = vadd.f32 0.0, %v2888
  %2890 = vmatmul.f32.gmra.mxu0 %v826
  %v2891 = vpop.f32.mrf.mxu0
  %v2892 = vadd.f32 0.0, %v2891
  %2893 = vmatmul.f32.gmra.mxu0 %v829
  %v2894 = vpop.f32.mrf.mxu0
  %2895 = vmatmul.f32.gmra.mxu0 %v1673
  %v2896 = vpop.f32.mrf.mxu0
  %v2897 = vadd.f32 0.0, %v2896
  %2898 = vmatmul.f32.gmra.mxu0 %v835
  %v2899 = vpop.f32.mrf.mxu0
  %v2900 = vadd.f32 0.0, %v2899
  %2901 = vmatmul.f32.gmra.mxu0 %v838
  %v2902 = vpop.f32.mrf.mxu0
  %v2903 = vadd.f32 0.0, %v2902
  %2904 = vmatmul.f32.gmra.mxu0 %v841
  %v2905 = vpop.f32.mrf.mxu0
  %v2906 = vadd.f32 0.0, %v2905
  %2907 = vmatmul.f32.gmra.mxu0 %v844
  %v2908 = vpop.f32.mrf.mxu0
  %v2909 = vadd.f32 0.0, %v2908
  %2910 = vmatmul.f32.gmra.mxu0 %v847
  %v2911 = vpop.f32.mrf.mxu0
  %v2912 = vadd.f32 0.0, %v2911
  %2913 = vmatmul.f32.gmra.mxu0 %v850
  %v2914 = vpop.f32.mrf.mxu0
  %v2915 = vadd.f32 0.0, %v2914
  %2916 = vmatmul.f32.gmra.mxu0 %v853
  %v2917 = vpop.f32.mrf.mxu0
  %v2918 = vadd.f32 0.0, %v2917
  %2919 = vmatmul.f32.gmra.mxu0 %v856
  %v2920 = vpop.f32.mrf.mxu0
  %v2921 = vadd.f32 0.0, %v2920
  %2922 = vmatmul.f32.gmra.mxu0 %v859
  %v2923 = vpop.f32.mrf.mxu0
  %v2924 = vadd.f32 0.0, %v2923
  %2925 = vmatmul.f32.gmra.mxu0 %v862
  %v2926 = vpop.f32.mrf.mxu0
  %v2927 = vadd.f32 0.0, %v2926
  %2928 = vmatmul.f32.gmra.mxu0 %v865
  %v2929 = vpop.f32.mrf.mxu0
  %v2930 = vadd.f32 0.0, %v2929
  %2931 = vmatmul.f32.gmra.mxu0 %v868
  %v2932 = vpop.f32.mrf.mxu0
  %v2933 = vadd.f32 0.0, %v2932
  %2934 = vmatmul.f32.gmra.mxu0 %v871
  %v2935 = vpop.f32.mrf.mxu0
  %v2936 = vadd.f32 0.0, %v2935
  %2937 = vmatmul.f32.gmra.mxu0 %v874
  %v2938 = vpop.f32.mrf.mxu0
  %2939 = vmatmul.f32.gmra.mxu0 %v1676
  %v2940 = vpop.f32.mrf.mxu0
  %v2941 = vadd.f32 0.0, %v2940
  %2942 = vmatmul.f32.gmra.mxu0 %v880
  %v2943 = vpop.f32.mrf.mxu0
  %v2944 = vadd.f32 0.0, %v2943
  %2945 = vmatmul.f32.gmra.mxu0 %v883
  %v2946 = vpop.f32.mrf.mxu0
  %v2947 = vadd.f32 0.0, %v2946
  %2948 = vmatmul.f32.gmra.mxu0 %v886
  %v2949 = vpop.f32.mrf.mxu0
  %v2950 = vadd.f32 0.0, %v2949
  %2951 = vmatmul.f32.gmra.mxu0 %v889
  %v2952 = vpop.f32.mrf.mxu0
  %v2953 = vadd.f32 0.0, %v2952
  %2954 = vmatmul.f32.gmra.mxu0 %v892
  %v2955 = vpop.f32.mrf.mxu0
  %v2956 = vadd.f32 0.0, %v2955
  %2957 = vmatmul.f32.gmra.mxu0 %v895
  %v2958 = vpop.f32.mrf.mxu0
  %v2959 = vadd.f32 0.0, %v2958
  %2960 = vmatmul.f32.gmra.mxu0 %v898
  %v2961 = vpop.f32.mrf.mxu0
  %v2962 = vadd.f32 0.0, %v2961
  %2963 = vmatmul.f32.gmra.mxu0 %v901
  %v2964 = vpop.f32.mrf.mxu0
  %v2965 = vadd.f32 0.0, %v2964
  %2966 = vmatmul.f32.gmra.mxu0 %v904
  %v2967 = vpop.f32.mrf.mxu0
  %v2968 = vadd.f32 0.0, %v2967
  %2969 = vmatmul.f32.gmra.mxu0 %v907
  %v2970 = vpop.f32.mrf.mxu0
  %v2971 = vadd.f32 0.0, %v2970
  %2972 = vmatmul.f32.gmra.mxu0 %v910
  %v2973 = vpop.f32.mrf.mxu0
  %v2974 = vadd.f32 0.0, %v2973
  %2975 = vmatmul.f32.gmra.mxu0 %v913
  %v2976 = vpop.f32.mrf.mxu0
  %v2977 = vadd.f32 0.0, %v2976
  %2978 = vmatmul.f32.gmra.mxu0 %v916
  %v2979 = vpop.f32.mrf.mxu0
  %v2980 = vadd.f32 0.0, %v2979
  %2981 = vmatmul.f32.gmra.mxu0 %v919
  %v2982 = vpop.f32.mrf.mxu0
  %2983 = vmatmul.f32.gmra.mxu0 %v1679
  %v2984 = vpop.f32.mrf.mxu0
  %v2985 = vadd.f32 0.0, %v2984
  %2986 = vmatmul.f32.gmra.mxu0 %v925
  %v2987 = vpop.f32.mrf.mxu0
  %v2988 = vadd.f32 0.0, %v2987
  %2989 = vmatmul.f32.gmra.mxu0 %v928
  %v2990 = vpop.f32.mrf.mxu0
  %v2991 = vadd.f32 0.0, %v2990
  %2992 = vmatmul.f32.gmra.mxu0 %v931
  %v2993 = vpop.f32.mrf.mxu0
  %v2994 = vadd.f32 0.0, %v2993
  %2995 = vmatmul.f32.gmra.mxu0 %v934
  %v2996 = vpop.f32.mrf.mxu0
  %v2997 = vadd.f32 0.0, %v2996
  %2998 = vmatmul.f32.gmra.mxu0 %v937
  %v2999 = vpop.f32.mrf.mxu0
  %v3000 = vadd.f32 0.0, %v2999
  %3001 = vmatmul.f32.gmra.mxu0 %v940
  %v3002 = vpop.f32.mrf.mxu0
  %v3003 = vadd.f32 0.0, %v3002
  %3004 = vmatmul.f32.gmra.mxu0 %v943
  %v3005 = vpop.f32.mrf.mxu0
  %v3006 = vadd.f32 0.0, %v3005
  %3007 = vmatmul.f32.gmra.mxu0 %v946
  %v3008 = vpop.f32.mrf.mxu0
  %v3009 = vadd.f32 0.0, %v3008
  %3010 = vmatmul.f32.gmra.mxu0 %v949
  %v3011 = vpop.f32.mrf.mxu0
  %v3012 = vadd.f32 0.0, %v3011
  %3013 = vmatmul.f32.gmra.mxu0 %v952
  %v3014 = vpop.f32.mrf.mxu0
  %v3015 = vadd.f32 0.0, %v3014
  %3016 = vmatmul.f32.gmra.mxu0 %v955
  %v3017 = vpop.f32.mrf.mxu0
  %v3018 = vadd.f32 0.0, %v3017
  %3019 = vmatmul.f32.gmra.mxu0 %v958
  %v3020 = vpop.f32.mrf.mxu0
  %v3021 = vadd.f32 0.0, %v3020
  %3022 = vmatmul.f32.gmra.mxu0 %v961
  %v3023 = vpop.f32.mrf.mxu0
  %v3024 = vadd.f32 0.0, %v3023
  %3025 = vmatmul.f32.gmra.mxu0 %v964
  %v3026 = vpop.f32.mrf.mxu0
  %3027 = vmatmul.f32.gmra.mxu0 %v2348
  %v3028 = vpop.f32.mrf.mxu0
  %3029 = vmatmul.f32.gmra.mxu0 %v2351
  %v3030 = vpop.f32.mrf.mxu0
  %3031 = vmatmul.f32.gmra.mxu0 %v2354
  %v3032 = vpop.f32.mrf.mxu0
  %3033 = vmatmul.f32.gmra.mxu0 %v2357
  %v3034 = vpop.f32.mrf.mxu0
  %3035 = vmatmul.f32.gmra.mxu0 %v2360
  %v3036 = vpop.f32.mrf.mxu0
  %3037 = vmatmul.f32.gmra.mxu0 %v2363
  %v3038 = vpop.f32.mrf.mxu0
  %3039 = vmatmul.f32.gmra.mxu0 %v2366
  %v3040 = vpop.f32.mrf.mxu0
  %3041 = vmatmul.f32.gmra.mxu0 %v2369
  %v3042 = vpop.f32.mrf.mxu0
  %3043 = vmatmul.f32.gmra.mxu0 %v2372
  %v3044 = vpop.f32.mrf.mxu0
  %3045 = vmatmul.f32.gmra.mxu0 %v2375
  %v3046 = vpop.f32.mrf.mxu0
  %3047 = vmatmul.f32.gmra.mxu0 %v2378
  %v3048 = vpop.f32.mrf.mxu0
  %3049 = vmatmul.f32.gmra.mxu0 %v2381
  %v3050 = vpop.f32.mrf.mxu0
  %3051 = vmatmul.f32.gmra.mxu0 %v2384
  %v3052 = vpop.f32.mrf.mxu0
  %3053 = vmatmul.f32.gmra.mxu0 %v2387
  %v3054 = vpop.f32.mrf.mxu0
  %3055 = vmatmul.f32.gmra.mxu0 %v2390
  %v3056 = vpop.f32.mrf.mxu0
  %3057 = vdwg.mxu0
  %v3058 = vadd.f32 %v1702, %v2413
  %v3059 = vadd.f32 %v1705, %v2416
  %v3060 = vadd.f32 %v1708, %v2419
  %v3061 = vadd.f32 %v1711, %v2422
  %v3062 = vadd.f32 %v1714, %v2425
  %v3063 = vadd.f32 %v1717, %v2428
  %v3064 = vadd.f32 %v1720, %v2431
  %v3065 = vadd.f32 %v1723, %v2434
  %v3066 = vadd.f32 %v1726, %v2437
  %v3067 = vadd.f32 %v1729, %v2440
  %v3068 = vadd.f32 %v1732, %v2443
  %v3069 = vadd.f32 %v1735, %v2446
  %v3070 = vadd.f32 %v1738, %v2449
  %v3071 = vadd.f32 %v1741, %v2452
  %v3072 = vadd.f32 %v1746, %v2457
  %v3073 = vadd.f32 %v1749, %v2460
  %v3074 = vadd.f32 %v1752, %v2463
  %v3075 = vadd.f32 %v1755, %v2466
  %v3076 = vadd.f32 %v1758, %v2469
  %v3077 = vadd.f32 %v1761, %v2472
  %v3078 = vadd.f32 %v1764, %v2475
  %v3079 = vadd.f32 %v1767, %v2478
  %v3080 = vadd.f32 %v1770, %v2481
  %v3081 = vadd.f32 %v1773, %v2484
  %v3082 = vadd.f32 %v1776, %v2487
  %v3083 = vadd.f32 %v1779, %v2490
  %v3084 = vadd.f32 %v1782, %v2493
  %v3085 = vadd.f32 %v1785, %v2496
  %v3086 = vadd.f32 %v1790, %v2501
  %v3087 = vadd.f32 %v1793, %v2504
  %v3088 = vadd.f32 %v1796, %v2507
  %v3089 = vadd.f32 %v1799, %v2510
  %v3090 = vadd.f32 %v1802, %v2513
  %v3091 = vadd.f32 %v1805, %v2516
  %v3092 = vadd.f32 %v1808, %v2519
  %v3093 = vadd.f32 %v1811, %v2522
  %v3094 = vadd.f32 %v1814, %v2525
  %v3095 = vadd.f32 %v1817, %v2528
  %v3096 = vadd.f32 %v1820, %v2531
  %v3097 = vadd.f32 %v1823, %v2534
  %v3098 = vadd.f32 %v1826, %v2537
  %v3099 = vadd.f32 %v1829, %v2540
  %v3100 = vadd.f32 %v1834, %v2545
  %v3101 = vadd.f32 %v1837, %v2548
  %v3102 = vadd.f32 %v1840, %v2551
  %v3103 = vadd.f32 %v1843, %v2554
  %v3104 = vadd.f32 %v1846, %v2557
  %v3105 = vadd.f32 %v1849, %v2560
  %v3106 = vadd.f32 %v1852, %v2563
  %v3107 = vadd.f32 %v1855, %v2566
  %v3108 = vadd.f32 %v1858, %v2569
  %v3109 = vadd.f32 %v1861, %v2572
  %v3110 = vadd.f32 %v1864, %v2575
  %v3111 = vadd.f32 %v1867, %v2578
  %v3112 = vadd.f32 %v1870, %v2581
  %v3113 = vadd.f32 %v1873, %v2584
  %v3114 = vadd.f32 %v1878, %v2589
  %v3115 = vadd.f32 %v1881, %v2592
  %v3116 = vadd.f32 %v1884, %v2595
  %v3117 = vadd.f32 %v1887, %v2598
  %v3118 = vadd.f32 %v1890, %v2601
  %v3119 = vadd.f32 %v1893, %v2604
  %v3120 = vadd.f32 %v1896, %v2607
  %v3121 = vadd.f32 %v1899, %v2610
  %v3122 = vadd.f32 %v1902, %v2613
  %v3123 = vadd.f32 %v1905, %v2616
  %v3124 = vadd.f32 %v1908, %v2619
  %v3125 = vadd.f32 %v1911, %v2622
  %v3126 = vadd.f32 %v1914, %v2625
  %v3127 = vadd.f32 %v1917, %v2628
  %v3128 = vadd.f32 %v1922, %v2633
  %v3129 = vadd.f32 %v1925, %v2636
  %v3130 = vadd.f32 %v1928, %v2639
  %v3131 = vadd.f32 %v1931, %v2642
  %v3132 = vadd.f32 %v1934, %v2645
  %v3133 = vadd.f32 %v1937, %v2648
  %v3134 = vadd.f32 %v1940, %v2651
  %v3135 = vadd.f32 %v1943, %v2654
  %v3136 = vadd.f32 %v1946, %v2657
  %v3137 = vadd.f32 %v1949, %v2660
  %v3138 = vadd.f32 %v1952, %v2663
  %v3139 = vadd.f32 %v1955, %v2666
  %v3140 = vadd.f32 %v1958, %v2669
  %v3141 = vadd.f32 %v1961, %v2672
  %v3142 = vadd.f32 %v1966, %v2677
  %v3143 = vadd.f32 %v1969, %v2680
  %v3144 = vadd.f32 %v1972, %v2683
  %v3145 = vadd.f32 %v1975, %v2686
  %v3146 = vadd.f32 %v1978, %v2689
  %v3147 = vadd.f32 %v1981, %v2692
  %v3148 = vadd.f32 %v1984, %v2695
  %v3149 = vadd.f32 %v1987, %v2698
  %v3150 = vadd.f32 %v1990, %v2701
  %v3151 = vadd.f32 %v1993, %v2704
  %v3152 = vadd.f32 %v1996, %v2707
  %v3153 = vadd.f32 %v1999, %v2710
  %v3154 = vadd.f32 %v2002, %v2713
  %v3155 = vadd.f32 %v2005, %v2716
  %v3156 = vadd.f32 %v2010, %v2721
  %v3157 = vadd.f32 %v2013, %v2724
  %v3158 = vadd.f32 %v2016, %v2727
  %v3159 = vadd.f32 %v2019, %v2730
  %v3160 = vadd.f32 %v2022, %v2733
  %v3161 = vadd.f32 %v2025, %v2736
  %v3162 = vadd.f32 %v2028, %v2739
  %v3163 = vadd.f32 %v2031, %v2742
  %v3164 = vadd.f32 %v2034, %v2745
  %v3165 = vadd.f32 %v2037, %v2748
  %v3166 = vadd.f32 %v2040, %v2751
  %v3167 = vadd.f32 %v2043, %v2754
  %v3168 = vadd.f32 %v2046, %v2757
  %v3169 = vadd.f32 %v2049, %v2760
  %v3170 = vadd.f32 %v2054, %v2765
  %v3171 = vadd.f32 %v2057, %v2768
  %v3172 = vadd.f32 %v2060, %v2771
  %v3173 = vadd.f32 %v2063, %v2774
  %v3174 = vadd.f32 %v2066, %v2777
  %v3175 = vadd.f32 %v2069, %v2780
  %v3176 = vadd.f32 %v2072, %v2783
  %v3177 = vadd.f32 %v2075, %v2786
  %v3178 = vadd.f32 %v2078, %v2789
  %v3179 = vadd.f32 %v2081, %v2792
  %v3180 = vadd.f32 %v2084, %v2795
  %v3181 = vadd.f32 %v2087, %v2798
  %v3182 = vadd.f32 %v2090, %v2801
  %v3183 = vadd.f32 %v2093, %v2804
  %v3184 = vadd.f32 %v2098, %v2809
  %v3185 = vadd.f32 %v2101, %v2812
  %v3186 = vadd.f32 %v2104, %v2815
  %v3187 = vadd.f32 %v2107, %v2818
  %v3188 = vadd.f32 %v2110, %v2821
  %v3189 = vadd.f32 %v2113, %v2824
  %v3190 = vadd.f32 %v2116, %v2827
  %v3191 = vadd.f32 %v2119, %v2830
  %v3192 = vadd.f32 %v2122, %v2833
  %v3193 = vadd.f32 %v2125, %v2836
  %v3194 = vadd.f32 %v2128, %v2839
  %v3195 = vadd.f32 %v2131, %v2842
  %v3196 = vadd.f32 %v2134, %v2845
  %v3197 = vadd.f32 %v2137, %v2848
  %v3198 = vadd.f32 %v2142, %v2853
  %v3199 = vadd.f32 %v2145, %v2856
  %v3200 = vadd.f32 %v2148, %v2859
  %v3201 = vadd.f32 %v2151, %v2862
  %v3202 = vadd.f32 %v2154, %v2865
  %v3203 = vadd.f32 %v2157, %v2868
  %v3204 = vadd.f32 %v2160, %v2871
  %v3205 = vadd.f32 %v2163, %v2874
  %v3206 = vadd.f32 %v2166, %v2877
  %v3207 = vadd.f32 %v2169, %v2880
  %v3208 = vadd.f32 %v2172, %v2883
  %v3209 = vadd.f32 %v2175, %v2886
  %v3210 = vadd.f32 %v2178, %v2889
  %v3211 = vadd.f32 %v2181, %v2892
  %v3212 = vadd.f32 %v2186, %v2897
  %v3213 = vadd.f32 %v2189, %v2900
  %v3214 = vadd.f32 %v2192, %v2903
  %v3215 = vadd.f32 %v2195, %v2906
  %v3216 = vadd.f32 %v2198, %v2909
  %v3217 = vadd.f32 %v2201, %v2912
  %v3218 = vadd.f32 %v2204, %v2915
  %v3219 = vadd.f32 %v2207, %v2918
  %v3220 = vadd.f32 %v2210, %v2921
  %v3221 = vadd.f32 %v2213, %v2924
  %v3222 = vadd.f32 %v2216, %v2927
  %v3223 = vadd.f32 %v2219, %v2930
  %v3224 = vadd.f32 %v2222, %v2933
  %v3225 = vadd.f32 %v2225, %v2936
  %v3226 = vadd.f32 %v2230, %v2941
  %v3227 = vadd.f32 %v2233, %v2944
  %v3228 = vadd.f32 %v2236, %v2947
  %v3229 = vadd.f32 %v2239, %v2950
  %v3230 = vadd.f32 %v2242, %v2953
  %v3231 = vadd.f32 %v2245, %v2956
  %v3232 = vadd.f32 %v2248, %v2959
  %v3233 = vadd.f32 %v2251, %v2962
  %v3234 = vadd.f32 %v2254, %v2965
  %v3235 = vadd.f32 %v2257, %v2968
  %v3236 = vadd.f32 %v2260, %v2971
  %v3237 = vadd.f32 %v2263, %v2974
  %v3238 = vadd.f32 %v2266, %v2977
  %v3239 = vadd.f32 %v2269, %v2980
  %v3240 = vadd.f32 %v2274, %v2985
  %v3241 = vadd.f32 %v2277, %v2988
  %v3242 = vadd.f32 %v2280, %v2991
  %v3243 = vadd.f32 %v2283, %v2994
  %v3244 = vadd.f32 %v2286, %v2997
  %v3245 = vadd.f32 %v2289, %v3000
  %v3246 = vadd.f32 %v2292, %v3003
  %v3247 = vadd.f32 %v2295, %v3006
  %v3248 = vadd.f32 %v2298, %v3009
  %v3249 = vadd.f32 %v2301, %v3012
  %v3250 = vadd.f32 %v2304, %v3015
  %v3251 = vadd.f32 %v2307, %v3018
  %v3252 = vadd.f32 %v2310, %v3021
  %v3253 = vadd.f32 %v2313, %v3024
  %v3255 = vsel %vm293, %v287, 0
  %v3258 = vsel %vm969, %v291, 0
  %3260 = vmatpush.msra.mxu0 0.0
  %3261 = vmatpush.msra.mxu0 0.0
  %3262 = vmatpush.msra.mxu0 0.0
  %3263 = vmatpush.msra.mxu0 0.0
  %3264 = vmatpush.msra.mxu0 0.0
  %3265 = vmatpush.msra.mxu0 0.0
  %3266 = vmatpush.msra.mxu0 0.0
  %3267 = vmatpush.msra.mxu0 0.0
  %3268 = vmatpush.msra.mxu0 0.0
  %3269 = vmatpush.msra.mxu0 0.0
  %3270 = vmatpush.msra.mxu0 0.0
  %3271 = vmatpush.msra.mxu0 0.0
  %3272 = vmatpush.msra.mxu0 0.0
  %3273 = vmatpush.msra.mxu0 0.0
  %3274 = vmatpush.msra.mxu0 0.0
  %3275 = vmatpush.msra.mxu0 %v3258
  %3276 = vmatmul.f32.gmra.mxu0 %v340
  %v3277 = vpop.f32.mrf.mxu0
  %v3278 = vadd.f32 0.0, %v3277
  %3279 = vmatmul.f32.gmra.mxu0 %v343
  %v3280 = vpop.f32.mrf.mxu0
  %v3281 = vadd.f32 0.0, %v3280
  %3282 = vmatmul.f32.gmra.mxu0 %v346
  %v3283 = vpop.f32.mrf.mxu0
  %v3284 = vadd.f32 0.0, %v3283
  %3285 = vmatmul.f32.gmra.mxu0 %v349
  %v3286 = vpop.f32.mrf.mxu0
  %v3287 = vadd.f32 0.0, %v3286
  %3288 = vmatmul.f32.gmra.mxu0 %v352
  %v3289 = vpop.f32.mrf.mxu0
  %v3290 = vadd.f32 0.0, %v3289
  %3291 = vmatmul.f32.gmra.mxu0 %v355
  %v3292 = vpop.f32.mrf.mxu0
  %v3293 = vadd.f32 0.0, %v3292
  %3294 = vmatmul.f32.gmra.mxu0 %v358
  %v3295 = vpop.f32.mrf.mxu0
  %v3296 = vadd.f32 0.0, %v3295
  %3297 = vmatmul.f32.gmra.mxu0 %v361
  %v3298 = vpop.f32.mrf.mxu0
  %v3299 = vadd.f32 0.0, %v3298
  %3300 = vmatmul.f32.gmra.mxu0 %v364
  %v3301 = vpop.f32.mrf.mxu0
  %v3302 = vadd.f32 0.0, %v3301
  %3303 = vmatmul.f32.gmra.mxu0 %v367
  %v3304 = vpop.f32.mrf.mxu0
  %v3305 = vadd.f32 0.0, %v3304
  %3306 = vmatmul.f32.gmra.mxu0 %v370
  %v3307 = vpop.f32.mrf.mxu0
  %v3308 = vadd.f32 0.0, %v3307
  %3309 = vmatmul.f32.gmra.mxu0 %v373
  %v3310 = vpop.f32.mrf.mxu0
  %v3311 = vadd.f32 0.0, %v3310
  %3312 = vmatmul.f32.gmra.mxu0 %v376
  %v3313 = vpop.f32.mrf.mxu0
  %v3314 = vadd.f32 0.0, %v3313
  %3315 = vmatmul.f32.gmra.mxu0 %v379
  %v3316 = vpop.f32.mrf.mxu0
  %v3317 = vadd.f32 0.0, %v3316
  %3318 = vmatmul.f32.gmra.mxu0 %v382
  %v3319 = vpop.f32.mrf.mxu0
  %3320 = vmatmul.f32.gmra.mxu0 %v385
  %v3321 = vpop.f32.mrf.mxu0
  %v3322 = vadd.f32 0.0, %v3321
  %3323 = vmatmul.f32.gmra.mxu0 %v388
  %v3324 = vpop.f32.mrf.mxu0
  %v3325 = vadd.f32 0.0, %v3324
  %3326 = vmatmul.f32.gmra.mxu0 %v391
  %v3327 = vpop.f32.mrf.mxu0
  %v3328 = vadd.f32 0.0, %v3327
  %3329 = vmatmul.f32.gmra.mxu0 %v394
  %v3330 = vpop.f32.mrf.mxu0
  %v3331 = vadd.f32 0.0, %v3330
  %3332 = vmatmul.f32.gmra.mxu0 %v397
  %v3333 = vpop.f32.mrf.mxu0
  %v3334 = vadd.f32 0.0, %v3333
  %3335 = vmatmul.f32.gmra.mxu0 %v400
  %v3336 = vpop.f32.mrf.mxu0
  %v3337 = vadd.f32 0.0, %v3336
  %3338 = vmatmul.f32.gmra.mxu0 %v403
  %v3339 = vpop.f32.mrf.mxu0
  %v3340 = vadd.f32 0.0, %v3339
  %3341 = vmatmul.f32.gmra.mxu0 %v406
  %v3342 = vpop.f32.mrf.mxu0
  %v3343 = vadd.f32 0.0, %v3342
  %3344 = vmatmul.f32.gmra.mxu0 %v409
  %v3345 = vpop.f32.mrf.mxu0
  %v3346 = vadd.f32 0.0, %v3345
  %3347 = vmatmul.f32.gmra.mxu0 %v412
  %v3348 = vpop.f32.mrf.mxu0
  %v3349 = vadd.f32 0.0, %v3348
  %3350 = vmatmul.f32.gmra.mxu0 %v415
  %v3351 = vpop.f32.mrf.mxu0
  %v3352 = vadd.f32 0.0, %v3351
  %3353 = vmatmul.f32.gmra.mxu0 %v418
  %v3354 = vpop.f32.mrf.mxu0
  %v3355 = vadd.f32 0.0, %v3354
  %3356 = vmatmul.f32.gmra.mxu0 %v421
  %v3357 = vpop.f32.mrf.mxu0
  %v3358 = vadd.f32 0.0, %v3357
  %3359 = vmatmul.f32.gmra.mxu0 %v424
  %v3360 = vpop.f32.mrf.mxu0
  %v3361 = vadd.f32 0.0, %v3360
  %3362 = vmatmul.f32.gmra.mxu0 %v427
  %v3363 = vpop.f32.mrf.mxu0
  %3364 = vmatmul.f32.gmra.mxu0 %v430
  %v3365 = vpop.f32.mrf.mxu0
  %v3366 = vadd.f32 0.0, %v3365
  %3367 = vmatmul.f32.gmra.mxu0 %v433
  %v3368 = vpop.f32.mrf.mxu0
  %v3369 = vadd.f32 0.0, %v3368
  %3370 = vmatmul.f32.gmra.mxu0 %v436
  %v3371 = vpop.f32.mrf.mxu0
  %v3372 = vadd.f32 0.0, %v3371
  %3373 = vmatmul.f32.gmra.mxu0 %v439
  %v3374 = vpop.f32.mrf.mxu0
  %v3375 = vadd.f32 0.0, %v3374
  %3376 = vmatmul.f32.gmra.mxu0 %v442
  %v3377 = vpop.f32.mrf.mxu0
  %v3378 = vadd.f32 0.0, %v3377
  %3379 = vmatmul.f32.gmra.mxu0 %v445
  %v3380 = vpop.f32.mrf.mxu0
  %v3381 = vadd.f32 0.0, %v3380
  %3382 = vmatmul.f32.gmra.mxu0 %v448
  %v3383 = vpop.f32.mrf.mxu0
  %v3384 = vadd.f32 0.0, %v3383
  %3385 = vmatmul.f32.gmra.mxu0 %v451
  %v3386 = vpop.f32.mrf.mxu0
  %v3387 = vadd.f32 0.0, %v3386
  %3388 = vmatmul.f32.gmra.mxu0 %v454
  %v3389 = vpop.f32.mrf.mxu0
  %v3390 = vadd.f32 0.0, %v3389
  %3391 = vmatmul.f32.gmra.mxu0 %v457
  %v3392 = vpop.f32.mrf.mxu0
  %v3393 = vadd.f32 0.0, %v3392
  %3394 = vmatmul.f32.gmra.mxu0 %v460
  %v3395 = vpop.f32.mrf.mxu0
  %v3396 = vadd.f32 0.0, %v3395
  %3397 = vmatmul.f32.gmra.mxu0 %v463
  %v3398 = vpop.f32.mrf.mxu0
  %v3399 = vadd.f32 0.0, %v3398
  %3400 = vmatmul.f32.gmra.mxu0 %v466
  %v3401 = vpop.f32.mrf.mxu0
  %v3402 = vadd.f32 0.0, %v3401
  %3403 = vmatmul.f32.gmra.mxu0 %v469
  %v3404 = vpop.f32.mrf.mxu0
  %v3405 = vadd.f32 0.0, %v3404
  %3406 = vmatmul.f32.gmra.mxu0 %v472
  %v3407 = vpop.f32.mrf.mxu0
  %3408 = vmatmul.f32.gmra.mxu0 %v475
  %v3409 = vpop.f32.mrf.mxu0
  %v3410 = vadd.f32 0.0, %v3409
  %3411 = vmatmul.f32.gmra.mxu0 %v478
  %v3412 = vpop.f32.mrf.mxu0
  %v3413 = vadd.f32 0.0, %v3412
  %3414 = vmatmul.f32.gmra.mxu0 %v481
  %v3415 = vpop.f32.mrf.mxu0
  %v3416 = vadd.f32 0.0, %v3415
  %3417 = vmatmul.f32.gmra.mxu0 %v484
  %v3418 = vpop.f32.mrf.mxu0
  %v3419 = vadd.f32 0.0, %v3418
  %3420 = vmatmul.f32.gmra.mxu0 %v487
  %v3421 = vpop.f32.mrf.mxu0
  %v3422 = vadd.f32 0.0, %v3421
  %3423 = vmatmul.f32.gmra.mxu0 %v490
  %v3424 = vpop.f32.mrf.mxu0
  %v3425 = vadd.f32 0.0, %v3424
  %3426 = vmatmul.f32.gmra.mxu0 %v493
  %v3427 = vpop.f32.mrf.mxu0
  %v3428 = vadd.f32 0.0, %v3427
  %3429 = vmatmul.f32.gmra.mxu0 %v496
  %v3430 = vpop.f32.mrf.mxu0
  %v3431 = vadd.f32 0.0, %v3430
  %3432 = vmatmul.f32.gmra.mxu0 %v499
  %v3433 = vpop.f32.mrf.mxu0
  %v3434 = vadd.f32 0.0, %v3433
  %3435 = vmatmul.f32.gmra.mxu0 %v502
  %v3436 = vpop.f32.mrf.mxu0
  %v3437 = vadd.f32 0.0, %v3436
  %3438 = vmatmul.f32.gmra.mxu0 %v505
  %v3439 = vpop.f32.mrf.mxu0
  %v3440 = vadd.f32 0.0, %v3439
  %3441 = vmatmul.f32.gmra.mxu0 %v508
  %v3442 = vpop.f32.mrf.mxu0
  %v3443 = vadd.f32 0.0, %v3442
  %3444 = vmatmul.f32.gmra.mxu0 %v511
  %v3445 = vpop.f32.mrf.mxu0
  %v3446 = vadd.f32 0.0, %v3445
  %3447 = vmatmul.f32.gmra.mxu0 %v514
  %v3448 = vpop.f32.mrf.mxu0
  %v3449 = vadd.f32 0.0, %v3448
  %3450 = vmatmul.f32.gmra.mxu0 %v517
  %v3451 = vpop.f32.mrf.mxu0
  %3452 = vmatmul.f32.gmra.mxu0 %v520
  %v3453 = vpop.f32.mrf.mxu0
  %v3454 = vadd.f32 0.0, %v3453
  %3455 = vmatmul.f32.gmra.mxu0 %v523
  %v3456 = vpop.f32.mrf.mxu0
  %v3457 = vadd.f32 0.0, %v3456
  %3458 = vmatmul.f32.gmra.mxu0 %v526
  %v3459 = vpop.f32.mrf.mxu0
  %v3460 = vadd.f32 0.0, %v3459
  %3461 = vmatmul.f32.gmra.mxu0 %v529
  %v3462 = vpop.f32.mrf.mxu0
  %v3463 = vadd.f32 0.0, %v3462
  %3464 = vmatmul.f32.gmra.mxu0 %v532
  %v3465 = vpop.f32.mrf.mxu0
  %v3466 = vadd.f32 0.0, %v3465
  %3467 = vmatmul.f32.gmra.mxu0 %v535
  %v3468 = vpop.f32.mrf.mxu0
  %v3469 = vadd.f32 0.0, %v3468
  %3470 = vmatmul.f32.gmra.mxu0 %v538
  %v3471 = vpop.f32.mrf.mxu0
  %v3472 = vadd.f32 0.0, %v3471
  %3473 = vmatmul.f32.gmra.mxu0 %v541
  %v3474 = vpop.f32.mrf.mxu0
  %v3475 = vadd.f32 0.0, %v3474
  %3476 = vmatmul.f32.gmra.mxu0 %v544
  %v3477 = vpop.f32.mrf.mxu0
  %v3478 = vadd.f32 0.0, %v3477
  %3479 = vmatmul.f32.gmra.mxu0 %v547
  %v3480 = vpop.f32.mrf.mxu0
  %v3481 = vadd.f32 0.0, %v3480
  %3482 = vmatmul.f32.gmra.mxu0 %v550
  %v3483 = vpop.f32.mrf.mxu0
  %v3484 = vadd.f32 0.0, %v3483
  %3485 = vmatmul.f32.gmra.mxu0 %v553
  %v3486 = vpop.f32.mrf.mxu0
  %v3487 = vadd.f32 0.0, %v3486
  %3488 = vmatmul.f32.gmra.mxu0 %v556
  %v3489 = vpop.f32.mrf.mxu0
  %v3490 = vadd.f32 0.0, %v3489
  %3491 = vmatmul.f32.gmra.mxu0 %v559
  %v3492 = vpop.f32.mrf.mxu0
  %v3493 = vadd.f32 0.0, %v3492
  %3494 = vmatmul.f32.gmra.mxu0 %v562
  %v3495 = vpop.f32.mrf.mxu0
  %3496 = vmatmul.f32.gmra.mxu0 %v565
  %v3497 = vpop.f32.mrf.mxu0
  %v3498 = vadd.f32 0.0, %v3497
  %3499 = vmatmul.f32.gmra.mxu0 %v568
  %v3500 = vpop.f32.mrf.mxu0
  %v3501 = vadd.f32 0.0, %v3500
  %3502 = vmatmul.f32.gmra.mxu0 %v571
  %v3503 = vpop.f32.mrf.mxu0
  %v3504 = vadd.f32 0.0, %v3503
  %3505 = vmatmul.f32.gmra.mxu0 %v574
  %v3506 = vpop.f32.mrf.mxu0
  %v3507 = vadd.f32 0.0, %v3506
  %3508 = vmatmul.f32.gmra.mxu0 %v577
  %v3509 = vpop.f32.mrf.mxu0
  %v3510 = vadd.f32 0.0, %v3509
  %3511 = vmatmul.f32.gmra.mxu0 %v580
  %v3512 = vpop.f32.mrf.mxu0
  %v3513 = vadd.f32 0.0, %v3512
  %3514 = vmatmul.f32.gmra.mxu0 %v583
  %v3515 = vpop.f32.mrf.mxu0
  %v3516 = vadd.f32 0.0, %v3515
  %3517 = vmatmul.f32.gmra.mxu0 %v586
  %v3518 = vpop.f32.mrf.mxu0
  %v3519 = vadd.f32 0.0, %v3518
  %3520 = vmatmul.f32.gmra.mxu0 %v589
  %v3521 = vpop.f32.mrf.mxu0
  %v3522 = vadd.f32 0.0, %v3521
  %3523 = vmatmul.f32.gmra.mxu0 %v592
  %v3524 = vpop.f32.mrf.mxu0
  %v3525 = vadd.f32 0.0, %v3524
  %3526 = vmatmul.f32.gmra.mxu0 %v595
  %v3527 = vpop.f32.mrf.mxu0
  %v3528 = vadd.f32 0.0, %v3527
  %3529 = vmatmul.f32.gmra.mxu0 %v598
  %v3530 = vpop.f32.mrf.mxu0
  %v3531 = vadd.f32 0.0, %v3530
  %3532 = vmatmul.f32.gmra.mxu0 %v601
  %v3533 = vpop.f32.mrf.mxu0
  %v3534 = vadd.f32 0.0, %v3533
  %3535 = vmatmul.f32.gmra.mxu0 %v604
  %v3536 = vpop.f32.mrf.mxu0
  %v3537 = vadd.f32 0.0, %v3536
  %3538 = vmatmul.f32.gmra.mxu0 %v607
  %v3539 = vpop.f32.mrf.mxu0
  %3540 = vmatmul.f32.gmra.mxu0 %v610
  %v3541 = vpop.f32.mrf.mxu0
  %v3542 = vadd.f32 0.0, %v3541
  %3543 = vmatmul.f32.gmra.mxu0 %v613
  %v3544 = vpop.f32.mrf.mxu0
  %v3545 = vadd.f32 0.0, %v3544
  %3546 = vmatmul.f32.gmra.mxu0 %v616
  %v3547 = vpop.f32.mrf.mxu0
  %v3548 = vadd.f32 0.0, %v3547
  %3549 = vmatmul.f32.gmra.mxu0 %v619
  %v3550 = vpop.f32.mrf.mxu0
  %v3551 = vadd.f32 0.0, %v3550
  %3552 = vmatmul.f32.gmra.mxu0 %v622
  %v3553 = vpop.f32.mrf.mxu0
  %v3554 = vadd.f32 0.0, %v3553
  %3555 = vmatmul.f32.gmra.mxu0 %v625
  %v3556 = vpop.f32.mrf.mxu0
  %v3557 = vadd.f32 0.0, %v3556
  %3558 = vmatmul.f32.gmra.mxu0 %v628
  %v3559 = vpop.f32.mrf.mxu0
  %v3560 = vadd.f32 0.0, %v3559
  %3561 = vmatmul.f32.gmra.mxu0 %v631
  %v3562 = vpop.f32.mrf.mxu0
  %v3563 = vadd.f32 0.0, %v3562
  %3564 = vmatmul.f32.gmra.mxu0 %v634
  %v3565 = vpop.f32.mrf.mxu0
  %v3566 = vadd.f32 0.0, %v3565
  %3567 = vmatmul.f32.gmra.mxu0 %v637
  %v3568 = vpop.f32.mrf.mxu0
  %v3569 = vadd.f32 0.0, %v3568
  %3570 = vmatmul.f32.gmra.mxu0 %v640
  %v3571 = vpop.f32.mrf.mxu0
  %v3572 = vadd.f32 0.0, %v3571
  %3573 = vmatmul.f32.gmra.mxu0 %v643
  %v3574 = vpop.f32.mrf.mxu0
  %v3575 = vadd.f32 0.0, %v3574
  %3576 = vmatmul.f32.gmra.mxu0 %v646
  %v3577 = vpop.f32.mrf.mxu0
  %v3578 = vadd.f32 0.0, %v3577
  %3579 = vmatmul.f32.gmra.mxu0 %v649
  %v3580 = vpop.f32.mrf.mxu0
  %v3581 = vadd.f32 0.0, %v3580
  %3582 = vmatmul.f32.gmra.mxu0 %v652
  %v3583 = vpop.f32.mrf.mxu0
  %3584 = vmatmul.f32.gmra.mxu0 %v655
  %v3585 = vpop.f32.mrf.mxu0
  %v3586 = vadd.f32 0.0, %v3585
  %3587 = vmatmul.f32.gmra.mxu0 %v658
  %v3588 = vpop.f32.mrf.mxu0
  %v3589 = vadd.f32 0.0, %v3588
  %3590 = vmatmul.f32.gmra.mxu0 %v661
  %v3591 = vpop.f32.mrf.mxu0
  %v3592 = vadd.f32 0.0, %v3591
  %3593 = vmatmul.f32.gmra.mxu0 %v664
  %v3594 = vpop.f32.mrf.mxu0
  %v3595 = vadd.f32 0.0, %v3594
  %3596 = vmatmul.f32.gmra.mxu0 %v667
  %v3597 = vpop.f32.mrf.mxu0
  %v3598 = vadd.f32 0.0, %v3597
  %3599 = vmatmul.f32.gmra.mxu0 %v670
  %v3600 = vpop.f32.mrf.mxu0
  %v3601 = vadd.f32 0.0, %v3600
  %3602 = vmatmul.f32.gmra.mxu0 %v673
  %v3603 = vpop.f32.mrf.mxu0
  %v3604 = vadd.f32 0.0, %v3603
  %3605 = vmatmul.f32.gmra.mxu0 %v676
  %v3606 = vpop.f32.mrf.mxu0
  %v3607 = vadd.f32 0.0, %v3606
  %3608 = vmatmul.f32.gmra.mxu0 %v679
  %v3609 = vpop.f32.mrf.mxu0
  %v3610 = vadd.f32 0.0, %v3609
  %3611 = vmatmul.f32.gmra.mxu0 %v682
  %v3612 = vpop.f32.mrf.mxu0
  %v3613 = vadd.f32 0.0, %v3612
  %3614 = vmatmul.f32.gmra.mxu0 %v685
  %v3615 = vpop.f32.mrf.mxu0
  %v3616 = vadd.f32 0.0, %v3615
  %3617 = vmatmul.f32.gmra.mxu0 %v688
  %v3618 = vpop.f32.mrf.mxu0
  %v3619 = vadd.f32 0.0, %v3618
  %3620 = vmatmul.f32.gmra.mxu0 %v691
  %v3621 = vpop.f32.mrf.mxu0
  %v3622 = vadd.f32 0.0, %v3621
  %3623 = vmatmul.f32.gmra.mxu0 %v694
  %v3624 = vpop.f32.mrf.mxu0
  %v3625 = vadd.f32 0.0, %v3624
  %3626 = vmatmul.f32.gmra.mxu0 %v697
  %v3627 = vpop.f32.mrf.mxu0
  %3628 = vmatmul.f32.gmra.mxu0 %v700
  %v3629 = vpop.f32.mrf.mxu0
  %v3630 = vadd.f32 0.0, %v3629
  %3631 = vmatmul.f32.gmra.mxu0 %v703
  %v3632 = vpop.f32.mrf.mxu0
  %v3633 = vadd.f32 0.0, %v3632
  %3634 = vmatmul.f32.gmra.mxu0 %v706
  %v3635 = vpop.f32.mrf.mxu0
  %v3636 = vadd.f32 0.0, %v3635
  %3637 = vmatmul.f32.gmra.mxu0 %v709
  %v3638 = vpop.f32.mrf.mxu0
  %v3639 = vadd.f32 0.0, %v3638
  %3640 = vmatmul.f32.gmra.mxu0 %v712
  %v3641 = vpop.f32.mrf.mxu0
  %v3642 = vadd.f32 0.0, %v3641
  %3643 = vmatmul.f32.gmra.mxu0 %v715
  %v3644 = vpop.f32.mrf.mxu0
  %v3645 = vadd.f32 0.0, %v3644
  %3646 = vmatmul.f32.gmra.mxu0 %v718
  %v3647 = vpop.f32.mrf.mxu0
  %v3648 = vadd.f32 0.0, %v3647
  %3649 = vmatmul.f32.gmra.mxu0 %v721
  %v3650 = vpop.f32.mrf.mxu0
  %v3651 = vadd.f32 0.0, %v3650
  %3652 = vmatmul.f32.gmra.mxu0 %v724
  %v3653 = vpop.f32.mrf.mxu0
  %v3654 = vadd.f32 0.0, %v3653
  %3655 = vmatmul.f32.gmra.mxu0 %v727
  %v3656 = vpop.f32.mrf.mxu0
  %v3657 = vadd.f32 0.0, %v3656
  %3658 = vmatmul.f32.gmra.mxu0 %v730
  %v3659 = vpop.f32.mrf.mxu0
  %v3660 = vadd.f32 0.0, %v3659
  %3661 = vmatmul.f32.gmra.mxu0 %v733
  %v3662 = vpop.f32.mrf.mxu0
  %v3663 = vadd.f32 0.0, %v3662
  %3664 = vmatmul.f32.gmra.mxu0 %v736
  %v3665 = vpop.f32.mrf.mxu0
  %v3666 = vadd.f32 0.0, %v3665
  %3667 = vmatmul.f32.gmra.mxu0 %v739
  %v3668 = vpop.f32.mrf.mxu0
  %v3669 = vadd.f32 0.0, %v3668
  %3670 = vmatmul.f32.gmra.mxu0 %v742
  %v3671 = vpop.f32.mrf.mxu0
  %3672 = vmatmul.f32.gmra.mxu0 %v745
  %v3673 = vpop.f32.mrf.mxu0
  %v3674 = vadd.f32 0.0, %v3673
  %3675 = vmatmul.f32.gmra.mxu0 %v748
  %v3676 = vpop.f32.mrf.mxu0
  %v3677 = vadd.f32 0.0, %v3676
  %3678 = vmatmul.f32.gmra.mxu0 %v751
  %v3679 = vpop.f32.mrf.mxu0
  %v3680 = vadd.f32 0.0, %v3679
  %3681 = vmatmul.f32.gmra.mxu0 %v754
  %v3682 = vpop.f32.mrf.mxu0
  %v3683 = vadd.f32 0.0, %v3682
  %3684 = vmatmul.f32.gmra.mxu0 %v757
  %v3685 = vpop.f32.mrf.mxu0
  %v3686 = vadd.f32 0.0, %v3685
  %3687 = vmatmul.f32.gmra.mxu0 %v760
  %v3688 = vpop.f32.mrf.mxu0
  %v3689 = vadd.f32 0.0, %v3688
  %3690 = vmatmul.f32.gmra.mxu0 %v763
  %v3691 = vpop.f32.mrf.mxu0
  %v3692 = vadd.f32 0.0, %v3691
  %3693 = vmatmul.f32.gmra.mxu0 %v766
  %v3694 = vpop.f32.mrf.mxu0
  %v3695 = vadd.f32 0.0, %v3694
  %3696 = vmatmul.f32.gmra.mxu0 %v769
  %v3697 = vpop.f32.mrf.mxu0
  %v3698 = vadd.f32 0.0, %v3697
  %3699 = vmatmul.f32.gmra.mxu0 %v772
  %v3700 = vpop.f32.mrf.mxu0
  %v3701 = vadd.f32 0.0, %v3700
  %3702 = vmatmul.f32.gmra.mxu0 %v775
  %v3703 = vpop.f32.mrf.mxu0
  %v3704 = vadd.f32 0.0, %v3703
  %3705 = vmatmul.f32.gmra.mxu0 %v778
  %v3706 = vpop.f32.mrf.mxu0
  %v3707 = vadd.f32 0.0, %v3706
  %3708 = vmatmul.f32.gmra.mxu0 %v781
  %v3709 = vpop.f32.mrf.mxu0
  %v3710 = vadd.f32 0.0, %v3709
  %3711 = vmatmul.f32.gmra.mxu0 %v784
  %v3712 = vpop.f32.mrf.mxu0
  %v3713 = vadd.f32 0.0, %v3712
  %3714 = vmatmul.f32.gmra.mxu0 %v787
  %v3715 = vpop.f32.mrf.mxu0
  %3716 = vmatmul.f32.gmra.mxu0 %v790
  %v3717 = vpop.f32.mrf.mxu0
  %v3718 = vadd.f32 0.0, %v3717
  %3719 = vmatmul.f32.gmra.mxu0 %v793
  %v3720 = vpop.f32.mrf.mxu0
  %v3721 = vadd.f32 0.0, %v3720
  %3722 = vmatmul.f32.gmra.mxu0 %v796
  %v3723 = vpop.f32.mrf.mxu0
  %v3724 = vadd.f32 0.0, %v3723
  %3725 = vmatmul.f32.gmra.mxu0 %v799
  %v3726 = vpop.f32.mrf.mxu0
  %v3727 = vadd.f32 0.0, %v3726
  %3728 = vmatmul.f32.gmra.mxu0 %v802
  %v3729 = vpop.f32.mrf.mxu0
  %v3730 = vadd.f32 0.0, %v3729
  %3731 = vmatmul.f32.gmra.mxu0 %v805
  %v3732 = vpop.f32.mrf.mxu0
  %v3733 = vadd.f32 0.0, %v3732
  %3734 = vmatmul.f32.gmra.mxu0 %v808
  %v3735 = vpop.f32.mrf.mxu0
  %v3736 = vadd.f32 0.0, %v3735
  %3737 = vmatmul.f32.gmra.mxu0 %v811
  %v3738 = vpop.f32.mrf.mxu0
  %v3739 = vadd.f32 0.0, %v3738
  %3740 = vmatmul.f32.gmra.mxu0 %v814
  %v3741 = vpop.f32.mrf.mxu0
  %v3742 = vadd.f32 0.0, %v3741
  %3743 = vmatmul.f32.gmra.mxu0 %v817
  %v3744 = vpop.f32.mrf.mxu0
  %v3745 = vadd.f32 0.0, %v3744
  %3746 = vmatmul.f32.gmra.mxu0 %v820
  %v3747 = vpop.f32.mrf.mxu0
  %v3748 = vadd.f32 0.0, %v3747
  %3749 = vmatmul.f32.gmra.mxu0 %v823
  %v3750 = vpop.f32.mrf.mxu0
  %v3751 = vadd.f32 0.0, %v3750
  %3752 = vmatmul.f32.gmra.mxu0 %v826
  %v3753 = vpop.f32.mrf.mxu0
  %v3754 = vadd.f32 0.0, %v3753
  %3755 = vmatmul.f32.gmra.mxu0 %v829
  %v3756 = vpop.f32.mrf.mxu0
  %v3757 = vadd.f32 0.0, %v3756
  %3758 = vmatmul.f32.gmra.mxu0 %v832
  %v3759 = vpop.f32.mrf.mxu0
  %3760 = vmatmul.f32.gmra.mxu0 %v835
  %v3761 = vpop.f32.mrf.mxu0
  %v3762 = vadd.f32 0.0, %v3761
  %3763 = vmatmul.f32.gmra.mxu0 %v838
  %v3764 = vpop.f32.mrf.mxu0
  %v3765 = vadd.f32 0.0, %v3764
  %3766 = vmatmul.f32.gmra.mxu0 %v841
  %v3767 = vpop.f32.mrf.mxu0
  %v3768 = vadd.f32 0.0, %v3767
  %3769 = vmatmul.f32.gmra.mxu0 %v844
  %v3770 = vpop.f32.mrf.mxu0
  %v3771 = vadd.f32 0.0, %v3770
  %3772 = vmatmul.f32.gmra.mxu0 %v847
  %v3773 = vpop.f32.mrf.mxu0
  %v3774 = vadd.f32 0.0, %v3773
  %3775 = vmatmul.f32.gmra.mxu0 %v850
  %v3776 = vpop.f32.mrf.mxu0
  %v3777 = vadd.f32 0.0, %v3776
  %3778 = vmatmul.f32.gmra.mxu0 %v853
  %v3779 = vpop.f32.mrf.mxu0
  %v3780 = vadd.f32 0.0, %v3779
  %3781 = vmatmul.f32.gmra.mxu0 %v856
  %v3782 = vpop.f32.mrf.mxu0
  %v3783 = vadd.f32 0.0, %v3782
  %3784 = vmatmul.f32.gmra.mxu0 %v859
  %v3785 = vpop.f32.mrf.mxu0
  %v3786 = vadd.f32 0.0, %v3785
  %3787 = vmatmul.f32.gmra.mxu0 %v862
  %v3788 = vpop.f32.mrf.mxu0
  %v3789 = vadd.f32 0.0, %v3788
  %3790 = vmatmul.f32.gmra.mxu0 %v865
  %v3791 = vpop.f32.mrf.mxu0
  %v3792 = vadd.f32 0.0, %v3791
  %3793 = vmatmul.f32.gmra.mxu0 %v868
  %v3794 = vpop.f32.mrf.mxu0
  %v3795 = vadd.f32 0.0, %v3794
  %3796 = vmatmul.f32.gmra.mxu0 %v871
  %v3797 = vpop.f32.mrf.mxu0
  %v3798 = vadd.f32 0.0, %v3797
  %3799 = vmatmul.f32.gmra.mxu0 %v874
  %v3800 = vpop.f32.mrf.mxu0
  %v3801 = vadd.f32 0.0, %v3800
  %3802 = vmatmul.f32.gmra.mxu0 %v877
  %v3803 = vpop.f32.mrf.mxu0
  %3804 = vmatmul.f32.gmra.mxu0 %v880
  %v3805 = vpop.f32.mrf.mxu0
  %v3806 = vadd.f32 0.0, %v3805
  %3807 = vmatmul.f32.gmra.mxu0 %v883
  %v3808 = vpop.f32.mrf.mxu0
  %v3809 = vadd.f32 0.0, %v3808
  %3810 = vmatmul.f32.gmra.mxu0 %v886
  %v3811 = vpop.f32.mrf.mxu0
  %v3812 = vadd.f32 0.0, %v3811
  %3813 = vmatmul.f32.gmra.mxu0 %v889
  %v3814 = vpop.f32.mrf.mxu0
  %v3815 = vadd.f32 0.0, %v3814
  %3816 = vmatmul.f32.gmra.mxu0 %v892
  %v3817 = vpop.f32.mrf.mxu0
  %v3818 = vadd.f32 0.0, %v3817
  %3819 = vmatmul.f32.gmra.mxu0 %v895
  %v3820 = vpop.f32.mrf.mxu0
  %v3821 = vadd.f32 0.0, %v3820
  %3822 = vmatmul.f32.gmra.mxu0 %v898
  %v3823 = vpop.f32.mrf.mxu0
  %v3824 = vadd.f32 0.0, %v3823
  %3825 = vmatmul.f32.gmra.mxu0 %v901
  %v3826 = vpop.f32.mrf.mxu0
  %v3827 = vadd.f32 0.0, %v3826
  %3828 = vmatmul.f32.gmra.mxu0 %v904
  %v3829 = vpop.f32.mrf.mxu0
  %v3830 = vadd.f32 0.0, %v3829
  %3831 = vmatmul.f32.gmra.mxu0 %v907
  %v3832 = vpop.f32.mrf.mxu0
  %v3833 = vadd.f32 0.0, %v3832
  %3834 = vmatmul.f32.gmra.mxu0 %v910
  %v3835 = vpop.f32.mrf.mxu0
  %v3836 = vadd.f32 0.0, %v3835
  %3837 = vmatmul.f32.gmra.mxu0 %v913
  %v3838 = vpop.f32.mrf.mxu0
  %v3839 = vadd.f32 0.0, %v3838
  %3840 = vmatmul.f32.gmra.mxu0 %v916
  %v3841 = vpop.f32.mrf.mxu0
  %v3842 = vadd.f32 0.0, %v3841
  %3843 = vmatmul.f32.gmra.mxu0 %v919
  %v3844 = vpop.f32.mrf.mxu0
  %v3845 = vadd.f32 0.0, %v3844
  %3846 = vmatmul.f32.gmra.mxu0 %v922
  %v3847 = vpop.f32.mrf.mxu0
  %3848 = vmatmul.f32.gmra.mxu0 %v925
  %v3849 = vpop.f32.mrf.mxu0
  %v3850 = vadd.f32 0.0, %v3849
  %3851 = vmatmul.f32.gmra.mxu0 %v928
  %v3852 = vpop.f32.mrf.mxu0
  %v3853 = vadd.f32 0.0, %v3852
  %3854 = vmatmul.f32.gmra.mxu0 %v931
  %v3855 = vpop.f32.mrf.mxu0
  %v3856 = vadd.f32 0.0, %v3855
  %3857 = vmatmul.f32.gmra.mxu0 %v934
  %v3858 = vpop.f32.mrf.mxu0
  %v3859 = vadd.f32 0.0, %v3858
  %3860 = vmatmul.f32.gmra.mxu0 %v937
  %v3861 = vpop.f32.mrf.mxu0
  %v3862 = vadd.f32 0.0, %v3861
  %3863 = vmatmul.f32.gmra.mxu0 %v940
  %v3864 = vpop.f32.mrf.mxu0
  %v3865 = vadd.f32 0.0, %v3864
  %3866 = vmatmul.f32.gmra.mxu0 %v943
  %v3867 = vpop.f32.mrf.mxu0
  %v3868 = vadd.f32 0.0, %v3867
  %3869 = vmatmul.f32.gmra.mxu0 %v946
  %v3870 = vpop.f32.mrf.mxu0
  %v3871 = vadd.f32 0.0, %v3870
  %3872 = vmatmul.f32.gmra.mxu0 %v949
  %v3873 = vpop.f32.mrf.mxu0
  %v3874 = vadd.f32 0.0, %v3873
  %3875 = vmatmul.f32.gmra.mxu0 %v952
  %v3876 = vpop.f32.mrf.mxu0
  %v3877 = vadd.f32 0.0, %v3876
  %3878 = vmatmul.f32.gmra.mxu0 %v955
  %v3879 = vpop.f32.mrf.mxu0
  %v3880 = vadd.f32 0.0, %v3879
  %3881 = vmatmul.f32.gmra.mxu0 %v958
  %v3882 = vpop.f32.mrf.mxu0
  %v3883 = vadd.f32 0.0, %v3882
  %3884 = vmatmul.f32.gmra.mxu0 %v961
  %v3885 = vpop.f32.mrf.mxu0
  %v3886 = vadd.f32 0.0, %v3885
  %3887 = vmatmul.f32.gmra.mxu0 %v964
  %v3888 = vpop.f32.mrf.mxu0
  %v3889 = vadd.f32 0.0, %v3888
  %3890 = vmatmul.f32.gmra.mxu0 %v967
  %v3891 = vpop.f32.mrf.mxu0
  %3892 = vmatmul.f32.gmra.mxu0 %v2351
  %v3893 = vpop.f32.mrf.mxu0
  %3894 = vmatmul.f32.gmra.mxu0 %v2354
  %v3895 = vpop.f32.mrf.mxu0
  %3896 = vmatmul.f32.gmra.mxu0 %v2357
  %v3897 = vpop.f32.mrf.mxu0
  %3898 = vmatmul.f32.gmra.mxu0 %v2360
  %v3899 = vpop.f32.mrf.mxu0
  %3900 = vmatmul.f32.gmra.mxu0 %v2363
  %v3901 = vpop.f32.mrf.mxu0
  %3902 = vmatmul.f32.gmra.mxu0 %v2366
  %v3903 = vpop.f32.mrf.mxu0
  %3904 = vmatmul.f32.gmra.mxu0 %v2369
  %v3905 = vpop.f32.mrf.mxu0
  %3906 = vmatmul.f32.gmra.mxu0 %v2372
  %v3907 = vpop.f32.mrf.mxu0
  %3908 = vmatmul.f32.gmra.mxu0 %v2375
  %v3909 = vpop.f32.mrf.mxu0
  %3910 = vmatmul.f32.gmra.mxu0 %v2378
  %v3911 = vpop.f32.mrf.mxu0
  %3912 = vmatmul.f32.gmra.mxu0 %v2381
  %v3913 = vpop.f32.mrf.mxu0
  %3914 = vmatmul.f32.gmra.mxu0 %v2384
  %v3915 = vpop.f32.mrf.mxu0
  %3916 = vmatmul.f32.gmra.mxu0 %v2387
  %v3917 = vpop.f32.mrf.mxu0
  %3918 = vmatmul.f32.gmra.mxu0 %v2390
  %v3919 = vpop.f32.mrf.mxu0
  %3920 = vmatmul.f32.gmra.mxu0 %v3255
  %v3921 = vpop.f32.mrf.mxu0
  %3922 = vdwg.mxu0
  %v3923 = vadd.f32 %v3058, %v3278
  %v3924 = vadd.f32 %v3059, %v3281
  %v3925 = vadd.f32 %v3060, %v3284
  %v3926 = vadd.f32 %v3061, %v3287
  %v3927 = vadd.f32 %v3062, %v3290
  %v3928 = vadd.f32 %v3063, %v3293
  %v3929 = vadd.f32 %v3064, %v3296
  %v3930 = vadd.f32 %v3065, %v3299
  %v3931 = vadd.f32 %v3066, %v3302
  %v3932 = vadd.f32 %v3067, %v3305
  %v3933 = vadd.f32 %v3068, %v3308
  %v3934 = vadd.f32 %v3069, %v3311
  %v3935 = vadd.f32 %v3070, %v3314
  %v3936 = vadd.f32 %v3071, %v3317
  %v3937 = vadd.f32 %v3072, %v3322
  %v3938 = vadd.f32 %v3073, %v3325
  %v3939 = vadd.f32 %v3074, %v3328
  %v3940 = vadd.f32 %v3075, %v3331
  %v3941 = vadd.f32 %v3076, %v3334
  %v3942 = vadd.f32 %v3077, %v3337
  %v3943 = vadd.f32 %v3078, %v3340
  %v3944 = vadd.f32 %v3079, %v3343
  %v3945 = vadd.f32 %v3080, %v3346
  %v3946 = vadd.f32 %v3081, %v3349
  %v3947 = vadd.f32 %v3082, %v3352
  %v3948 = vadd.f32 %v3083, %v3355
  %v3949 = vadd.f32 %v3084, %v3358
  %v3950 = vadd.f32 %v3085, %v3361
  %v3951 = vadd.f32 %v3086, %v3366
  %v3952 = vadd.f32 %v3087, %v3369
  %v3953 = vadd.f32 %v3088, %v3372
  %v3954 = vadd.f32 %v3089, %v3375
  %v3955 = vadd.f32 %v3090, %v3378
  %v3956 = vadd.f32 %v3091, %v3381
  %v3957 = vadd.f32 %v3092, %v3384
  %v3958 = vadd.f32 %v3093, %v3387
  %v3959 = vadd.f32 %v3094, %v3390
  %v3960 = vadd.f32 %v3095, %v3393
  %v3961 = vadd.f32 %v3096, %v3396
  %v3962 = vadd.f32 %v3097, %v3399
  %v3963 = vadd.f32 %v3098, %v3402
  %v3964 = vadd.f32 %v3099, %v3405
  %v3965 = vadd.f32 %v3100, %v3410
  %v3966 = vadd.f32 %v3101, %v3413
  %v3967 = vadd.f32 %v3102, %v3416
  %v3968 = vadd.f32 %v3103, %v3419
  %v3969 = vadd.f32 %v3104, %v3422
  %v3970 = vadd.f32 %v3105, %v3425
  %v3971 = vadd.f32 %v3106, %v3428
  %v3972 = vadd.f32 %v3107, %v3431
  %v3973 = vadd.f32 %v3108, %v3434
  %v3974 = vadd.f32 %v3109, %v3437
  %v3975 = vadd.f32 %v3110, %v3440
  %v3976 = vadd.f32 %v3111, %v3443
  %v3977 = vadd.f32 %v3112, %v3446
  %v3978 = vadd.f32 %v3113, %v3449
  %v3979 = vadd.f32 %v3114, %v3454
  %v3980 = vadd.f32 %v3115, %v3457
  %v3981 = vadd.f32 %v3116, %v3460
  %v3982 = vadd.f32 %v3117, %v3463
  %v3983 = vadd.f32 %v3118, %v3466
  %v3984 = vadd.f32 %v3119, %v3469
  %v3985 = vadd.f32 %v3120, %v3472
  %v3986 = vadd.f32 %v3121, %v3475
  %v3987 = vadd.f32 %v3122, %v3478
  %v3988 = vadd.f32 %v3123, %v3481
  %v3989 = vadd.f32 %v3124, %v3484
  %v3990 = vadd.f32 %v3125, %v3487
  %v3991 = vadd.f32 %v3126, %v3490
  %v3992 = vadd.f32 %v3127, %v3493
  %v3993 = vadd.f32 %v3128, %v3498
  %v3994 = vadd.f32 %v3129, %v3501
  %v3995 = vadd.f32 %v3130, %v3504
  %v3996 = vadd.f32 %v3131, %v3507
  %v3997 = vadd.f32 %v3132, %v3510
  %v3998 = vadd.f32 %v3133, %v3513
  %v3999 = vadd.f32 %v3134, %v3516
  %v4000 = vadd.f32 %v3135, %v3519
  %v4001 = vadd.f32 %v3136, %v3522
  %v4002 = vadd.f32 %v3137, %v3525
  %v4003 = vadd.f32 %v3138, %v3528
  %v4004 = vadd.f32 %v3139, %v3531
  %v4005 = vadd.f32 %v3140, %v3534
  %v4006 = vadd.f32 %v3141, %v3537
  %v4007 = vadd.f32 %v3142, %v3542
  %v4008 = vadd.f32 %v3143, %v3545
  %v4009 = vadd.f32 %v3144, %v3548
  %v4010 = vadd.f32 %v3145, %v3551
  %v4011 = vadd.f32 %v3146, %v3554
  %v4012 = vadd.f32 %v3147, %v3557
  %v4013 = vadd.f32 %v3148, %v3560
  %v4014 = vadd.f32 %v3149, %v3563
  %v4015 = vadd.f32 %v3150, %v3566
  %v4016 = vadd.f32 %v3151, %v3569
  %v4017 = vadd.f32 %v3152, %v3572
  %v4018 = vadd.f32 %v3153, %v3575
  %v4019 = vadd.f32 %v3154, %v3578
  %v4020 = vadd.f32 %v3155, %v3581
  %v4021 = vadd.f32 %v3156, %v3586
  %v4022 = vadd.f32 %v3157, %v3589
  %v4023 = vadd.f32 %v3158, %v3592
  %v4024 = vadd.f32 %v3159, %v3595
  %v4025 = vadd.f32 %v3160, %v3598
  %v4026 = vadd.f32 %v3161, %v3601
  %v4027 = vadd.f32 %v3162, %v3604
  %v4028 = vadd.f32 %v3163, %v3607
  %v4029 = vadd.f32 %v3164, %v3610
  %v4030 = vadd.f32 %v3165, %v3613
  %v4031 = vadd.f32 %v3166, %v3616
  %v4032 = vadd.f32 %v3167, %v3619
  %v4033 = vadd.f32 %v3168, %v3622
  %v4034 = vadd.f32 %v3169, %v3625
  %v4035 = vadd.f32 %v3170, %v3630
  %v4036 = vadd.f32 %v3171, %v3633
  %v4037 = vadd.f32 %v3172, %v3636
  %v4038 = vadd.f32 %v3173, %v3639
  %v4039 = vadd.f32 %v3174, %v3642
  %v4040 = vadd.f32 %v3175, %v3645
  %v4041 = vadd.f32 %v3176, %v3648
  %v4042 = vadd.f32 %v3177, %v3651
  %v4043 = vadd.f32 %v3178, %v3654
  %v4044 = vadd.f32 %v3179, %v3657
  %v4045 = vadd.f32 %v3180, %v3660
  %v4046 = vadd.f32 %v3181, %v3663
  %v4047 = vadd.f32 %v3182, %v3666
  %v4048 = vadd.f32 %v3183, %v3669
  %v4049 = vadd.f32 %v3184, %v3674
  %v4050 = vadd.f32 %v3185, %v3677
  %v4051 = vadd.f32 %v3186, %v3680
  %v4052 = vadd.f32 %v3187, %v3683
  %v4053 = vadd.f32 %v3188, %v3686
  %v4054 = vadd.f32 %v3189, %v3689
  %v4055 = vadd.f32 %v3190, %v3692
  %v4056 = vadd.f32 %v3191, %v3695
  %v4057 = vadd.f32 %v3192, %v3698
  %v4058 = vadd.f32 %v3193, %v3701
  %v4059 = vadd.f32 %v3194, %v3704
  %v4060 = vadd.f32 %v3195, %v3707
  %v4061 = vadd.f32 %v3196, %v3710
  %v4062 = vadd.f32 %v3197, %v3713
  %v4063 = vadd.f32 %v3198, %v3718
  %v4064 = vadd.f32 %v3199, %v3721
  %v4065 = vadd.f32 %v3200, %v3724
  %v4066 = vadd.f32 %v3201, %v3727
  %v4067 = vadd.f32 %v3202, %v3730
  %v4068 = vadd.f32 %v3203, %v3733
  %v4069 = vadd.f32 %v3204, %v3736
  %v4070 = vadd.f32 %v3205, %v3739
  %v4071 = vadd.f32 %v3206, %v3742
  %v4072 = vadd.f32 %v3207, %v3745
  %v4073 = vadd.f32 %v3208, %v3748
  %v4074 = vadd.f32 %v3209, %v3751
  %v4075 = vadd.f32 %v3210, %v3754
  %v4076 = vadd.f32 %v3211, %v3757
  %v4077 = vadd.f32 %v3212, %v3762
  %v4078 = vadd.f32 %v3213, %v3765
  %v4079 = vadd.f32 %v3214, %v3768
  %v4080 = vadd.f32 %v3215, %v3771
  %v4081 = vadd.f32 %v3216, %v3774
  %v4082 = vadd.f32 %v3217, %v3777
  %v4083 = vadd.f32 %v3218, %v3780
  %v4084 = vadd.f32 %v3219, %v3783
  %v4085 = vadd.f32 %v3220, %v3786
  %v4086 = vadd.f32 %v3221, %v3789
  %v4087 = vadd.f32 %v3222, %v3792
  %v4088 = vadd.f32 %v3223, %v3795
  %v4089 = vadd.f32 %v3224, %v3798
  %v4090 = vadd.f32 %v3225, %v3801
  %v4091 = vadd.f32 %v3226, %v3806
  %v4092 = vadd.f32 %v3227, %v3809
  %v4093 = vadd.f32 %v3228, %v3812
  %v4094 = vadd.f32 %v3229, %v3815
  %v4095 = vadd.f32 %v3230, %v3818
  %v4096 = vadd.f32 %v3231, %v3821
  %v4097 = vadd.f32 %v3232, %v3824
  %v4098 = vadd.f32 %v3233, %v3827
  %v4099 = vadd.f32 %v3234, %v3830
  %v4100 = vadd.f32 %v3235, %v3833
  %v4101 = vadd.f32 %v3236, %v3836
  %v4102 = vadd.f32 %v3237, %v3839
  %v4103 = vadd.f32 %v3238, %v3842
  %v4104 = vadd.f32 %v3239, %v3845
  %v4105 = vadd.f32 %v3240, %v3850
  %v4106 = vadd.f32 %v3241, %v3853
  %v4107 = vadd.f32 %v3242, %v3856
  %v4108 = vadd.f32 %v3243, %v3859
  %v4109 = vadd.f32 %v3244, %v3862
  %v4110 = vadd.f32 %v3245, %v3865
  %v4111 = vadd.f32 %v3246, %v3868
  %v4112 = vadd.f32 %v3247, %v3871
  %v4113 = vadd.f32 %v3248, %v3874
  %v4114 = vadd.f32 %v3249, %v3877
  %v4115 = vadd.f32 %v3250, %v3880
  %v4116 = vadd.f32 %v3251, %v3883
  %v4117 = vadd.f32 %v3252, %v3886
  %v4118 = vadd.f32 %v3253, %v3889
  %vm4119 = vcmask 64512
  %v4120 = vsel %vm4119, %v3923, -inf
  %v4121 = vsel %vm4119, %v3937, -inf
  %v4122 = vmax.f32 %v4120, %v4121
  %v4123 = vsel %vm4119, %v3924, -inf
  %v4124 = vsel %vm4119, %v3938, -inf
  %v4125 = vmax.f32 %v4123, %v4124
  %v4126 = vsel %vm4119, %v3925, -inf
  %v4127 = vsel %vm4119, %v3939, -inf
  %v4128 = vmax.f32 %v4126, %v4127
  %v4129 = vsel %vm4119, %v3926, -inf
  %v4130 = vsel %vm4119, %v3940, -inf
  %v4131 = vmax.f32 %v4129, %v4130
  %v4132 = vsel %vm4119, %v3927, -inf
  %v4133 = vsel %vm4119, %v3941, -inf
  %v4134 = vmax.f32 %v4132, %v4133
  %v4135 = vsel %vm4119, %v3928, -inf
  %v4136 = vsel %vm4119, %v3942, -inf
  %v4137 = vmax.f32 %v4135, %v4136
  %v4138 = vsel %vm4119, %v3929, -inf
  %v4139 = vsel %vm4119, %v3943, -inf
  %v4140 = vmax.f32 %v4138, %v4139
  %v4141 = vsel %vm4119, %v3930, -inf
  %v4142 = vsel %vm4119, %v3944, -inf
  %v4143 = vmax.f32 %v4141, %v4142
  %v4144 = vsel %vm4119, %v3931, -inf
  %v4145 = vsel %vm4119, %v3945, -inf
  %v4146 = vmax.f32 %v4144, %v4145
  %v4147 = vsel %vm4119, %v3932, -inf
  %v4148 = vsel %vm4119, %v3946, -inf
  %v4149 = vmax.f32 %v4147, %v4148
  %v4150 = vsel %vm4119, %v3933, -inf
  %v4151 = vsel %vm4119, %v3947, -inf
  %v4152 = vmax.f32 %v4150, %v4151
  %v4153 = vsel %vm4119, %v3934, -inf
  %v4154 = vsel %vm4119, %v3948, -inf
  %v4155 = vmax.f32 %v4153, %v4154
  %v4156 = vsel %vm4119, %v3935, -inf
  %v4157 = vsel %vm4119, %v3949, -inf
  %v4158 = vmax.f32 %v4156, %v4157
  %v4159 = vsel %vm4119, %v3936, -inf
  %v4160 = vsel %vm4119, %v3950, -inf
  %v4161 = vmax.f32 %v4159, %v4160
  %v4162 = vsel %vm4119, %v3951, -inf
  %v4163 = vsel %vm4119, %v3965, -inf
  %v4164 = vmax.f32 %v4162, %v4163
  %v4165 = vsel %vm4119, %v3952, -inf
  %v4166 = vsel %vm4119, %v3966, -inf
  %v4167 = vmax.f32 %v4165, %v4166
  %v4168 = vsel %vm4119, %v3953, -inf
  %v4169 = vsel %vm4119, %v3967, -inf
  %v4170 = vmax.f32 %v4168, %v4169
  %v4171 = vsel %vm4119, %v3954, -inf
  %v4172 = vsel %vm4119, %v3968, -inf
  %v4173 = vmax.f32 %v4171, %v4172
  %v4174 = vsel %vm4119, %v3955, -inf
  %v4175 = vsel %vm4119, %v3969, -inf
  %v4176 = vmax.f32 %v4174, %v4175
  %v4177 = vsel %vm4119, %v3956, -inf
  %v4178 = vsel %vm4119, %v3970, -inf
  %v4179 = vmax.f32 %v4177, %v4178
  %v4180 = vsel %vm4119, %v3957, -inf
  %v4181 = vsel %vm4119, %v3971, -inf
  %v4182 = vmax.f32 %v4180, %v4181
  %v4183 = vsel %vm4119, %v3958, -inf
  %v4184 = vsel %vm4119, %v3972, -inf
  %v4185 = vmax.f32 %v4183, %v4184
  %v4186 = vsel %vm4119, %v3959, -inf
  %v4187 = vsel %vm4119, %v3973, -inf
  %v4188 = vmax.f32 %v4186, %v4187
  %v4189 = vsel %vm4119, %v3960, -inf
  %v4190 = vsel %vm4119, %v3974, -inf
  %v4191 = vmax.f32 %v4189, %v4190
  %v4192 = vsel %vm4119, %v3961, -inf
  %v4193 = vsel %vm4119, %v3975, -inf
  %v4194 = vmax.f32 %v4192, %v4193
  %v4195 = vsel %vm4119, %v3962, -inf
  %v4196 = vsel %vm4119, %v3976, -inf
  %v4197 = vmax.f32 %v4195, %v4196
  %v4198 = vsel %vm4119, %v3963, -inf
  %v4199 = vsel %vm4119, %v3977, -inf
  %v4200 = vmax.f32 %v4198, %v4199
  %v4201 = vsel %vm4119, %v3964, -inf
  %v4202 = vsel %vm4119, %v3978, -inf
  %v4203 = vmax.f32 %v4201, %v4202
  %v4204 = vsel %vm4119, %v3979, -inf
  %v4205 = vsel %vm4119, %v3993, -inf
  %v4206 = vmax.f32 %v4204, %v4205
  %v4207 = vsel %vm4119, %v3980, -inf
  %v4208 = vsel %vm4119, %v3994, -inf
  %v4209 = vmax.f32 %v4207, %v4208
  %v4210 = vsel %vm4119, %v3981, -inf
  %v4211 = vsel %vm4119, %v3995, -inf
  %v4212 = vmax.f32 %v4210, %v4211
  %v4213 = vsel %vm4119, %v3982, -inf
  %v4214 = vsel %vm4119, %v3996, -inf
  %v4215 = vmax.f32 %v4213, %v4214
  %v4216 = vsel %vm4119, %v3983, -inf
  %v4217 = vsel %vm4119, %v3997, -inf
  %v4218 = vmax.f32 %v4216, %v4217
  %v4219 = vsel %vm4119, %v3984, -inf
  %v4220 = vsel %vm4119, %v3998, -inf
  %v4221 = vmax.f32 %v4219, %v4220
  %v4222 = vsel %vm4119, %v3985, -inf
  %v4223 = vsel %vm4119, %v3999, -inf
  %v4224 = vmax.f32 %v4222, %v4223
  %v4225 = vsel %vm4119, %v3986, -inf
  %v4226 = vsel %vm4119, %v4000, -inf
  %v4227 = vmax.f32 %v4225, %v4226
  %v4228 = vsel %vm4119, %v3987, -inf
  %v4229 = vsel %vm4119, %v4001, -inf
  %v4230 = vmax.f32 %v4228, %v4229
  %v4231 = vsel %vm4119, %v3988, -inf
  %v4232 = vsel %vm4119, %v4002, -inf
  %v4233 = vmax.f32 %v4231, %v4232
  %v4234 = vsel %vm4119, %v3989, -inf
  %v4235 = vsel %vm4119, %v4003, -inf
  %v4236 = vmax.f32 %v4234, %v4235
  %v4237 = vsel %vm4119, %v3990, -inf
  %v4238 = vsel %vm4119, %v4004, -inf
  %v4239 = vmax.f32 %v4237, %v4238
  %v4240 = vsel %vm4119, %v3991, -inf
  %v4241 = vsel %vm4119, %v4005, -inf
  %v4242 = vmax.f32 %v4240, %v4241
  %v4243 = vsel %vm4119, %v3992, -inf
  %v4244 = vsel %vm4119, %v4006, -inf
  %v4245 = vmax.f32 %v4243, %v4244
  %v4246 = vsel %vm4119, %v4007, -inf
  %v4247 = vsel %vm4119, %v4021, -inf
  %v4248 = vmax.f32 %v4246, %v4247
  %v4249 = vsel %vm4119, %v4008, -inf
  %v4250 = vsel %vm4119, %v4022, -inf
  %v4251 = vmax.f32 %v4249, %v4250
  %v4252 = vsel %vm4119, %v4009, -inf
  %v4253 = vsel %vm4119, %v4023, -inf
  %v4254 = vmax.f32 %v4252, %v4253
  %v4255 = vsel %vm4119, %v4010, -inf
  %v4256 = vsel %vm4119, %v4024, -inf
  %v4257 = vmax.f32 %v4255, %v4256
  %v4258 = vsel %vm4119, %v4011, -inf
  %v4259 = vsel %vm4119, %v4025, -inf
  %v4260 = vmax.f32 %v4258, %v4259
  %v4261 = vsel %vm4119, %v4012, -inf
  %v4262 = vsel %vm4119, %v4026, -inf
  %v4263 = vmax.f32 %v4261, %v4262
  %v4264 = vsel %vm4119, %v4013, -inf
  %v4265 = vsel %vm4119, %v4027, -inf
  %v4266 = vmax.f32 %v4264, %v4265
  %v4267 = vsel %vm4119, %v4014, -inf
  %v4268 = vsel %vm4119, %v4028, -inf
  %v4269 = vmax.f32 %v4267, %v4268
  %v4270 = vsel %vm4119, %v4015, -inf
  %v4271 = vsel %vm4119, %v4029, -inf
  %v4272 = vmax.f32 %v4270, %v4271
  %v4273 = vsel %vm4119, %v4016, -inf
  %v4274 = vsel %vm4119, %v4030, -inf
  %v4275 = vmax.f32 %v4273, %v4274
  %v4276 = vsel %vm4119, %v4017, -inf
  %v4277 = vsel %vm4119, %v4031, -inf
  %v4278 = vmax.f32 %v4276, %v4277
  %v4279 = vsel %vm4119, %v4018, -inf
  %v4280 = vsel %vm4119, %v4032, -inf
  %v4281 = vmax.f32 %v4279, %v4280
  %v4282 = vsel %vm4119, %v4019, -inf
  %v4283 = vsel %vm4119, %v4033, -inf
  %v4284 = vmax.f32 %v4282, %v4283
  %v4285 = vsel %vm4119, %v4020, -inf
  %v4286 = vsel %vm4119, %v4034, -inf
  %v4287 = vmax.f32 %v4285, %v4286
  %v4288 = vsel %vm4119, %v4035, -inf
  %v4289 = vsel %vm4119, %v4049, -inf
  %v4290 = vmax.f32 %v4288, %v4289
  %v4291 = vsel %vm4119, %v4036, -inf
  %v4292 = vsel %vm4119, %v4050, -inf
  %v4293 = vmax.f32 %v4291, %v4292
  %v4294 = vsel %vm4119, %v4037, -inf
  %v4295 = vsel %vm4119, %v4051, -inf
  %v4296 = vmax.f32 %v4294, %v4295
  %v4297 = vsel %vm4119, %v4038, -inf
  %v4298 = vsel %vm4119, %v4052, -inf
  %v4299 = vmax.f32 %v4297, %v4298
  %v4300 = vsel %vm4119, %v4039, -inf
  %v4301 = vsel %vm4119, %v4053, -inf
  %v4302 = vmax.f32 %v4300, %v4301
  %v4303 = vsel %vm4119, %v4040, -inf
  %v4304 = vsel %vm4119, %v4054, -inf
  %v4305 = vmax.f32 %v4303, %v4304
  %v4306 = vsel %vm4119, %v4041, -inf
  %v4307 = vsel %vm4119, %v4055, -inf
  %v4308 = vmax.f32 %v4306, %v4307
  %v4309 = vsel %vm4119, %v4042, -inf
  %v4310 = vsel %vm4119, %v4056, -inf
  %v4311 = vmax.f32 %v4309, %v4310
  %v4312 = vsel %vm4119, %v4043, -inf
  %v4313 = vsel %vm4119, %v4057, -inf
  %v4314 = vmax.f32 %v4312, %v4313
  %v4315 = vsel %vm4119, %v4044, -inf
  %v4316 = vsel %vm4119, %v4058, -inf
  %v4317 = vmax.f32 %v4315, %v4316
  %v4318 = vsel %vm4119, %v4045, -inf
  %v4319 = vsel %vm4119, %v4059, -inf
  %v4320 = vmax.f32 %v4318, %v4319
  %v4321 = vsel %vm4119, %v4046, -inf
  %v4322 = vsel %vm4119, %v4060, -inf
  %v4323 = vmax.f32 %v4321, %v4322
  %v4324 = vsel %vm4119, %v4047, -inf
  %v4325 = vsel %vm4119, %v4061, -inf
  %v4326 = vmax.f32 %v4324, %v4325
  %v4327 = vsel %vm4119, %v4048, -inf
  %v4328 = vsel %vm4119, %v4062, -inf
  %v4329 = vmax.f32 %v4327, %v4328
  %v4330 = vsel %vm4119, %v4063, -inf
  %v4331 = vsel %vm4119, %v4077, -inf
  %v4332 = vmax.f32 %v4330, %v4331
  %v4333 = vsel %vm4119, %v4064, -inf
  %v4334 = vsel %vm4119, %v4078, -inf
  %v4335 = vmax.f32 %v4333, %v4334
  %v4336 = vsel %vm4119, %v4065, -inf
  %v4337 = vsel %vm4119, %v4079, -inf
  %v4338 = vmax.f32 %v4336, %v4337
  %v4339 = vsel %vm4119, %v4066, -inf
  %v4340 = vsel %vm4119, %v4080, -inf
  %v4341 = vmax.f32 %v4339, %v4340
  %v4342 = vsel %vm4119, %v4067, -inf
  %v4343 = vsel %vm4119, %v4081, -inf
  %v4344 = vmax.f32 %v4342, %v4343
  %v4345 = vsel %vm4119, %v4068, -inf
  %v4346 = vsel %vm4119, %v4082, -inf
  %v4347 = vmax.f32 %v4345, %v4346
  %v4348 = vsel %vm4119, %v4069, -inf
  %v4349 = vsel %vm4119, %v4083, -inf
  %v4350 = vmax.f32 %v4348, %v4349
  %v4351 = vsel %vm4119, %v4070, -inf
  %v4352 = vsel %vm4119, %v4084, -inf
  %v4353 = vmax.f32 %v4351, %v4352
  %v4354 = vsel %vm4119, %v4071, -inf
  %v4355 = vsel %vm4119, %v4085, -inf
  %v4356 = vmax.f32 %v4354, %v4355
  %v4357 = vsel %vm4119, %v4072, -inf
  %v4358 = vsel %vm4119, %v4086, -inf
  %v4359 = vmax.f32 %v4357, %v4358
  %v4360 = vsel %vm4119, %v4073, -inf
  %v4361 = vsel %vm4119, %v4087, -inf
  %v4362 = vmax.f32 %v4360, %v4361
  %v4363 = vsel %vm4119, %v4074, -inf
  %v4364 = vsel %vm4119, %v4088, -inf
  %v4365 = vmax.f32 %v4363, %v4364
  %v4366 = vsel %vm4119, %v4075, -inf
  %v4367 = vsel %vm4119, %v4089, -inf
  %v4368 = vmax.f32 %v4366, %v4367
  %v4369 = vsel %vm4119, %v4076, -inf
  %v4370 = vsel %vm4119, %v4090, -inf
  %v4371 = vmax.f32 %v4369, %v4370
  %v4372 = vsel %vm4119, %v4091, -inf
  %v4373 = vsel %vm4119, %v4105, -inf
  %v4374 = vmax.f32 %v4372, %v4373
  %v4375 = vsel %vm4119, %v4092, -inf
  %v4376 = vsel %vm4119, %v4106, -inf
  %v4377 = vmax.f32 %v4375, %v4376
  %v4378 = vsel %vm4119, %v4093, -inf
  %v4379 = vsel %vm4119, %v4107, -inf
  %v4380 = vmax.f32 %v4378, %v4379
  %v4381 = vsel %vm4119, %v4094, -inf
  %v4382 = vsel %vm4119, %v4108, -inf
  %v4383 = vmax.f32 %v4381, %v4382
  %v4384 = vsel %vm4119, %v4095, -inf
  %v4385 = vsel %vm4119, %v4109, -inf
  %v4386 = vmax.f32 %v4384, %v4385
  %v4387 = vsel %vm4119, %v4096, -inf
  %v4388 = vsel %vm4119, %v4110, -inf
  %v4389 = vmax.f32 %v4387, %v4388
  %v4390 = vsel %vm4119, %v4097, -inf
  %v4391 = vsel %vm4119, %v4111, -inf
  %v4392 = vmax.f32 %v4390, %v4391
  %v4393 = vsel %vm4119, %v4098, -inf
  %v4394 = vsel %vm4119, %v4112, -inf
  %v4395 = vmax.f32 %v4393, %v4394
  %v4396 = vsel %vm4119, %v4099, -inf
  %v4397 = vsel %vm4119, %v4113, -inf
  %v4398 = vmax.f32 %v4396, %v4397
  %v4399 = vsel %vm4119, %v4100, -inf
  %v4400 = vsel %vm4119, %v4114, -inf
  %v4401 = vmax.f32 %v4399, %v4400
  %v4402 = vsel %vm4119, %v4101, -inf
  %v4403 = vsel %vm4119, %v4115, -inf
  %v4404 = vmax.f32 %v4402, %v4403
  %v4405 = vsel %vm4119, %v4102, -inf
  %v4406 = vsel %vm4119, %v4116, -inf
  %v4407 = vmax.f32 %v4405, %v4406
  %v4408 = vsel %vm4119, %v4103, -inf
  %v4409 = vsel %vm4119, %v4117, -inf
  %v4410 = vmax.f32 %v4408, %v4409
  %v4411 = vsel %vm4119, %v4104, -inf
  %v4412 = vsel %vm4119, %v4118, -inf
  %v4413 = vmax.f32 %v4411, %v4412
  %v4414 = vsel %vm4119, %v4122, -inf
  %v4415 = vsel %vm4119, %v4125, -inf
  %v4416 = vmax.f32 %v4414, %v4415
  %v4417 = vsel %vm4119, %v4128, -inf
  %v4418 = vsel %vm4119, %v4131, -inf
  %v4419 = vmax.f32 %v4417, %v4418
  %v4420 = vsel %vm4119, %v4134, -inf
  %v4421 = vsel %vm4119, %v4137, -inf
  %v4422 = vmax.f32 %v4420, %v4421
  %v4423 = vsel %vm4119, %v4140, -inf
  %v4424 = vsel %vm4119, %v4143, -inf
  %v4425 = vmax.f32 %v4423, %v4424
  %v4426 = vsel %vm4119, %v4146, -inf
  %v4427 = vsel %vm4119, %v4149, -inf
  %v4428 = vmax.f32 %v4426, %v4427
  %v4429 = vsel %vm4119, %v4152, -inf
  %v4430 = vsel %vm4119, %v4155, -inf
  %v4431 = vmax.f32 %v4429, %v4430
  %v4432 = vsel %vm4119, %v4158, -inf
  %v4433 = vsel %vm4119, %v4161, -inf
  %v4434 = vmax.f32 %v4432, %v4433
  %v4435 = vsel %vm4119, %v4164, -inf
  %v4436 = vsel %vm4119, %v4167, -inf
  %v4437 = vmax.f32 %v4435, %v4436
  %v4438 = vsel %vm4119, %v4170, -inf
  %v4439 = vsel %vm4119, %v4173, -inf
  %v4440 = vmax.f32 %v4438, %v4439
  %v4441 = vsel %vm4119, %v4176, -inf
  %v4442 = vsel %vm4119, %v4179, -inf
  %v4443 = vmax.f32 %v4441, %v4442
  %v4444 = vsel %vm4119, %v4182, -inf
  %v4445 = vsel %vm4119, %v4185, -inf
  %v4446 = vmax.f32 %v4444, %v4445
  %v4447 = vsel %vm4119, %v4188, -inf
  %v4448 = vsel %vm4119, %v4191, -inf
  %v4449 = vmax.f32 %v4447, %v4448
  %v4450 = vsel %vm4119, %v4194, -inf
  %v4451 = vsel %vm4119, %v4197, -inf
  %v4452 = vmax.f32 %v4450, %v4451
  %v4453 = vsel %vm4119, %v4200, -inf
  %v4454 = vsel %vm4119, %v4203, -inf
  %v4455 = vmax.f32 %v4453, %v4454
  %v4456 = vsel %vm4119, %v4206, -inf
  %v4457 = vsel %vm4119, %v4209, -inf
  %v4458 = vmax.f32 %v4456, %v4457
  %v4459 = vsel %vm4119, %v4212, -inf
  %v4460 = vsel %vm4119, %v4215, -inf
  %v4461 = vmax.f32 %v4459, %v4460
  %v4462 = vsel %vm4119, %v4218, -inf
  %v4463 = vsel %vm4119, %v4221, -inf
  %v4464 = vmax.f32 %v4462, %v4463
  %v4465 = vsel %vm4119, %v4224, -inf
  %v4466 = vsel %vm4119, %v4227, -inf
  %v4467 = vmax.f32 %v4465, %v4466
  %v4468 = vsel %vm4119, %v4230, -inf
  %v4469 = vsel %vm4119, %v4233, -inf
  %v4470 = vmax.f32 %v4468, %v4469
  %v4471 = vsel %vm4119, %v4236, -inf
  %v4472 = vsel %vm4119, %v4239, -inf
  %v4473 = vmax.f32 %v4471, %v4472
  %v4474 = vsel %vm4119, %v4242, -inf
  %v4475 = vsel %vm4119, %v4245, -inf
  %v4476 = vmax.f32 %v4474, %v4475
  %v4477 = vsel %vm4119, %v4248, -inf
  %v4478 = vsel %vm4119, %v4251, -inf
  %v4479 = vmax.f32 %v4477, %v4478
  %v4480 = vsel %vm4119, %v4254, -inf
  %v4481 = vsel %vm4119, %v4257, -inf
  %v4482 = vmax.f32 %v4480, %v4481
  %v4483 = vsel %vm4119, %v4260, -inf
  %v4484 = vsel %vm4119, %v4263, -inf
  %v4485 = vmax.f32 %v4483, %v4484
  %v4486 = vsel %vm4119, %v4266, -inf
  %v4487 = vsel %vm4119, %v4269, -inf
  %v4488 = vmax.f32 %v4486, %v4487
  %v4489 = vsel %vm4119, %v4272, -inf
  %v4490 = vsel %vm4119, %v4275, -inf
  %v4491 = vmax.f32 %v4489, %v4490
  %v4492 = vsel %vm4119, %v4278, -inf
  %v4493 = vsel %vm4119, %v4281, -inf
  %v4494 = vmax.f32 %v4492, %v4493
  %v4495 = vsel %vm4119, %v4284, -inf
  %v4496 = vsel %vm4119, %v4287, -inf
  %v4497 = vmax.f32 %v4495, %v4496
  %v4498 = vsel %vm4119, %v4290, -inf
  %v4499 = vsel %vm4119, %v4293, -inf
  %v4500 = vmax.f32 %v4498, %v4499
  %v4501 = vsel %vm4119, %v4296, -inf
  %v4502 = vsel %vm4119, %v4299, -inf
  %v4503 = vmax.f32 %v4501, %v4502
  %v4504 = vsel %vm4119, %v4302, -inf
  %v4505 = vsel %vm4119, %v4305, -inf
  %v4506 = vmax.f32 %v4504, %v4505
  %v4507 = vsel %vm4119, %v4308, -inf
  %v4508 = vsel %vm4119, %v4311, -inf
  %v4509 = vmax.f32 %v4507, %v4508
  %v4510 = vsel %vm4119, %v4314, -inf
  %v4511 = vsel %vm4119, %v4317, -inf
  %v4512 = vmax.f32 %v4510, %v4511
  %v4513 = vsel %vm4119, %v4320, -inf
  %v4514 = vsel %vm4119, %v4323, -inf
  %v4515 = vmax.f32 %v4513, %v4514
  %v4516 = vsel %vm4119, %v4326, -inf
  %v4517 = vsel %vm4119, %v4329, -inf
  %v4518 = vmax.f32 %v4516, %v4517
  %v4519 = vsel %vm4119, %v4332, -inf
  %v4520 = vsel %vm4119, %v4335, -inf
  %v4521 = vmax.f32 %v4519, %v4520
  %v4522 = vsel %vm4119, %v4338, -inf
  %v4523 = vsel %vm4119, %v4341, -inf
  %v4524 = vmax.f32 %v4522, %v4523
  %v4525 = vsel %vm4119, %v4344, -inf
  %v4526 = vsel %vm4119, %v4347, -inf
  %v4527 = vmax.f32 %v4525, %v4526
  %v4528 = vsel %vm4119, %v4350, -inf
  %v4529 = vsel %vm4119, %v4353, -inf
  %v4530 = vmax.f32 %v4528, %v4529
  %v4531 = vsel %vm4119, %v4356, -inf
  %v4532 = vsel %vm4119, %v4359, -inf
  %v4533 = vmax.f32 %v4531, %v4532
  %v4534 = vsel %vm4119, %v4362, -inf
  %v4535 = vsel %vm4119, %v4365, -inf
  %v4536 = vmax.f32 %v4534, %v4535
  %v4537 = vsel %vm4119, %v4368, -inf
  %v4538 = vsel %vm4119, %v4371, -inf
  %v4539 = vmax.f32 %v4537, %v4538
  %v4540 = vsel %vm4119, %v4374, -inf
  %v4541 = vsel %vm4119, %v4377, -inf
  %v4542 = vmax.f32 %v4540, %v4541
  %v4543 = vsel %vm4119, %v4380, -inf
  %v4544 = vsel %vm4119, %v4383, -inf
  %v4545 = vmax.f32 %v4543, %v4544
  %v4546 = vsel %vm4119, %v4386, -inf
  %v4547 = vsel %vm4119, %v4389, -inf
  %v4548 = vmax.f32 %v4546, %v4547
  %v4549 = vsel %vm4119, %v4392, -inf
  %v4550 = vsel %vm4119, %v4395, -inf
  %v4551 = vmax.f32 %v4549, %v4550
  %v4552 = vsel %vm4119, %v4398, -inf
  %v4553 = vsel %vm4119, %v4401, -inf
  %v4554 = vmax.f32 %v4552, %v4553
  %v4555 = vsel %vm4119, %v4404, -inf
  %v4556 = vsel %vm4119, %v4407, -inf
  %v4557 = vmax.f32 %v4555, %v4556
  %v4558 = vsel %vm4119, %v4410, -inf
  %v4559 = vsel %vm4119, %v4413, -inf
  %v4560 = vmax.f32 %v4558, %v4559
  %v4562 = vperm.slane %v292, 0
  %v4564 = vadd.f32 %v4416, %v4562
  %v4565 = vadd.f32 %v4419, %v4562
  %v4566 = vadd.f32 %v4422, %v4562
  %v4567 = vadd.f32 %v4425, %v4562
  %v4568 = vadd.f32 %v4428, %v4562
  %v4569 = vadd.f32 %v4431, %v4562
  %v4570 = vadd.f32 %v4434, %v4562
  %v4571 = vadd.f32 %v4437, %v4562
  %v4572 = vadd.f32 %v4440, %v4562
  %v4573 = vadd.f32 %v4443, %v4562
  %v4574 = vadd.f32 %v4446, %v4562
  %v4575 = vadd.f32 %v4449, %v4562
  %v4576 = vadd.f32 %v4452, %v4562
  %v4577 = vadd.f32 %v4455, %v4562
  %v4578 = vadd.f32 %v4458, %v4562
  %v4579 = vadd.f32 %v4461, %v4562
  %v4580 = vadd.f32 %v4464, %v4562
  %v4581 = vadd.f32 %v4467, %v4562
  %v4582 = vadd.f32 %v4470, %v4562
  %v4583 = vadd.f32 %v4473, %v4562
  %v4584 = vadd.f32 %v4476, %v4562
  %v4585 = vadd.f32 %v4479, %v4562
  %v4586 = vadd.f32 %v4482, %v4562
  %v4587 = vadd.f32 %v4485, %v4562
  %v4588 = vadd.f32 %v4488, %v4562
  %v4589 = vadd.f32 %v4491, %v4562
  %v4590 = vadd.f32 %v4494, %v4562
  %v4591 = vadd.f32 %v4497, %v4562
  %v4592 = vadd.f32 %v4500, %v4562
  %v4593 = vadd.f32 %v4503, %v4562
  %v4594 = vadd.f32 %v4506, %v4562
  %v4595 = vadd.f32 %v4509, %v4562
  %v4596 = vadd.f32 %v4512, %v4562
  %v4597 = vadd.f32 %v4515, %v4562
  %v4598 = vadd.f32 %v4518, %v4562
  %v4599 = vadd.f32 %v4521, %v4562
  %v4600 = vadd.f32 %v4524, %v4562
  %v4601 = vadd.f32 %v4527, %v4562
  %v4602 = vadd.f32 %v4530, %v4562
  %v4603 = vadd.f32 %v4533, %v4562
  %v4604 = vadd.f32 %v4536, %v4562
  %v4605 = vadd.f32 %v4539, %v4562
  %v4606 = vadd.f32 %v4542, %v4562
  %v4607 = vadd.f32 %v4545, %v4562
  %v4608 = vadd.f32 %v4548, %v4562
  %v4609 = vadd.f32 %v4551, %v4562
  %v4610 = vadd.f32 %v4554, %v4562
  %v4611 = vadd.f32 %v4557, %v4562
  %v4612 = vadd.f32 %v4560, %v4562
  %v4613 = vld [vmem:[%s3] sm:$0xff]
  %v4614 = vld [vmem:[%s3 + $0x8] sm:$0xff]
  %v4615 = vld [vmem:[%s3 + $0x10] sm:$0xff]
  %v4616 = vld [vmem:[%s3 + $0x18] sm:$0xff]
  %v4617 = vld [vmem:[%s4] sm:$0x1]
  %v4619 = vsel %vm4119, %v4565, 0
  %v4622 = vsel %vm4119, %v4566, 0
  %v4625 = vsel %vm4119, %v4567, 0
  %v4628 = vsel %vm4119, %v4568, 0
  %v4631 = vsel %vm4119, %v4569, 0
  %v4634 = vsel %vm4119, %v4570, 0
  %v4637 = vsel %vm4119, %v4572, 0
  %v4640 = vsel %vm4119, %v4573, 0
  %v4643 = vsel %vm4119, %v4574, 0
  %v4646 = vsel %vm4119, %v4575, 0
  %v4649 = vsel %vm4119, %v4576, 0
  %v4652 = vsel %vm4119, %v4577, 0
  %v4655 = vsel %vm4119, %v4579, 0
  %v4658 = vsel %vm4119, %v4580, 0
  %v4661 = vsel %vm4119, %v4581, 0
  %v4664 = vsel %vm4119, %v4582, 0
  %v4667 = vsel %vm4119, %v4583, 0
  %v4670 = vsel %vm4119, %v4584, 0
  %v4673 = vsel %vm4119, %v4586, 0
  %v4676 = vsel %vm4119, %v4587, 0
  %v4679 = vsel %vm4119, %v4588, 0
  %v4682 = vsel %vm4119, %v4589, 0
  %v4685 = vsel %vm4119, %v4590, 0
  %v4688 = vsel %vm4119, %v4591, 0
  %v4691 = vsel %vm4119, %v4593, 0
  %v4694 = vsel %vm4119, %v4594, 0
  %v4697 = vsel %vm4119, %v4595, 0
  %v4700 = vsel %vm4119, %v4596, 0
  %v4703 = vsel %vm4119, %v4597, 0
  %v4706 = vsel %vm4119, %v4598, 0
  %v4709 = vsel %vm4119, %v4600, 0
  %v4712 = vsel %vm4119, %v4601, 0
  %v4715 = vsel %vm4119, %v4602, 0
  %v4718 = vsel %vm4119, %v4603, 0
  %v4721 = vsel %vm4119, %v4604, 0
  %v4724 = vsel %vm4119, %v4605, 0
  %4726 = vmatpush.msra.mxu0 0.0
  %4727 = vmatpush.msra.mxu0 0.0
  %4728 = vmatpush.msra.mxu0 0.0
  %4729 = vmatpush.msra.mxu0 0.0
  %4730 = vmatpush.msra.mxu0 0.0
  %4731 = vmatpush.msra.mxu0 0.0
  %4732 = vmatpush.msra.mxu0 0.0
  %4733 = vmatpush.msra.mxu0 0.0
  %4734 = vmatpush.msra.mxu0 0.0
  %4735 = vmatpush.msra.mxu0 0.0
  %4736 = vmatpush.msra.mxu0 0.0
  %4737 = vmatpush.msra.mxu0 0.0
  %4738 = vmatpush.msra.mxu0 0.0
  %4739 = vmatpush.msra.mxu0 0.0
  %4740 = vmatpush.msra.mxu0 0.0
  %4741 = vmatpush.msra.mxu0 %v4614
  %4742 = vmatmul.f32.gmra.mxu0 %v4619
  %v4743 = vpop.f32.mrf.mxu0
  %v4744 = vadd.f32 0.0, %v4743
  %4745 = vmatmul.f32.gmra.mxu0 %v4622
  %v4746 = vpop.f32.mrf.mxu0
  %v4747 = vadd.f32 0.0, %v4746
  %4748 = vmatmul.f32.gmra.mxu0 %v4625
  %v4749 = vpop.f32.mrf.mxu0
  %v4750 = vadd.f32 0.0, %v4749
  %4751 = vmatmul.f32.gmra.mxu0 %v4628
  %v4752 = vpop.f32.mrf.mxu0
  %v4753 = vadd.f32 0.0, %v4752
  %4754 = vmatmul.f32.gmra.mxu0 %v4631
  %v4755 = vpop.f32.mrf.mxu0
  %v4756 = vadd.f32 0.0, %v4755
  %4757 = vmatmul.f32.gmra.mxu0 %v4634
  %v4758 = vpop.f32.mrf.mxu0
  %v4759 = vadd.f32 0.0, %v4758
  %4760 = vmatmul.f32.gmra.mxu0 %v4637
  %v4761 = vpop.f32.mrf.mxu0
  %v4762 = vadd.f32 0.0, %v4761
  %4763 = vmatmul.f32.gmra.mxu0 %v4640
  %v4764 = vpop.f32.mrf.mxu0
  %v4765 = vadd.f32 0.0, %v4764
  %4766 = vmatmul.f32.gmra.mxu0 %v4643
  %v4767 = vpop.f32.mrf.mxu0
  %v4768 = vadd.f32 0.0, %v4767
  %4769 = vmatmul.f32.gmra.mxu0 %v4646
  %v4770 = vpop.f32.mrf.mxu0
  %v4771 = vadd.f32 0.0, %v4770
  %4772 = vmatmul.f32.gmra.mxu0 %v4649
  %v4773 = vpop.f32.mrf.mxu0
  %v4774 = vadd.f32 0.0, %v4773
  %4775 = vmatmul.f32.gmra.mxu0 %v4652
  %v4776 = vpop.f32.mrf.mxu0
  %v4777 = vadd.f32 0.0, %v4776
  %4778 = vmatmul.f32.gmra.mxu0 %v4655
  %v4779 = vpop.f32.mrf.mxu0
  %v4780 = vadd.f32 0.0, %v4779
  %4781 = vmatmul.f32.gmra.mxu0 %v4658
  %v4782 = vpop.f32.mrf.mxu0
  %v4783 = vadd.f32 0.0, %v4782
  %4784 = vmatmul.f32.gmra.mxu0 %v4661
  %v4785 = vpop.f32.mrf.mxu0
  %v4786 = vadd.f32 0.0, %v4785
  %4787 = vmatmul.f32.gmra.mxu0 %v4664
  %v4788 = vpop.f32.mrf.mxu0
  %v4789 = vadd.f32 0.0, %v4788
  %4790 = vmatmul.f32.gmra.mxu0 %v4667
  %v4791 = vpop.f32.mrf.mxu0
  %v4792 = vadd.f32 0.0, %v4791
  %4793 = vmatmul.f32.gmra.mxu0 %v4670
  %v4794 = vpop.f32.mrf.mxu0
  %v4795 = vadd.f32 0.0, %v4794
  %4796 = vmatmul.f32.gmra.mxu0 %v4673
  %v4797 = vpop.f32.mrf.mxu0
  %v4798 = vadd.f32 0.0, %v4797
  %4799 = vmatmul.f32.gmra.mxu0 %v4676
  %v4800 = vpop.f32.mrf.mxu0
  %v4801 = vadd.f32 0.0, %v4800
  %4802 = vmatmul.f32.gmra.mxu0 %v4679
  %v4803 = vpop.f32.mrf.mxu0
  %v4804 = vadd.f32 0.0, %v4803
  %4805 = vmatmul.f32.gmra.mxu0 %v4682
  %v4806 = vpop.f32.mrf.mxu0
  %v4807 = vadd.f32 0.0, %v4806
  %4808 = vmatmul.f32.gmra.mxu0 %v4685
  %v4809 = vpop.f32.mrf.mxu0
  %v4810 = vadd.f32 0.0, %v4809
  %4811 = vmatmul.f32.gmra.mxu0 %v4688
  %v4812 = vpop.f32.mrf.mxu0
  %v4813 = vadd.f32 0.0, %v4812
  %4814 = vmatmul.f32.gmra.mxu0 %v4691
  %v4815 = vpop.f32.mrf.mxu0
  %v4816 = vadd.f32 0.0, %v4815
  %4817 = vmatmul.f32.gmra.mxu0 %v4694
  %v4818 = vpop.f32.mrf.mxu0
  %v4819 = vadd.f32 0.0, %v4818
  %4820 = vmatmul.f32.gmra.mxu0 %v4697
  %v4821 = vpop.f32.mrf.mxu0
  %v4822 = vadd.f32 0.0, %v4821
  %4823 = vmatmul.f32.gmra.mxu0 %v4700
  %v4824 = vpop.f32.mrf.mxu0
  %v4825 = vadd.f32 0.0, %v4824
  %4826 = vmatmul.f32.gmra.mxu0 %v4703
  %v4827 = vpop.f32.mrf.mxu0
  %v4828 = vadd.f32 0.0, %v4827
  %4829 = vmatmul.f32.gmra.mxu0 %v4706
  %v4830 = vpop.f32.mrf.mxu0
  %v4831 = vadd.f32 0.0, %v4830
  %4832 = vmatmul.f32.gmra.mxu0 %v4709
  %v4833 = vpop.f32.mrf.mxu0
  %v4834 = vadd.f32 0.0, %v4833
  %4835 = vmatmul.f32.gmra.mxu0 %v4712
  %v4836 = vpop.f32.mrf.mxu0
  %v4837 = vadd.f32 0.0, %v4836
  %4838 = vmatmul.f32.gmra.mxu0 %v4715
  %v4839 = vpop.f32.mrf.mxu0
  %v4840 = vadd.f32 0.0, %v4839
  %4841 = vmatmul.f32.gmra.mxu0 %v4718
  %v4842 = vpop.f32.mrf.mxu0
  %v4843 = vadd.f32 0.0, %v4842
  %4844 = vmatmul.f32.gmra.mxu0 %v4721
  %v4845 = vpop.f32.mrf.mxu0
  %v4846 = vadd.f32 0.0, %v4845
  %4847 = vmatmul.f32.gmra.mxu0 %v4724
  %v4848 = vpop.f32.mrf.mxu0
  %v4849 = vadd.f32 0.0, %v4848
  %4850 = vdwg.mxu0
  %v4852 = vsel %vm4119, %v4564, 0
  %v4855 = vsel %vm4119, %v4571, 0
  %v4858 = vsel %vm4119, %v4578, 0
  %v4861 = vsel %vm4119, %v4585, 0
  %v4864 = vsel %vm4119, %v4592, 0
  %v4867 = vsel %vm4119, %v4599, 0
  %4869 = vmatpush.msra.mxu0 0.0
  %4870 = vmatpush.msra.mxu0 0.0
  %4871 = vmatpush.msra.mxu0 0.0
  %4872 = vmatpush.msra.mxu0 0.0
  %4873 = vmatpush.msra.mxu0 0.0
  %4874 = vmatpush.msra.mxu0 0.0
  %4875 = vmatpush.msra.mxu0 0.0
  %4876 = vmatpush.msra.mxu0 0.0
  %4877 = vmatpush.msra.mxu0 0.0
  %4878 = vmatpush.msra.mxu0 0.0
  %4879 = vmatpush.msra.mxu0 0.0
  %4880 = vmatpush.msra.mxu0 0.0
  %4881 = vmatpush.msra.mxu0 0.0
  %4882 = vmatpush.msra.mxu0 0.0
  %4883 = vmatpush.msra.mxu0 0.0
  %4884 = vmatpush.msra.mxu0 %v4613
  %4885 = vmatmul.f32.gmra.mxu0 %v4852
  %v4886 = vpop.f32.mrf.mxu0
  %v4887 = vadd.f32 %v4744, %v4886
  %4888 = vmatmul.f32.gmra.mxu0 %v4619
  %v4889 = vpop.f32.mrf.mxu0
  %v4890 = vadd.f32 %v4747, %v4889
  %4891 = vmatmul.f32.gmra.mxu0 %v4622
  %v4892 = vpop.f32.mrf.mxu0
  %v4893 = vadd.f32 %v4750, %v4892
  %4894 = vmatmul.f32.gmra.mxu0 %v4625
  %v4895 = vpop.f32.mrf.mxu0
  %v4896 = vadd.f32 %v4753, %v4895
  %4897 = vmatmul.f32.gmra.mxu0 %v4628
  %v4898 = vpop.f32.mrf.mxu0
  %v4899 = vadd.f32 %v4756, %v4898
  %4900 = vmatmul.f32.gmra.mxu0 %v4631
  %v4901 = vpop.f32.mrf.mxu0
  %v4902 = vadd.f32 %v4759, %v4901
  %4903 = vmatmul.f32.gmra.mxu0 %v4855
  %v4904 = vpop.f32.mrf.mxu0
  %v4905 = vadd.f32 %v4762, %v4904
  %4906 = vmatmul.f32.gmra.mxu0 %v4637
  %v4907 = vpop.f32.mrf.mxu0
  %v4908 = vadd.f32 %v4765, %v4907
  %4909 = vmatmul.f32.gmra.mxu0 %v4640
  %v4910 = vpop.f32.mrf.mxu0
  %v4911 = vadd.f32 %v4768, %v4910
  %4912 = vmatmul.f32.gmra.mxu0 %v4643
  %v4913 = vpop.f32.mrf.mxu0
  %v4914 = vadd.f32 %v4771, %v4913
  %4915 = vmatmul.f32.gmra.mxu0 %v4646
  %v4916 = vpop.f32.mrf.mxu0
  %v4917 = vadd.f32 %v4774, %v4916
  %4918 = vmatmul.f32.gmra.mxu0 %v4649
  %v4919 = vpop.f32.mrf.mxu0
  %v4920 = vadd.f32 %v4777, %v4919
  %4921 = vmatmul.f32.gmra.mxu0 %v4858
  %v4922 = vpop.f32.mrf.mxu0
  %v4923 = vadd.f32 %v4780, %v4922
  %4924 = vmatmul.f32.gmra.mxu0 %v4655
  %v4925 = vpop.f32.mrf.mxu0
  %v4926 = vadd.f32 %v4783, %v4925
  %4927 = vmatmul.f32.gmra.mxu0 %v4658
  %v4928 = vpop.f32.mrf.mxu0
  %v4929 = vadd.f32 %v4786, %v4928
  %4930 = vmatmul.f32.gmra.mxu0 %v4661
  %v4931 = vpop.f32.mrf.mxu0
  %v4932 = vadd.f32 %v4789, %v4931
  %4933 = vmatmul.f32.gmra.mxu0 %v4664
  %v4934 = vpop.f32.mrf.mxu0
  %v4935 = vadd.f32 %v4792, %v4934
  %4936 = vmatmul.f32.gmra.mxu0 %v4667
  %v4937 = vpop.f32.mrf.mxu0
  %v4938 = vadd.f32 %v4795, %v4937
  %4939 = vmatmul.f32.gmra.mxu0 %v4861
  %v4940 = vpop.f32.mrf.mxu0
  %v4941 = vadd.f32 %v4798, %v4940
  %4942 = vmatmul.f32.gmra.mxu0 %v4673
  %v4943 = vpop.f32.mrf.mxu0
  %v4944 = vadd.f32 %v4801, %v4943
  %4945 = vmatmul.f32.gmra.mxu0 %v4676
  %v4946 = vpop.f32.mrf.mxu0
  %v4947 = vadd.f32 %v4804, %v4946
  %4948 = vmatmul.f32.gmra.mxu0 %v4679
  %v4949 = vpop.f32.mrf.mxu0
  %v4950 = vadd.f32 %v4807, %v4949
  %4951 = vmatmul.f32.gmra.mxu0 %v4682
  %v4952 = vpop.f32.mrf.mxu0
  %v4953 = vadd.f32 %v4810, %v4952
  %4954 = vmatmul.f32.gmra.mxu0 %v4685
  %v4955 = vpop.f32.mrf.mxu0
  %v4956 = vadd.f32 %v4813, %v4955
  %4957 = vmatmul.f32.gmra.mxu0 %v4864
  %v4958 = vpop.f32.mrf.mxu0
  %v4959 = vadd.f32 %v4816, %v4958
  %4960 = vmatmul.f32.gmra.mxu0 %v4691
  %v4961 = vpop.f32.mrf.mxu0
  %v4962 = vadd.f32 %v4819, %v4961
  %4963 = vmatmul.f32.gmra.mxu0 %v4694
  %v4964 = vpop.f32.mrf.mxu0
  %v4965 = vadd.f32 %v4822, %v4964
  %4966 = vmatmul.f32.gmra.mxu0 %v4697
  %v4967 = vpop.f32.mrf.mxu0
  %v4968 = vadd.f32 %v4825, %v4967
  %4969 = vmatmul.f32.gmra.mxu0 %v4700
  %v4970 = vpop.f32.mrf.mxu0
  %v4971 = vadd.f32 %v4828, %v4970
  %4972 = vmatmul.f32.gmra.mxu0 %v4703
  %v4973 = vpop.f32.mrf.mxu0
  %v4974 = vadd.f32 %v4831, %v4973
  %4975 = vmatmul.f32.gmra.mxu0 %v4867
  %v4976 = vpop.f32.mrf.mxu0
  %v4977 = vadd.f32 %v4834, %v4976
  %4978 = vmatmul.f32.gmra.mxu0 %v4709
  %v4979 = vpop.f32.mrf.mxu0
  %v4980 = vadd.f32 %v4837, %v4979
  %4981 = vmatmul.f32.gmra.mxu0 %v4712
  %v4982 = vpop.f32.mrf.mxu0
  %v4983 = vadd.f32 %v4840, %v4982
  %4984 = vmatmul.f32.gmra.mxu0 %v4715
  %v4985 = vpop.f32.mrf.mxu0
  %v4986 = vadd.f32 %v4843, %v4985
  %4987 = vmatmul.f32.gmra.mxu0 %v4718
  %v4988 = vpop.f32.mrf.mxu0
  %v4989 = vadd.f32 %v4846, %v4988
  %4990 = vmatmul.f32.gmra.mxu0 %v4721
  %v4991 = vpop.f32.mrf.mxu0
  %v4992 = vadd.f32 %v4849, %v4991
  %4993 = vdwg.mxu0
  %v4995 = vsel %vm4119, %v4606, 0
  %v4998 = vsel %vm4119, %v4607, 0
  %v5001 = vsel %vm4119, %v4608, 0
  %v5004 = vsel %vm4119, %v4609, 0
  %v5007 = vsel %vm4119, %v4610, 0
  %v5010 = vsel %vm4119, %v4611, 0
  %5012 = vmatpush.msra.mxu0 0.0
  %5013 = vmatpush.msra.mxu0 0.0
  %5014 = vmatpush.msra.mxu0 0.0
  %5015 = vmatpush.msra.mxu0 0.0
  %5016 = vmatpush.msra.mxu0 0.0
  %5017 = vmatpush.msra.mxu0 0.0
  %5018 = vmatpush.msra.mxu0 0.0
  %5019 = vmatpush.msra.mxu0 0.0
  %5020 = vmatpush.msra.mxu0 0.0
  %5021 = vmatpush.msra.mxu0 0.0
  %5022 = vmatpush.msra.mxu0 0.0
  %5023 = vmatpush.msra.mxu0 0.0
  %5024 = vmatpush.msra.mxu0 0.0
  %5025 = vmatpush.msra.mxu0 0.0
  %5026 = vmatpush.msra.mxu0 0.0
  %5027 = vmatpush.msra.mxu0 %v4615
  %5028 = vmatmul.f32.gmra.mxu0 %v4855
  %v5029 = vpop.f32.mrf.mxu0
  %v5030 = vadd.f32 0.0, %v5029
  %5031 = vmatmul.f32.gmra.mxu0 %v4637
  %v5032 = vpop.f32.mrf.mxu0
  %v5033 = vadd.f32 0.0, %v5032
  %5034 = vmatmul.f32.gmra.mxu0 %v4640
  %v5035 = vpop.f32.mrf.mxu0
  %v5036 = vadd.f32 0.0, %v5035
  %5037 = vmatmul.f32.gmra.mxu0 %v4643
  %v5038 = vpop.f32.mrf.mxu0
  %v5039 = vadd.f32 0.0, %v5038
  %5040 = vmatmul.f32.gmra.mxu0 %v4646
  %v5041 = vpop.f32.mrf.mxu0
  %v5042 = vadd.f32 0.0, %v5041
  %5043 = vmatmul.f32.gmra.mxu0 %v4649
  %v5044 = vpop.f32.mrf.mxu0
  %v5045 = vadd.f32 0.0, %v5044
  %5046 = vmatmul.f32.gmra.mxu0 %v4858
  %v5047 = vpop.f32.mrf.mxu0
  %v5048 = vadd.f32 0.0, %v5047
  %5049 = vmatmul.f32.gmra.mxu0 %v4655
  %v5050 = vpop.f32.mrf.mxu0
  %v5051 = vadd.f32 0.0, %v5050
  %5052 = vmatmul.f32.gmra.mxu0 %v4658
  %v5053 = vpop.f32.mrf.mxu0
  %v5054 = vadd.f32 0.0, %v5053
  %5055 = vmatmul.f32.gmra.mxu0 %v4661
  %v5056 = vpop.f32.mrf.mxu0
  %v5057 = vadd.f32 0.0, %v5056
  %5058 = vmatmul.f32.gmra.mxu0 %v4664
  %v5059 = vpop.f32.mrf.mxu0
  %v5060 = vadd.f32 0.0, %v5059
  %5061 = vmatmul.f32.gmra.mxu0 %v4667
  %v5062 = vpop.f32.mrf.mxu0
  %v5063 = vadd.f32 0.0, %v5062
  %5064 = vmatmul.f32.gmra.mxu0 %v4861
  %v5065 = vpop.f32.mrf.mxu0
  %v5066 = vadd.f32 0.0, %v5065
  %5067 = vmatmul.f32.gmra.mxu0 %v4673
  %v5068 = vpop.f32.mrf.mxu0
  %v5069 = vadd.f32 0.0, %v5068
  %5070 = vmatmul.f32.gmra.mxu0 %v4676
  %v5071 = vpop.f32.mrf.mxu0
  %v5072 = vadd.f32 0.0, %v5071
  %5073 = vmatmul.f32.gmra.mxu0 %v4679
  %v5074 = vpop.f32.mrf.mxu0
  %v5075 = vadd.f32 0.0, %v5074
  %5076 = vmatmul.f32.gmra.mxu0 %v4682
  %v5077 = vpop.f32.mrf.mxu0
  %v5078 = vadd.f32 0.0, %v5077
  %5079 = vmatmul.f32.gmra.mxu0 %v4685
  %v5080 = vpop.f32.mrf.mxu0
  %v5081 = vadd.f32 0.0, %v5080
  %5082 = vmatmul.f32.gmra.mxu0 %v4864
  %v5083 = vpop.f32.mrf.mxu0
  %v5084 = vadd.f32 0.0, %v5083
  %5085 = vmatmul.f32.gmra.mxu0 %v4691
  %v5086 = vpop.f32.mrf.mxu0
  %v5087 = vadd.f32 0.0, %v5086
  %5088 = vmatmul.f32.gmra.mxu0 %v4694
  %v5089 = vpop.f32.mrf.mxu0
  %v5090 = vadd.f32 0.0, %v5089
  %5091 = vmatmul.f32.gmra.mxu0 %v4697
  %v5092 = vpop.f32.mrf.mxu0
  %v5093 = vadd.f32 0.0, %v5092
  %5094 = vmatmul.f32.gmra.mxu0 %v4700
  %v5095 = vpop.f32.mrf.mxu0
  %v5096 = vadd.f32 0.0, %v5095
  %5097 = vmatmul.f32.gmra.mxu0 %v4703
  %v5098 = vpop.f32.mrf.mxu0
  %v5099 = vadd.f32 0.0, %v5098
  %5100 = vmatmul.f32.gmra.mxu0 %v4867
  %v5101 = vpop.f32.mrf.mxu0
  %v5102 = vadd.f32 0.0, %v5101
  %5103 = vmatmul.f32.gmra.mxu0 %v4709
  %v5104 = vpop.f32.mrf.mxu0
  %v5105 = vadd.f32 0.0, %v5104
  %5106 = vmatmul.f32.gmra.mxu0 %v4712
  %v5107 = vpop.f32.mrf.mxu0
  %v5108 = vadd.f32 0.0, %v5107
  %5109 = vmatmul.f32.gmra.mxu0 %v4715
  %v5110 = vpop.f32.mrf.mxu0
  %v5111 = vadd.f32 0.0, %v5110
  %5112 = vmatmul.f32.gmra.mxu0 %v4718
  %v5113 = vpop.f32.mrf.mxu0
  %v5114 = vadd.f32 0.0, %v5113
  %5115 = vmatmul.f32.gmra.mxu0 %v4721
  %v5116 = vpop.f32.mrf.mxu0
  %v5117 = vadd.f32 0.0, %v5116
  %5118 = vmatmul.f32.gmra.mxu0 %v4995
  %v5119 = vpop.f32.mrf.mxu0
  %v5120 = vadd.f32 0.0, %v5119
  %5121 = vmatmul.f32.gmra.mxu0 %v4998
  %v5122 = vpop.f32.mrf.mxu0
  %v5123 = vadd.f32 0.0, %v5122
  %5124 = vmatmul.f32.gmra.mxu0 %v5001
  %v5125 = vpop.f32.mrf.mxu0
  %v5126 = vadd.f32 0.0, %v5125
  %5127 = vmatmul.f32.gmra.mxu0 %v5004
  %v5128 = vpop.f32.mrf.mxu0
  %v5129 = vadd.f32 0.0, %v5128
  %5130 = vmatmul.f32.gmra.mxu0 %v5007
  %v5131 = vpop.f32.mrf.mxu0
  %v5132 = vadd.f32 0.0, %v5131
  %5133 = vmatmul.f32.gmra.mxu0 %v5010
  %v5134 = vpop.f32.mrf.mxu0
  %v5135 = vadd.f32 0.0, %v5134
  %5136 = vdwg.mxu0
  %v5137 = vadd.f32 %v4887, %v5030
  %v5138 = vadd.f32 %v4890, %v5033
  %v5139 = vadd.f32 %v4893, %v5036
  %v5140 = vadd.f32 %v4896, %v5039
  %v5141 = vadd.f32 %v4899, %v5042
  %v5142 = vadd.f32 %v4902, %v5045
  %v5143 = vadd.f32 %v4905, %v5048
  %v5144 = vadd.f32 %v4908, %v5051
  %v5145 = vadd.f32 %v4911, %v5054
  %v5146 = vadd.f32 %v4914, %v5057
  %v5147 = vadd.f32 %v4917, %v5060
  %v5148 = vadd.f32 %v4920, %v5063
  %v5149 = vadd.f32 %v4923, %v5066
  %v5150 = vadd.f32 %v4926, %v5069
  %v5151 = vadd.f32 %v4929, %v5072
  %v5152 = vadd.f32 %v4932, %v5075
  %v5153 = vadd.f32 %v4935, %v5078
  %v5154 = vadd.f32 %v4938, %v5081
  %v5155 = vadd.f32 %v4941, %v5084
  %v5156 = vadd.f32 %v4944, %v5087
  %v5157 = vadd.f32 %v4947, %v5090
  %v5158 = vadd.f32 %v4950, %v5093
  %v5159 = vadd.f32 %v4953, %v5096
  %v5160 = vadd.f32 %v4956, %v5099
  %v5161 = vadd.f32 %v4959, %v5102
  %v5162 = vadd.f32 %v4962, %v5105
  %v5163 = vadd.f32 %v4965, %v5108
  %v5164 = vadd.f32 %v4968, %v5111
  %v5165 = vadd.f32 %v4971, %v5114
  %v5166 = vadd.f32 %v4974, %v5117
  %v5167 = vadd.f32 %v4977, %v5120
  %v5168 = vadd.f32 %v4980, %v5123
  %v5169 = vadd.f32 %v4983, %v5126
  %v5170 = vadd.f32 %v4986, %v5129
  %v5171 = vadd.f32 %v4989, %v5132
  %v5172 = vadd.f32 %v4992, %v5135
  %v5174 = vsel %vm4119, %v4612, 0
  %5176 = vmatpush.msra.mxu0 0.0
  %5177 = vmatpush.msra.mxu0 0.0
  %5178 = vmatpush.msra.mxu0 0.0
  %5179 = vmatpush.msra.mxu0 0.0
  %5180 = vmatpush.msra.mxu0 0.0
  %5181 = vmatpush.msra.mxu0 0.0
  %5182 = vmatpush.msra.mxu0 0.0
  %5183 = vmatpush.msra.mxu0 0.0
  %5184 = vmatpush.msra.mxu0 0.0
  %5185 = vmatpush.msra.mxu0 0.0
  %5186 = vmatpush.msra.mxu0 0.0
  %5187 = vmatpush.msra.mxu0 0.0
  %5188 = vmatpush.msra.mxu0 0.0
  %5189 = vmatpush.msra.mxu0 0.0
  %5190 = vmatpush.msra.mxu0 0.0
  %5191 = vmatpush.msra.mxu0 %v4616
  %5192 = vmatmul.f32.gmra.mxu0 %v4637
  %v5193 = vpop.f32.mrf.mxu0
  %v5194 = vadd.f32 0.0, %v5193
  %5195 = vmatmul.f32.gmra.mxu0 %v4640
  %v5196 = vpop.f32.mrf.mxu0
  %v5197 = vadd.f32 0.0, %v5196
  %5198 = vmatmul.f32.gmra.mxu0 %v4643
  %v5199 = vpop.f32.mrf.mxu0
  %v5200 = vadd.f32 0.0, %v5199
  %5201 = vmatmul.f32.gmra.mxu0 %v4646
  %v5202 = vpop.f32.mrf.mxu0
  %v5203 = vadd.f32 0.0, %v5202
  %5204 = vmatmul.f32.gmra.mxu0 %v4649
  %v5205 = vpop.f32.mrf.mxu0
  %v5206 = vadd.f32 0.0, %v5205
  %5207 = vmatmul.f32.gmra.mxu0 %v4652
  %v5208 = vpop.f32.mrf.mxu0
  %v5209 = vadd.f32 0.0, %v5208
  %5210 = vmatmul.f32.gmra.mxu0 %v4655
  %v5211 = vpop.f32.mrf.mxu0
  %v5212 = vadd.f32 0.0, %v5211
  %5213 = vmatmul.f32.gmra.mxu0 %v4658
  %v5214 = vpop.f32.mrf.mxu0
  %v5215 = vadd.f32 0.0, %v5214
  %5216 = vmatmul.f32.gmra.mxu0 %v4661
  %v5217 = vpop.f32.mrf.mxu0
  %v5218 = vadd.f32 0.0, %v5217
  %5219 = vmatmul.f32.gmra.mxu0 %v4664
  %v5220 = vpop.f32.mrf.mxu0
  %v5221 = vadd.f32 0.0, %v5220
  %5222 = vmatmul.f32.gmra.mxu0 %v4667
  %v5223 = vpop.f32.mrf.mxu0
  %v5224 = vadd.f32 0.0, %v5223
  %5225 = vmatmul.f32.gmra.mxu0 %v4670
  %v5226 = vpop.f32.mrf.mxu0
  %v5227 = vadd.f32 0.0, %v5226
  %5228 = vmatmul.f32.gmra.mxu0 %v4673
  %v5229 = vpop.f32.mrf.mxu0
  %v5230 = vadd.f32 0.0, %v5229
  %5231 = vmatmul.f32.gmra.mxu0 %v4676
  %v5232 = vpop.f32.mrf.mxu0
  %v5233 = vadd.f32 0.0, %v5232
  %5234 = vmatmul.f32.gmra.mxu0 %v4679
  %v5235 = vpop.f32.mrf.mxu0
  %v5236 = vadd.f32 0.0, %v5235
  %5237 = vmatmul.f32.gmra.mxu0 %v4682
  %v5238 = vpop.f32.mrf.mxu0
  %v5239 = vadd.f32 0.0, %v5238
  %5240 = vmatmul.f32.gmra.mxu0 %v4685
  %v5241 = vpop.f32.mrf.mxu0
  %v5242 = vadd.f32 0.0, %v5241
  %5243 = vmatmul.f32.gmra.mxu0 %v4688
  %v5244 = vpop.f32.mrf.mxu0
  %v5245 = vadd.f32 0.0, %v5244
  %5246 = vmatmul.f32.gmra.mxu0 %v4691
  %v5247 = vpop.f32.mrf.mxu0
  %v5248 = vadd.f32 0.0, %v5247
  %5249 = vmatmul.f32.gmra.mxu0 %v4694
  %v5250 = vpop.f32.mrf.mxu0
  %v5251 = vadd.f32 0.0, %v5250
  %5252 = vmatmul.f32.gmra.mxu0 %v4697
  %v5253 = vpop.f32.mrf.mxu0
  %v5254 = vadd.f32 0.0, %v5253
  %5255 = vmatmul.f32.gmra.mxu0 %v4700
  %v5256 = vpop.f32.mrf.mxu0
  %v5257 = vadd.f32 0.0, %v5256
  %5258 = vmatmul.f32.gmra.mxu0 %v4703
  %v5259 = vpop.f32.mrf.mxu0
  %v5260 = vadd.f32 0.0, %v5259
  %5261 = vmatmul.f32.gmra.mxu0 %v4706
  %v5262 = vpop.f32.mrf.mxu0
  %v5263 = vadd.f32 0.0, %v5262
  %5264 = vmatmul.f32.gmra.mxu0 %v4709
  %v5265 = vpop.f32.mrf.mxu0
  %v5266 = vadd.f32 0.0, %v5265
  %5267 = vmatmul.f32.gmra.mxu0 %v4712
  %v5268 = vpop.f32.mrf.mxu0
  %v5269 = vadd.f32 0.0, %v5268
  %5270 = vmatmul.f32.gmra.mxu0 %v4715
  %v5271 = vpop.f32.mrf.mxu0
  %v5272 = vadd.f32 0.0, %v5271
  %5273 = vmatmul.f32.gmra.mxu0 %v4718
  %v5274 = vpop.f32.mrf.mxu0
  %v5275 = vadd.f32 0.0, %v5274
  %5276 = vmatmul.f32.gmra.mxu0 %v4721
  %v5277 = vpop.f32.mrf.mxu0
  %v5278 = vadd.f32 0.0, %v5277
  %5279 = vmatmul.f32.gmra.mxu0 %v4724
  %v5280 = vpop.f32.mrf.mxu0
  %v5281 = vadd.f32 0.0, %v5280
  %5282 = vmatmul.f32.gmra.mxu0 %v4998
  %v5283 = vpop.f32.mrf.mxu0
  %v5284 = vadd.f32 0.0, %v5283
  %5285 = vmatmul.f32.gmra.mxu0 %v5001
  %v5286 = vpop.f32.mrf.mxu0
  %v5287 = vadd.f32 0.0, %v5286
  %5288 = vmatmul.f32.gmra.mxu0 %v5004
  %v5289 = vpop.f32.mrf.mxu0
  %v5290 = vadd.f32 0.0, %v5289
  %5291 = vmatmul.f32.gmra.mxu0 %v5007
  %v5292 = vpop.f32.mrf.mxu0
  %v5293 = vadd.f32 0.0, %v5292
  %5294 = vmatmul.f32.gmra.mxu0 %v5010
  %v5295 = vpop.f32.mrf.mxu0
  %v5296 = vadd.f32 0.0, %v5295
  %5297 = vmatmul.f32.gmra.mxu0 %v5174
  %v5298 = vpop.f32.mrf.mxu0
  %v5299 = vadd.f32 0.0, %v5298
  %5300 = vdwg.mxu0
  %v5301 = vadd.f32 %v5137, %v5194
  %v5302 = vadd.f32 %v5138, %v5197
  %v5303 = vadd.f32 %v5139, %v5200
  %v5304 = vadd.f32 %v5140, %v5203
  %v5305 = vadd.f32 %v5141, %v5206
  %v5306 = vadd.f32 %v5142, %v5209
  %v5307 = vadd.f32 %v5143, %v5212
  %v5308 = vadd.f32 %v5144, %v5215
  %v5309 = vadd.f32 %v5145, %v5218
  %v5310 = vadd.f32 %v5146, %v5221
  %v5311 = vadd.f32 %v5147, %v5224
  %v5312 = vadd.f32 %v5148, %v5227
  %v5313 = vadd.f32 %v5149, %v5230
  %v5314 = vadd.f32 %v5150, %v5233
  %v5315 = vadd.f32 %v5151, %v5236
  %v5316 = vadd.f32 %v5152, %v5239
  %v5317 = vadd.f32 %v5153, %v5242
  %v5318 = vadd.f32 %v5154, %v5245
  %v5319 = vadd.f32 %v5155, %v5248
  %v5320 = vadd.f32 %v5156, %v5251
  %v5321 = vadd.f32 %v5157, %v5254
  %v5322 = vadd.f32 %v5158, %v5257
  %v5323 = vadd.f32 %v5159, %v5260
  %v5324 = vadd.f32 %v5160, %v5263
  %v5325 = vadd.f32 %v5161, %v5266
  %v5326 = vadd.f32 %v5162, %v5269
  %v5327 = vadd.f32 %v5163, %v5272
  %v5328 = vadd.f32 %v5164, %v5275
  %v5329 = vadd.f32 %v5165, %v5278
  %v5330 = vadd.f32 %v5166, %v5281
  %v5331 = vadd.f32 %v5167, %v5284
  %v5332 = vadd.f32 %v5168, %v5287
  %v5333 = vadd.f32 %v5169, %v5290
  %v5334 = vadd.f32 %v5170, %v5293
  %v5335 = vadd.f32 %v5171, %v5296
  %v5336 = vadd.f32 %v5172, %v5299
  %vm5337 = vcmask 130048
  %v5338 = vsel %vm5337, %v5301, -inf
  %v5339 = vsel %vm5337, %v5307, -inf
  %v5340 = vmax.f32 %v5338, %v5339
  %v5341 = vsel %vm5337, %v5302, -inf
  %v5342 = vsel %vm5337, %v5308, -inf
  %v5343 = vmax.f32 %v5341, %v5342
  %v5344 = vsel %vm5337, %v5303, -inf
  %v5345 = vsel %vm5337, %v5309, -inf
  %v5346 = vmax.f32 %v5344, %v5345
  %v5347 = vsel %vm5337, %v5304, -inf
  %v5348 = vsel %vm5337, %v5310, -inf
  %v5349 = vmax.f32 %v5347, %v5348
  %v5350 = vsel %vm5337, %v5305, -inf
  %v5351 = vsel %vm5337, %v5311, -inf
  %v5352 = vmax.f32 %v5350, %v5351
  %v5353 = vsel %vm5337, %v5306, -inf
  %v5354 = vsel %vm5337, %v5312, -inf
  %v5355 = vmax.f32 %v5353, %v5354
  %v5356 = vsel %vm5337, %v5313, -inf
  %v5357 = vsel %vm5337, %v5319, -inf
  %v5358 = vmax.f32 %v5356, %v5357
  %v5359 = vsel %vm5337, %v5314, -inf
  %v5360 = vsel %vm5337, %v5320, -inf
  %v5361 = vmax.f32 %v5359, %v5360
  %v5362 = vsel %vm5337, %v5315, -inf
  %v5363 = vsel %vm5337, %v5321, -inf
  %v5364 = vmax.f32 %v5362, %v5363
  %v5365 = vsel %vm5337, %v5316, -inf
  %v5366 = vsel %vm5337, %v5322, -inf
  %v5367 = vmax.f32 %v5365, %v5366
  %v5368 = vsel %vm5337, %v5317, -inf
  %v5369 = vsel %vm5337, %v5323, -inf
  %v5370 = vmax.f32 %v5368, %v5369
  %v5371 = vsel %vm5337, %v5318, -inf
  %v5372 = vsel %vm5337, %v5324, -inf
  %v5373 = vmax.f32 %v5371, %v5372
  %v5374 = vsel %vm5337, %v5325, -inf
  %v5375 = vsel %vm5337, %v5331, -inf
  %v5376 = vmax.f32 %v5374, %v5375
  %v5377 = vsel %vm5337, %v5326, -inf
  %v5378 = vsel %vm5337, %v5332, -inf
  %v5379 = vmax.f32 %v5377, %v5378
  %v5380 = vsel %vm5337, %v5327, -inf
  %v5381 = vsel %vm5337, %v5333, -inf
  %v5382 = vmax.f32 %v5380, %v5381
  %v5383 = vsel %vm5337, %v5328, -inf
  %v5384 = vsel %vm5337, %v5334, -inf
  %v5385 = vmax.f32 %v5383, %v5384
  %v5386 = vsel %vm5337, %v5329, -inf
  %v5387 = vsel %vm5337, %v5335, -inf
  %v5388 = vmax.f32 %v5386, %v5387
  %v5389 = vsel %vm5337, %v5330, -inf
  %v5390 = vsel %vm5337, %v5336, -inf
  %v5391 = vmax.f32 %v5389, %v5390
  %v5392 = vsel %vm5337, %v5340, -inf
  %v5393 = vsel %vm5337, %v5343, -inf
  %v5394 = vmax.f32 %v5392, %v5393
  %v5395 = vsel %vm5337, %v5346, -inf
  %v5396 = vsel %vm5337, %v5349, -inf
  %v5397 = vmax.f32 %v5395, %v5396
  %v5398 = vsel %vm5337, %v5352, -inf
  %v5399 = vsel %vm5337, %v5355, -inf
  %v5400 = vmax.f32 %v5398, %v5399
  %v5401 = vsel %vm5337, %v5358, -inf
  %v5402 = vsel %vm5337, %v5361, -inf
  %v5403 = vmax.f32 %v5401, %v5402
  %v5404 = vsel %vm5337, %v5364, -inf
  %v5405 = vsel %vm5337, %v5367, -inf
  %v5406 = vmax.f32 %v5404, %v5405
  %v5407 = vsel %vm5337, %v5370, -inf
  %v5408 = vsel %vm5337, %v5373, -inf
  %v5409 = vmax.f32 %v5407, %v5408
  %v5410 = vsel %vm5337, %v5376, -inf
  %v5411 = vsel %vm5337, %v5379, -inf
  %v5412 = vmax.f32 %v5410, %v5411
  %v5413 = vsel %vm5337, %v5382, -inf
  %v5414 = vsel %vm5337, %v5385, -inf
  %v5415 = vmax.f32 %v5413, %v5414
  %v5416 = vsel %vm5337, %v5388, -inf
  %v5417 = vsel %vm5337, %v5391, -inf
  %v5418 = vmax.f32 %v5416, %v5417
  %v5420 = vperm.slane %v4617, 0
  %v5422 = vadd.f32 %v5394, %v5420
  %v5423 = vadd.f32 %v5397, %v5420
  %v5424 = vadd.f32 %v5400, %v5420
  %v5425 = vadd.f32 %v5403, %v5420
  %v5426 = vadd.f32 %v5406, %v5420
  %v5427 = vadd.f32 %v5409, %v5420
  %v5428 = vadd.f32 %v5412, %v5420
  %v5429 = vadd.f32 %v5415, %v5420
  %v5430 = vadd.f32 %v5418, %v5420
  %v5431 = vld [vmem:[%s5] sm:$0xff]
  %v5432 = vld [vmem:[%s5 + $0x8] sm:$0xff]
  %v5433 = vld [vmem:[%s5 + $0x10] sm:$0xff]
  %v5434 = vld [vmem:[%s5 + $0x18] sm:$0xff]
  %v5435 = vld [vmem:[%s5 + $0x20] sm:$0xff]
  %v5436 = vld [vmem:[%s5 + $0x28] sm:$0xff]
  %v5437 = vld [vmem:[%s5 + $0x30] sm:$0xff]
  %v5438 = vld [vmem:[%s5 + $0x38] sm:$0xff]
  %v5439 = vld [vmem:[%s6] sm:$0x1]
  %v5441 = vsel %vm5337, %v5423, 0
  %v5444 = vsel %vm5337, %v5424, 0
  %v5447 = vsel %vm5337, %v5426, 0
  %v5450 = vsel %vm5337, %v5427, 0
  %5452 = vmatpush.msra.mxu0 0.0
  %5453 = vmatpush.msra.mxu0 0.0
  %5454 = vmatpush.msra.mxu0 0.0
  %5455 = vmatpush.msra.mxu0 0.0
  %5456 = vmatpush.msra.mxu0 0.0
  %5457 = vmatpush.msra.mxu0 0.0
  %5458 = vmatpush.msra.mxu0 0.0
  %5459 = vmatpush.msra.mxu0 0.0
  %5460 = vmatpush.msra.mxu0 0.0
  %5461 = vmatpush.msra.mxu0 0.0
  %5462 = vmatpush.msra.mxu0 0.0
  %5463 = vmatpush.msra.mxu0 0.0
  %5464 = vmatpush.msra.mxu0 0.0
  %5465 = vmatpush.msra.mxu0 0.0
  %5466 = vmatpush.msra.mxu0 %v5434
  %5467 = vmatpush.msra.mxu0 %v5433
  %5468 = vmatmul.f32.gmra.mxu0 %v5441
  %v5469 = vpop.f32.mrf.mxu0
  %v5470 = vadd.f32 0.0, %v5469
  %5471 = vmatmul.f32.gmra.mxu0 %v5444
  %v5472 = vpop.f32.mrf.mxu0
  %v5473 = vadd.f32 0.0, %v5472
  %5474 = vmatmul.f32.gmra.mxu0 %v5447
  %v5475 = vpop.f32.mrf.mxu0
  %v5476 = vadd.f32 0.0, %v5475
  %5477 = vmatmul.f32.gmra.mxu0 %v5450
  %v5478 = vpop.f32.mrf.mxu0
  %v5479 = vadd.f32 0.0, %v5478
  %5480 = vdwg.mxu0
  %v5482 = vsel %vm5337, %v5422, 0
  %v5485 = vsel %vm5337, %v5425, 0
  %5487 = vmatpush.msra.mxu0 0.0
  %5488 = vmatpush.msra.mxu0 0.0
  %5489 = vmatpush.msra.mxu0 0.0
  %5490 = vmatpush.msra.mxu0 0.0
  %5491 = vmatpush.msra.mxu0 0.0
  %5492 = vmatpush.msra.mxu0 0.0
  %5493 = vmatpush.msra.mxu0 0.0
  %5494 = vmatpush.msra.mxu0 0.0
  %5495 = vmatpush.msra.mxu0 0.0
  %5496 = vmatpush.msra.mxu0 0.0
  %5497 = vmatpush.msra.mxu0 0.0
  %5498 = vmatpush.msra.mxu0 0.0
  %5499 = vmatpush.msra.mxu0 0.0
  %5500 = vmatpush.msra.mxu0 0.0
  %5501 = vmatpush.msra.mxu0 %v5432
  %5502 = vmatpush.msra.mxu0 %v5431
  %5503 = vmatmul.f32.gmra.mxu0 %v5482
  %v5504 = vpop.f32.mrf.mxu0
  %v5505 = vadd.f32 %v5470, %v5504
  %5506 = vmatmul.f32.gmra.mxu0 %v5441
  %v5507 = vpop.f32.mrf.mxu0
  %v5508 = vadd.f32 %v5473, %v5507
  %5509 = vmatmul.f32.gmra.mxu0 %v5485
  %v5510 = vpop.f32.mrf.mxu0
  %v5511 = vadd.f32 %v5476, %v5510
  %5512 = vmatmul.f32.gmra.mxu0 %v5447
  %v5513 = vpop.f32.mrf.mxu0
  %v5514 = vadd.f32 %v5479, %v5513
  %5515 = vdwg.mxu0
  %v5517 = vsel %vm5337, %v5428, 0
  %v5520 = vsel %vm5337, %v5429, 0
  %5522 = vmatpush.msra.mxu0 0.0
  %5523 = vmatpush.msra.mxu0 0.0
  %5524 = vmatpush.msra.mxu0 0.0
  %5525 = vmatpush.msra.mxu0 0.0
  %5526 = vmatpush.msra.mxu0 0.0
  %5527 = vmatpush.msra.mxu0 0.0
  %5528 = vmatpush.msra.mxu0 0.0
  %5529 = vmatpush.msra.mxu0 0.0
  %5530 = vmatpush.msra.mxu0 0.0
  %5531 = vmatpush.msra.mxu0 0.0
  %5532 = vmatpush.msra.mxu0 0.0
  %5533 = vmatpush.msra.mxu0 0.0
  %5534 = vmatpush.msra.mxu0 0.0
  %5535 = vmatpush.msra.mxu0 0.0
  %5536 = vmatpush.msra.mxu0 %v5436
  %5537 = vmatpush.msra.mxu0 %v5435
  %5538 = vmatmul.f32.gmra.mxu0 %v5485
  %v5539 = vpop.f32.mrf.mxu0
  %v5540 = vadd.f32 0.0, %v5539
  %5541 = vmatmul.f32.gmra.mxu0 %v5447
  %v5542 = vpop.f32.mrf.mxu0
  %v5543 = vadd.f32 0.0, %v5542
  %5544 = vmatmul.f32.gmra.mxu0 %v5517
  %v5545 = vpop.f32.mrf.mxu0
  %v5546 = vadd.f32 0.0, %v5545
  %5547 = vmatmul.f32.gmra.mxu0 %v5520
  %v5548 = vpop.f32.mrf.mxu0
  %v5549 = vadd.f32 0.0, %v5548
  %5550 = vdwg.mxu0
  %v5551 = vadd.f32 %v5505, %v5540
  %v5552 = vadd.f32 %v5508, %v5543
  %v5553 = vadd.f32 %v5511, %v5546
  %v5554 = vadd.f32 %v5514, %v5549
  %v5556 = vsel %vm5337, %v5430, 0
  %5558 = vmatpush.msra.mxu0 0.0
  %5559 = vmatpush.msra.mxu0 0.0
  %5560 = vmatpush.msra.mxu0 0.0
  %5561 = vmatpush.msra.mxu0 0.0
  %5562 = vmatpush.msra.mxu0 0.0
  %5563 = vmatpush.msra.mxu0 0.0
  %5564 = vmatpush.msra.mxu0 0.0
  %5565 = vmatpush.msra.mxu0 0.0
  %5566 = vmatpush.msra.mxu0 0.0
  %5567 = vmatpush.msra.mxu0 0.0
  %5568 = vmatpush.msra.mxu0 0.0
  %5569 = vmatpush.msra.mxu0 0.0
  %5570 = vmatpush.msra.mxu0 0.0
  %5571 = vmatpush.msra.mxu0 0.0
  %5572 = vmatpush.msra.mxu0 %v5438
  %5573 = vmatpush.msra.mxu0 %v5437
  %5574 = vmatmul.f32.gmra.mxu0 %v5447
  %v5575 = vpop.f32.mrf.mxu0
  %v5576 = vadd.f32 0.0, %v5575
  %5577 = vmatmul.f32.gmra.mxu0 %v5450
  %v5578 = vpop.f32.mrf.mxu0
  %v5579 = vadd.f32 0.0, %v5578
  %5580 = vmatmul.f32.gmra.mxu0 %v5520
  %v5581 = vpop.f32.mrf.mxu0
  %v5582 = vadd.f32 0.0, %v5581
  %5583 = vmatmul.f32.gmra.mxu0 %v5556
  %v5584 = vpop.f32.mrf.mxu0
  %v5585 = vadd.f32 0.0, %v5584
  %5586 = vdwg.mxu0
  %v5587 = vadd.f32 %v5551, %v5576
  %v5588 = vadd.f32 %v5552, %v5579
  %v5589 = vadd.f32 %v5553, %v5582
  %v5590 = vadd.f32 %v5554, %v5585
  %vm5591 = vcmask 261120
  %v5592 = vsel %vm5591, %v5587, -inf
  %v5593 = vsel %vm5591, %v5589, -inf
  %v5594 = vmax.f32 %v5592, %v5593
  %v5595 = vsel %vm5591, %v5588, -inf
  %v5596 = vsel %vm5591, %v5590, -inf
  %v5597 = vmax.f32 %v5595, %v5596
  %v5598 = vsel %vm5591, %v5594, -inf
  %v5599 = vsel %vm5591, %v5597, -inf
  %v5600 = vmax.f32 %v5598, %v5599
  %v5602 = vperm.slane %v5439, 0
  %v5604 = vadd.f32 %v5600, %v5602
  %5606 = vrot.lane.b32.xlu0 %v5604, 32
  %v5607 = vpop.permute.xlu0 %5606
  %5609 = vrot.lane.b32.xlu0 %v5604, 64
  %v5610 = vpop.permute.xlu0 %5609
  %5612 = vrot.lane.b32.xlu0 %v5604, 96
  %v5613 = vpop.permute.xlu0 %5612
  %v5615 = vsel %vm5591, %v5604, %v5607
  %vm5616 = vcmask 523264
  %v5617 = vsel %vm5616, %v5615, %v5610
  %vm5618 = vcmask 785408
  %v5619 = vsel %vm5618, %v5617, %v5613
  %v5620 = vld [vmem:[%s7] sm:$0x1]
  %v5622 = vperm.slane %v5620, 0
  %v5624 = vmul.f32 %v5619, %v5622
  %v5625 = vld [vmem:[%s8] sm:$0x1]
  %v5627 = vperm.slane %v5625, 0
  %v5629 = vadd.f32 %v5624, %v5627
  %v5630 = vsub.f32 0.0, %v5629
  %v5631 = vmul.f32 %v5630, 1.442695
  %v5632 = vpow.pop %v5631
  %v5633 = vadd.f32 %v5632, 1.0
  %v5634 = vrcp.pop %v5633
  %v5635 = vmul.f32 %v5633, %v5634
  %v5636 = vsub.f32 1.0, %v5635
  %v5637 = vmul.f32 %v5634, %v5636
  %v5638 = vadd.f32 %v5634, %v5637
  %vm5639 = vweird.f32 %v5633
  %vm5640 = vweird.f32 %v5634
  %vm5641 = vmor %vm5639, %vm5640
  %v5642 = vsel %vm5641, %v5634, %v5638
  %v5643 = vand.u32 2147483647, %v5633
  %vm5644 = vcmp.eq.f32.partialorder %v5643, 8.507059e+37
  %v5645 = vand.u32 %v5633, 2147483648
  %v5646 = vor.u32 1.1754944e-38, %v5645
  %v5647 = vsel %vm5644, %v5646, %v5642
  %5648 = vst [vmem:[%s9] sm:$0xff] %v5647
  // Predicated region
  $region38: #{model_cnn_forward.1} parent=0 // pred_check
    _
  $region39: #{model_cnn_forward.1} parent=0 // pred_check_branch
    %5650 = sbr.rel (0) target = $region41
  $region40: #{model_cnn_forward.1} parent=0 // pred_region
    _
  $region41: #{model_cnn_forward.1} parent=0 // pred_fallthru
    _
  // Predicated region
  $region42: #{model_cnn_forward.1} parent=0 // pred_check
    _
  $region43: #{model_cnn_forward.1} parent=0 // pred_check_branch
    %5652 = sbr.rel (0) target = $region45
  $region44: #{model_cnn_forward.1} parent=0 // pred_region
    _
  $region45: #{model_cnn_forward.1} parent=0 // pred_fallthru
    _

</llo_original>
